<compile_context>
chip_gen: v6e
topology: v6e:2x2x1
jax: 0.10.0
libtpu: 0.0.40
codegen_flags: <defaults>
</compile_context>

<pallas_src>
import jax
import jax.numpy as jnp
from jax.experimental import pallas as pl
from jax.experimental.pallas import tpu as pltpu

EMB_DIM = 2048   # ResNet-50 pooled feature width
OUT_DIM = 1024   # Linear output width


def _round_up(n, m):
    return ((n + m - 1) // m) * m


def prepare_linear_params(w, bias):
    """One-time parameter prep (do NOT call per forward pass).

    w:    (1024, 2048) nn.Linear weight (f32)
    bias: (1024,)      nn.Linear bias   (f32)
    Returns (w_t_bf16 (2048, 1024), bias_f32 (1, 1024)) to store as the model params.
    """
    w_t_bf16 = jnp.transpose(w).astype(jnp.bfloat16)
    bias_f32 = bias.reshape(1, OUT_DIM).astype(jnp.float32)
    return w_t_bf16, bias_f32


def _linear_kernel(x_ref, w_ref, b_ref, o_ref):
    # x_ref: (TM, 2048) f32 pooled features -> cast to bf16 in-kernel (hides under MXU)
    # w_ref: (2048, TN) bf16 pre-transposed weight slice (resident across batch tiles)
    # b_ref: (1, TN)    f32 bias slice
    # o_ref: (TM, TN)   output
    x = x_ref[...].astype(jnp.bfloat16)
    acc = jnp.dot(x, w_ref[...], preferred_element_type=jnp.float32)
    o_ref[...] = (acc + b_ref[...]).astype(o_ref.dtype)


def image_encoder_forward(backbone_features, w_t_bf16, bias_f32, *,
                          max_tm=512, out_dtype=jnp.float32):
    """backbone_features: (B, 2048, 1, 1) f32 trunk output;
    w_t_bf16 / bias_f32: from prepare_linear_params()."""
    B = backbone_features.shape[0]
    x = backbone_features.reshape(B, EMB_DIM)        # output.view(B, -1); stays f32
    assert x.shape[1] == EMB_DIM
    assert w_t_bf16.shape == (EMB_DIM, OUT_DIM)

    # Batch tiling: pad only to a multiple of 16 (bf16 packs (16,128) per vreg), balance
    # the tile size across row tiles so padding never exceeds one tile, cap at max_tm.
    max_tm = _round_up(max_tm, 16)
    b16 = _round_up(B, 16)
    n_row = pl.cdiv(b16, max_tm)
    tm = _round_up(pl.cdiv(b16, n_row), 16)
    b_pad = n_row * tm
    if b_pad != B:
        x = jnp.pad(x, ((0, b_pad - B), (0, 0)))     # <1 tile of zero rows, sliced off below

    # Small-batch path: one row tile would leave a v7x TensorCore idle while wall time is
    # just the weight pull -> split OUT_DIM in half so megacore shards the weight DMA.
    n_col = 2 if (n_row == 1 and b_pad <= 256) else 1
    tn = OUT_DIM // n_col

    out = pl.pallas_call(
        _linear_kernel,
        out_shape=jax.ShapeDtypeStruct((b_pad, OUT_DIM), out_dtype),
        grid_spec=pltpu.PrefetchScalarGridSpec(
            num_scalar_prefetch=0,
            grid=(n_row, n_col),
            in_specs=[
                pl.BlockSpec((tm, EMB_DIM), lambda i, j: (i, 0)),
                pl.BlockSpec((EMB_DIM, tn), lambda i, j: (0, j)),  # weight fetched once per column tile
                pl.BlockSpec((1, tn), lambda i, j: (0, j)),        # bias fetched once per column tile
            ],
            out_specs=pl.BlockSpec((tm, tn), lambda i, j: (i, j)),
        ),
        compiler_params=pltpu.CompilerParams(
            dimension_semantics=("parallel", "parallel"),
            # tm=512, n_col=1: 2x4 MiB f32 x + 2x4 MiB bf16 w + 2x2 MiB f32 out ~= 20 MiB
            vmem_limit_bytes=40 << 20,
        ),
    )(x, w_t_bf16, bias_f32)
    return out[:B]


def reference_forward(backbone_features, w, bias):
    # Same bf16 rounding of the matmul operands as the kernel path, f32 accumulation.
    B = backbone_features.shape[0]
    x = backbone_features.reshape(B, -1).astype(jnp.bfloat16)
    w_t = jnp.transpose(w).astype(jnp.bfloat16)
    return jnp.dot(x, w_t, preferred_element_type=jnp.float32) + bias[None, :].astype(jnp.float32)


if __name__ == "__main__":
    key = jax.random.PRNGKey(0)
    k_feat, k_w, k_b = jax.random.split(key, 3)

    B = 2  # small batch

    # Stand-in for the (untranslated) pretrained ResNet-50 trunk output: (B, 2048, 1, 1).
    backbone_features = jax.random.normal(k_feat, (B, EMB_DIM, 1, 1), dtype=jnp.float32)

    # nn.Linear(2048, 1024): weight (1024, 2048), bias (1024,), default uniform init.
    bound = 1.0 / (EMB_DIM ** 0.5)
    w = jax.random.uniform(k_w, (OUT_DIM, EMB_DIM), minval=-bound, maxval=bound,
                           dtype=jnp.float32)
    bias = jax.random.uniform(k_b, (OUT_DIM,), minval=-bound, maxval=bound,
                              dtype=jnp.float32)

    # One-time parameter prep (stored with the module's params, never recomputed per call).
    w_t_bf16, bias_f32 = prepare_linear_params(w, bias)

    out = image_encoder_forward(backbone_features, w_t_bf16, bias_f32)
    out = jax.block_until_ready(out)

    ref = reference_forward(backbone_features, w, bias)
    assert out.shape == (B, OUT_DIM)
    assert jnp.allclose(out, ref, atol=2e-3, rtol=2e-3), "mismatch vs reference"

    print("KERNEL_OK")
</pallas_src>

<mosaic_0001>
module attributes {stable_mosaic.version = 11 : i64} {
  func.func @_linear_kernel(%arg0: i32, %arg1: i32, %arg2: memref<16x2048xf32, #tpu.memory_space<vmem>>, %arg3: memref<2048x512xbf16, #tpu.memory_space<vmem>>, %arg4: memref<1x512xf32, #tpu.memory_space<vmem>>, %arg5: memref<16x512xf32, #tpu.memory_space<vmem>>) attributes {dimension_semantics = [#tpu.dimension_semantics<parallel>, #tpu.dimension_semantics<parallel>], iteration_bounds = array<i64: 1, 2>, scalar_prefetch = 0 : i64, scratch_operands = 0 : i64, tpu.core_type = #tpu.core_type<tc>, window_params = [{transform_indices = @transform_0, window_bounds = array<i64: 16, 2048>}, {transform_indices = @transform_1, window_bounds = array<i64: 2048, 512>}, {transform_indices = @transform_2, window_bounds = array<i64: 1, 512>}, {transform_indices = @transform_3, window_bounds = array<i64: 16, 512>}]} {
    %c0 = arith.constant 0 : index
    %c0_0 = arith.constant 0 : index
    %0 = vector.load %arg2[%c0, %c0_0] : memref<16x2048xf32, #tpu.memory_space<vmem>>, vector<16x2048xf32>
    %1 = arith.truncf %0 : vector<16x2048xf32> to vector<16x2048xbf16>
    %c0_1 = arith.constant 0 : index
    %c0_2 = arith.constant 0 : index
    %2 = vector.load %arg3[%c0_1, %c0_2] : memref<2048x512xbf16, #tpu.memory_space<vmem>>, vector<2048x512xbf16>
    %cst = arith.constant dense<0.000000e+00> : vector<16x512xf32>
    %3 = tpu.matmul %1, %2, %cst {dimension_numbers = #tpu.dot_dimension_numbers<[1], [0], [0], [1], [0, 0, 1, 1], [], []>} : vector<16x2048xbf16>, vector<2048x512xbf16>, vector<16x512xf32> -> vector<16x512xf32>
    %c0_3 = arith.constant 0 : index
    %c0_4 = arith.constant 0 : index
    %4 = vector.load %arg4[%c0_3, %c0_4] : memref<1x512xf32, #tpu.memory_space<vmem>>, vector<1x512xf32>
    %5 = vector.broadcast %4 : vector<1x512xf32> to vector<16x512xf32>
    %6 = arith.addf %3, %5 : vector<16x512xf32>
    %c0_5 = arith.constant 0 : index
    %c0_6 = arith.constant 0 : index
    %7 = vector.load %arg5[%c0_5, %c0_6] : memref<16x512xf32, #tpu.memory_space<vmem>>, vector<16x512xf32>
    tpu.vector_store %arg5[%c0_5, %c0_6], %6 {strides = array<i32>} : memref<16x512xf32, #tpu.memory_space<vmem>>, vector<16x512xf32>,
    return
  }
  func.func @transform_0(%arg0: i32, %arg1: i32) -> (i32, i32) {
    %c0_i32 = arith.constant 0 : i32
    %c0_i32_0 = arith.constant 0 : i32
    return %arg0, %c0_i32 : i32, i32
  }
  func.func @transform_1(%arg0: i32, %arg1: i32) -> (i32, i32) {
    %c0_i32 = arith.constant 0 : i32
    %c0_i32_0 = arith.constant 0 : i32
    return %c0_i32, %arg1 : i32, i32
  }
  func.func @transform_2(%arg0: i32, %arg1: i32) -> (i32, i32) {
    %c0_i32 = arith.constant 0 : i32
    %c0_i32_0 = arith.constant 0 : i32
    return %c0_i32, %arg1 : i32, i32
  }
  func.func @transform_3(%arg0: i32, %arg1: i32) -> (i32, i32) {
    %c0_i32 = arith.constant 0 : i32
    return %arg0, %arg1 : i32, i32
  }
}

</mosaic_0001>

<llo_original>
// kernel: tpu_custom_call.1
$region0: #{tpu_custom_call.1}
  #allocation0 [shape = 'u32[]', space=smem, size = 0x4, offset = 0x4, fixed_abs, tag = 'smem constant byte address 0x4 - core index']
  #allocation1 [shape = 'u32[144,128]{1,0:T(1,128)}', space=vmem, size = 0x12000, scoped, tag = 'internal scratch']
  %s0 = inlined_call_operand.hbm [shape: f32[16,2048], index: 0, kind: input, shape index: {}]
  %s1 = inlined_call_operand.hbm [shape: bf16[2048,1024], index: 1, kind: input, shape index: {}]
  %s2 = inlined_call_operand.hbm [shape: f32[1,1024], index: 2, kind: input, shape index: {}]
  %s3 = inlined_call_operand.hbm [shape: f32[16,1024], index: 3, kind: output, shape index: {}]
  %s4 = sld [smem:[#allocation0]]
  $region57: #{tpu_custom_call.1} parent=0
    _
  %s6 = ssub.s32 1, %s4
  %s7 = scalar_select 0, %s6, %s4
  $region1: #{tpu_custom_call.1} parent=0
    #allocation2 [shape = 'u8[131072]{0}', space=vmem, size = 0x20000, scoped, tag = 'input window, operand 0, single buffered']
    #allocation3 [shape = 's32[2]{0}', space=sflag, size = 0x8, scoped, tag = 'scoped memory for tpu_custom_call.1']
    #allocation4 [shape = 's32[2]{0}', space=sflag, size = 0x8, scoped, tag = 'scoped memory for tpu_custom_call.1']
    #allocation5 [shape = 'u8[4194304]{0}', space=vmem, size = 0x400000, scoped, tag = 'input window, operand 1']
    #allocation6 [shape = 's32[2]{0}', space=sflag, size = 0x8, scoped, tag = 'scoped memory for tpu_custom_call.1']
    #allocation7 [shape = 'u8[4096]{0}', space=vmem, size = 0x1000, scoped, tag = 'input window, operand 2']
    #allocation8 [shape = 'u8[65536]{0}', space=vmem, size = 0x10000, scoped, tag = 'output window, operand 0']
    %8 = vsyncpa [#allocation3], 0
    %9 = vsyncpa [#allocation6], 0
    %s10 = scalar_lea.sflag [#allocation6], 1
    %11 = vsyncpa %s10, 0
    %12 = vsyncpa [#allocation4], 0
    %s13 = scalar_lea.sflag [#allocation4], 1
    %14 = vsyncpa %s13, 0
    loop: start=0, step=1, limit=4
    $region2: #{tpu_custom_call.1} parent=1 // loop_pre_header
      _
    $region3: #{tpu_custom_call.1} parent=1 // loop_header
      %s16 = sphi 0, %s20
      %p17 = scmp.ge.s32.totalorder %s16, 4
      %s23 = sphi 0, %s35
      %s24 = sphi 0, %s31
      %s25 = sphi 0, %s23
      %s26 = sphi 0, %s24
      %s27 = sphi 0, %s25
      %s28 = sphi 0, %s26
      %s38 = sphi 0, %s40
      %s41 = sphi 0, %s38
      %s42 = sphi 0, %s41
      %s58 = sphi 0, %s42
      %s64 = sphi 0, %s66
      %s67 = sphi 0, %s64
      %s68 = sphi 0, %s67
      %s84 = sphi 0, %s68
      %s90 = sphi 0, %s92
      %s93 = sphi 0, %s90
      %s94 = sphi 0, %s93
      %s110 = sphi 0, %s94
      %s118 = sphi 0, %s120
      %s121 = sphi 0, %s118
      %s122 = sphi 0, %s121
      %s138 = sphi 0, %s122
    $region4: #{tpu_custom_call.1} parent=1 // loop_header_branch
      %19 = sbr.rel (%p17) target = $region8
    $region5: #{tpu_custom_call.1} parent=1 // loop_body
      %s21 = ssub.s32 %s16, 1
      %s22 = ssub.s32 %s16, 2
      %s29 = sadd.s32 1, %s24
      %p30 = scmp.ge.s32.totalorder %s29, 2
      %s31 = scalar_select %p30, 0, %s29
      %s32 = sadd.s32 1, %s23
      %s33 = scalar_select %p30, %s32, %s23
      %p34 = scmp.ge.s32.totalorder %s33, 1
      %s35 = scalar_select %p34, 0, %s33
      %s36 = ssub.s32 %s23, %s35
      %p37 = scmp.eq.s32.totalorder %s36, 0
      %s39 = sadd.s32 %s38, 1
      %s40 = scalar_select %p37, %s38, %s39
      %p43 = pneg %p37
      %p44 = scmp.eq.s32.totalorder %s16, 1
      %p45 = por %p43, %p44
      %p46 = scmp.ne.s32.totalorder %s38, %s41
      %p47 = scmp.eq.s32.totalorder %s16, 0
      %p48 = por %p46, %p47
      %p49 = scmp.ne.s32.totalorder %s38, %s41
      %p50 = scmp.eq.s32.totalorder %s21, 1
      %p51 = por %p49, %p50
      %p52 = scmp.ne.s32.totalorder %s41, %s42
      %p53 = scmp.eq.s32.totalorder %s21, 0
      %p54 = por %p52, %p53
      %p55 = scmp.ne.s32.totalorder %s41, %s42
      %p56 = scmp.eq.s32.totalorder %s22, 1
      %p57 = por %p55, %p56
      %p59 = scmp.ne.s32.totalorder %s42, %s58
      %p60 = scmp.eq.s32.totalorder %s22, 0
      %p61 = por %p59, %p60
      %s62 = ssub.s32 %s24, %s31
      %p63 = scmp.eq.s32.totalorder %s62, 0
      %s65 = sadd.s32 %s64, 1
      %s66 = scalar_select %p63, %s64, %s65
      %p69 = pneg %p63
      %p70 = scmp.eq.s32.totalorder %s16, 1
      %p71 = por %p69, %p70
      %p72 = scmp.ne.s32.totalorder %s64, %s67
      %p73 = scmp.eq.s32.totalorder %s16, 0
      %p74 = por %p72, %p73
      %p75 = scmp.ne.s32.totalorder %s64, %s67
      %p76 = scmp.eq.s32.totalorder %s21, 1
      %p77 = por %p75, %p76
      %p78 = scmp.ne.s32.totalorder %s67, %s68
      %p79 = scmp.eq.s32.totalorder %s21, 0
      %p80 = por %p78, %p79
      %p81 = scmp.ne.s32.totalorder %s67, %s68
      %p82 = scmp.eq.s32.totalorder %s22, 1
      %p83 = por %p81, %p82
      %p85 = scmp.ne.s32.totalorder %s68, %s84
      %p86 = scmp.eq.s32.totalorder %s22, 0
      %p87 = por %p85, %p86
      %s88 = ssub.s32 %s24, %s31
      %p89 = scmp.eq.s32.totalorder %s88, 0
      %s91 = sadd.s32 %s90, 1
      %s92 = scalar_select %p89, %s90, %s91
      %p95 = pneg %p89
      %p96 = scmp.eq.s32.totalorder %s16, 1
      %p97 = por %p95, %p96
      %p98 = scmp.ne.s32.totalorder %s90, %s93
      %p99 = scmp.eq.s32.totalorder %s16, 0
      %p100 = por %p98, %p99
      %p101 = scmp.ne.s32.totalorder %s90, %s93
      %p102 = scmp.eq.s32.totalorder %s21, 1
      %p103 = por %p101, %p102
      %p104 = scmp.ne.s32.totalorder %s93, %s94
      %p105 = scmp.eq.s32.totalorder %s21, 0
      %p106 = por %p104, %p105
      %p107 = scmp.ne.s32.totalorder %s93, %s94
      %p108 = scmp.eq.s32.totalorder %s22, 1
      %p109 = por %p107, %p108
      %p111 = scmp.ne.s32.totalorder %s94, %s110
      %p112 = scmp.eq.s32.totalorder %s22, 0
      %p113 = por %p111, %p112
      %s114 = ssub.s32 %s23, %s35
      %s115 = ssub.s32 %s24, %s31
      %s116 = sor.u32 %s114, %s115
      %p117 = scmp.eq.s32.totalorder %s116, 0
      %s119 = sadd.s32 %s118, 1
      %s120 = scalar_select %p117, %s118, %s119
      %p123 = pneg %p117
      %p124 = scmp.eq.s32.totalorder %s16, 1
      %p125 = por %p123, %p124
      %p126 = scmp.ne.s32.totalorder %s118, %s121
      %p127 = scmp.eq.s32.totalorder %s16, 0
      %p128 = por %p126, %p127
      %p129 = scmp.ne.s32.totalorder %s118, %s121
      %p130 = scmp.eq.s32.totalorder %s21, 1
      %p131 = por %p129, %p130
      %p132 = scmp.ne.s32.totalorder %s121, %s122
      %p133 = scmp.eq.s32.totalorder %s21, 0
      %p134 = por %p132, %p133
      %p135 = scmp.ne.s32.totalorder %s121, %s122
      %p136 = scmp.eq.s32.totalorder %s22, 1
      %p137 = por %p135, %p136
      %p139 = scmp.ne.s32.totalorder %s122, %s138
      %p140 = scmp.eq.s32.totalorder %s22, 0
      %p141 = por %p139, %p140
      %p142 = scmp.le.s32.totalorder 1, %s16
      %p143 = scmp.lt.s32.totalorder %s16, 3
      %p144 = pnand %p142, %p143
      %p145 = pneg %p144
      // Predicated region
      $region9: #{tpu_custom_call.1} parent=5 // pred_check
        _
      $region10: #{tpu_custom_call.1} parent=5 // pred_check_branch
        %147 = sbr.rel (%p144) target = $region12
      $region11: #{tpu_custom_call.1} parent=5 // pred_region
        %s148 = ssub.s32 %s16, 1
        // Predicated region
        $region13: #{tpu_custom_call.1} parent=11 // pred_check
          %p149 = pneg %p54
        $region14: #{tpu_custom_call.1} parent=11 // pred_check_branch
          %151 = sbr.rel (%p149) target = $region16
        $region15: #{tpu_custom_call.1} parent=11 // pred_region
          %s152 = smul.u32 2, %s25
          %s154 = ssub.s32 4096, 4096
          %155 = vsyncadd [#allocation3], %s154
          %s156 = smul.addr %s152, 16
          %s157 = smul.addr %s156, 128
          %s158 = scalar_lea.hbm %s0, %s157
          %s159 = sshll.u32 [#allocation2], 4
          %s160 = int_to_ptr.vmem [resolvable:$true] %s159
          %165 = dma.hbm_to_vmem [thread:$0]  %s158, 4096, %s160, [#allocation3], 2048, 2048, 128
        $region16: #{tpu_custom_call.1} parent=11 // pred_fallthru
          _
      $region12: #{tpu_custom_call.1} parent=5 // pred_fallthru
        _
      %p166 = scmp.lt.s32.totalorder %s16, 2
      // Predicated region
      $region17: #{tpu_custom_call.1} parent=5 // pred_check
        %p167 = pneg %p166
      $region18: #{tpu_custom_call.1} parent=5 // pred_check_branch
        %169 = sbr.rel (%p167) target = $region20
      $region19: #{tpu_custom_call.1} parent=5 // pred_region
        // Predicated region
        $region21: #{tpu_custom_call.1} parent=19 // pred_check
          %p170 = pneg %p74
        $region22: #{tpu_custom_call.1} parent=19 // pred_check_branch
          %172 = sbr.rel (%p170) target = $region24
        $region23: #{tpu_custom_call.1} parent=19 // pred_region
          %s173 = sand.u32 %s16, 1
          %s174 = scalar_lea.sflag [#allocation6], %s173
          %s175 = sand.u32 %s64, 1
          %s176 = smul.addr %s175, 4096
          %s177 = scalar_lea.vmem [#allocation5], %s176
          %s178 = smul.u32 4, %s24
          %s180 = ssub.s32 65536, 65536
          %181 = vsyncadd %s174, %s180
          %s182 = smul.addr %s178, 64
          %s183 = scalar_lea.hbm %s1, %s182
          %s184 = sshll.u32 %s177, 4
          %s185 = int_to_ptr.vmem [resolvable:$true] %s184
          %190 = dma.hbm_to_vmem [thread:$0]  %s183, 65536, %s185, %s174, 512, 256, 16
        $region24: #{tpu_custom_call.1} parent=19 // pred_fallthru
          _
        // Predicated region
        $region25: #{tpu_custom_call.1} parent=19 // pred_check
          %p191 = pneg %p100
        $region26: #{tpu_custom_call.1} parent=19 // pred_check_branch
          %193 = sbr.rel (%p191) target = $region28
        $region27: #{tpu_custom_call.1} parent=19 // pred_region
          %s194 = sand.u32 %s16, 1
          %s195 = scalar_lea.sflag [#allocation6], %s194
          %s196 = sand.u32 %s90, 1
          %s197 = smul.addr %s196, 4
          %s198 = scalar_lea.vmem [#allocation7], %s197
          %s199 = smul.u32 4, %s24
          %s201 = ssub.s32 64, 64
          %202 = vsyncadd %s195, %s201
          %s203 = smul.addr %s199, 16
          %s204 = scalar_lea.hbm %s2, %s203
          %s206 = sshll.u32 %s198, 4
          %s207 = int_to_ptr.vmem [resolvable:$true] %s206
          %209 = dma.hbm_to_vmem [thread:$0]  %s204, 64, %s207, %s195
        $region28: #{tpu_custom_call.1} parent=19 // pred_fallthru
          _
      $region20: #{tpu_custom_call.1} parent=5 // pred_fallthru
        _
      %p210 = scmp.le.s32.totalorder 1, %s16
      %p211 = scmp.lt.s32.totalorder %s16, 3
      %p212 = pnand %p210, %p211
      %p213 = pneg %p212
      // Predicated region
      $region29: #{tpu_custom_call.1} parent=5 // pred_check
        _
      $region30: #{tpu_custom_call.1} parent=5 // pred_check_branch
        %215 = sbr.rel (%p212) target = $region32
      $region31: #{tpu_custom_call.1} parent=5 // pred_region
        %s216 = ssub.s32 %s16, 1
        // Predicated region
        $region33: #{tpu_custom_call.1} parent=31 // pred_check
          %p217 = pneg %p54
        $region34: #{tpu_custom_call.1} parent=31 // pred_check_branch
          %219 = sbr.rel (%p217) target = $region36
        $region35: #{tpu_custom_call.1} parent=31 // pred_region
          %220 = dma.done [#allocation3], 4096
        $region36: #{tpu_custom_call.1} parent=31 // pred_fallthru
          _
        %s221 = sand.u32 %s21, 1
        %s222 = scalar_lea.sflag [#allocation6], %s221
        %s223 = sand.u32 %s67, 1
        %s224 = smul.addr %s223, 4096
        %s225 = scalar_lea.vmem [#allocation5], %s224
        // Predicated region
        $region37: #{tpu_custom_call.1} parent=31 // pred_check
          %p226 = pneg %p80
        $region38: #{tpu_custom_call.1} parent=31 // pred_check_branch
          %228 = sbr.rel (%p226) target = $region40
        $region39: #{tpu_custom_call.1} parent=31 // pred_region
          %229 = dma.done %s222, 65536
        $region40: #{tpu_custom_call.1} parent=31 // pred_fallthru
          _
        %s230 = sand.u32 %s21, 1
        %s231 = scalar_lea.sflag [#allocation6], %s230
        %s232 = sand.u32 %s93, 1
        %s233 = smul.addr %s232, 4
        %s234 = scalar_lea.vmem [#allocation7], %s233
        // Predicated region
        $region41: #{tpu_custom_call.1} parent=31 // pred_check
          %p235 = pneg %p106
        $region42: #{tpu_custom_call.1} parent=31 // pred_check_branch
          %237 = sbr.rel (%p235) target = $region44
        $region43: #{tpu_custom_call.1} parent=31 // pred_region
          %238 = dma.done %s231, 64
        $region44: #{tpu_custom_call.1} parent=31 // pred_fallthru
          _
        %p239 = pneg %p54
        %p240 = pneg %p51
        %s241 = sand.u32 %s21, 1
        %s242 = scalar_lea.sflag [#allocation6], %s241
        %s243 = sand.u32 %s67, 1
        %s244 = smul.addr %s243, 4096
        %s245 = scalar_lea.vmem [#allocation5], %s244
        %p246 = pneg %p80
        %p247 = pneg %p77
        %s248 = sand.u32 %s21, 1
        %s249 = scalar_lea.sflag [#allocation6], %s248
        %s250 = sand.u32 %s93, 1
        %s251 = smul.addr %s250, 4
        %s252 = scalar_lea.vmem [#allocation7], %s251
        %p253 = pneg %p106
        %p254 = pneg %p103
        %p255 = pneg %p134
        %p256 = pneg %p131
        %s257 = sand.u32 %s121, 1
        %s258 = scalar_lea.sflag [#allocation4], %s257
        %s259 = sand.u32 %s121, 1
        %s260 = smul.addr %s259, 64
        %s261 = scalar_lea.vmem [#allocation8], %s260
        %s262 = smul.u32 2, %s25
        %s263 = smul.u32 4, %s26
        %s264 = smul.u32 4, %s26
        %s265 = smul.u32 2, %s25
        %s266 = smul.u32 4, %s26
        %v267 = vld [vmem:[#allocation2] sm:$0xff]
        %v268 = vld [vmem:[#allocation2 + $0x8] sm:$0xff]
        %v269 = vld [vmem:[#allocation2 + $0x10] sm:$0xff]
        %v270 = vld [vmem:[#allocation2 + $0x18] sm:$0xff]
        %v271 = vld [vmem:[#allocation2 + $0x20] sm:$0xff]
        %v272 = vld [vmem:[#allocation2 + $0x28] sm:$0xff]
        %v273 = vld [vmem:[#allocation2 + $0x30] sm:$0xff]
        %v274 = vld [vmem:[#allocation2 + $0x38] sm:$0xff]
        %v275 = vld [vmem:[#allocation2 + $0x40] sm:$0xff]
        %v276 = vld [vmem:[#allocation2 + $0x48] sm:$0xff]
        %v277 = vld [vmem:[#allocation2 + $0x50] sm:$0xff]
        %v278 = vld [vmem:[#allocation2 + $0x58] sm:$0xff]
        %v279 = vld [vmem:[#allocation2 + $0x60] sm:$0xff]
        %v280 = vld [vmem:[#allocation2 + $0x68] sm:$0xff]
        %v281 = vld [vmem:[#allocation2 + $0x70] sm:$0xff]
        %v282 = vld [vmem:[#allocation2 + $0x78] sm:$0xff]
        %v283 = vld [vmem:[#allocation2 + $0x80] sm:$0xff]
        %v284 = vld [vmem:[#allocation2 + $0x88] sm:$0xff]
        %v285 = vld [vmem:[#allocation2 + $0x90] sm:$0xff]
        %v286 = vld [vmem:[#allocation2 + $0x98] sm:$0xff]
        %v287 = vld [vmem:[#allocation2 + $0xa0] sm:$0xff]
        %v288 = vld [vmem:[#allocation2 + $0xa8] sm:$0xff]
        %v289 = vld [vmem:[#allocation2 + $0xb0] sm:$0xff]
        %v290 = vld [vmem:[#allocation2 + $0xb8] sm:$0xff]
        %v291 = vld [vmem:[#allocation2 + $0xc0] sm:$0xff]
        %v292 = vld [vmem:[#allocation2 + $0xc8] sm:$0xff]
        %v293 = vld [vmem:[#allocation2 + $0xd0] sm:$0xff]
        %v294 = vld [vmem:[#allocation2 + $0xd8] sm:$0xff]
        %v295 = vld [vmem:[#allocation2 + $0xe0] sm:$0xff]
        %v296 = vld [vmem:[#allocation2 + $0xe8] sm:$0xff]
        %v297 = vld [vmem:[#allocation2 + $0xf0] sm:$0xff]
        %v298 = vld [vmem:[#allocation2 + $0xf8] sm:$0xff]
        %v299 = vpack.c.bf16 %v283, %v267
        %v300 = vpack.c.bf16 %v284, %v268
        %v301 = vpack.c.bf16 %v285, %v269
        %v302 = vpack.c.bf16 %v286, %v270
        %v303 = vpack.c.bf16 %v287, %v271
        %v304 = vpack.c.bf16 %v288, %v272
        %v305 = vpack.c.bf16 %v289, %v273
        %v306 = vpack.c.bf16 %v290, %v274
        %v307 = vpack.c.bf16 %v291, %v275
        %v308 = vpack.c.bf16 %v292, %v276
        %v309 = vpack.c.bf16 %v293, %v277
        %v310 = vpack.c.bf16 %v294, %v278
        %v311 = vpack.c.bf16 %v295, %v279
        %v312 = vpack.c.bf16 %v296, %v280
        %v313 = vpack.c.bf16 %v297, %v281
        %v314 = vpack.c.bf16 %v298, %v282
        %v315 = vld [vmem:[%s225] sm:$0xff]
        %v316 = vld [vmem:[%s225 + $0x8] sm:$0xff]
        %v317 = vld [vmem:[%s225 + $0x10] sm:$0xff]
        %v318 = vld [vmem:[%s225 + $0x18] sm:$0xff]
        %v319 = vld [vmem:[%s225 + $0x20] sm:$0xff]
        %v320 = vld [vmem:[%s225 + $0x28] sm:$0xff]
        %v321 = vld [vmem:[%s225 + $0x30] sm:$0xff]
        %v322 = vld [vmem:[%s225 + $0x38] sm:$0xff]
        %v323 = vld [vmem:[%s225 + $0x40] sm:$0xff]
        %v324 = vld [vmem:[%s225 + $0x48] sm:$0xff]
        %v325 = vld [vmem:[%s225 + $0x50] sm:$0xff]
        %v326 = vld [vmem:[%s225 + $0x58] sm:$0xff]
        %v327 = vld [vmem:[%s225 + $0x60] sm:$0xff]
        %v328 = vld [vmem:[%s225 + $0x68] sm:$0xff]
        %v329 = vld [vmem:[%s225 + $0x70] sm:$0xff]
        %v330 = vld [vmem:[%s225 + $0x78] sm:$0xff]
        %v331 = vld [vmem:[%s225 + $0x80] sm:$0xff]
        %v332 = vld [vmem:[%s225 + $0x88] sm:$0xff]
        %v333 = vld [vmem:[%s225 + $0x90] sm:$0xff]
        %v334 = vld [vmem:[%s225 + $0x98] sm:$0xff]
        %v335 = vld [vmem:[%s225 + $0xa0] sm:$0xff]
        %v336 = vld [vmem:[%s225 + $0xa8] sm:$0xff]
        %v337 = vld [vmem:[%s225 + $0xb0] sm:$0xff]
        %v338 = vld [vmem:[%s225 + $0xb8] sm:$0xff]
        %v339 = vld [vmem:[%s225 + $0xc0] sm:$0xff]
        %v340 = vld [vmem:[%s225 + $0xc8] sm:$0xff]
        %v341 = vld [vmem:[%s225 + $0xd0] sm:$0xff]
        %v342 = vld [vmem:[%s225 + $0xd8] sm:$0xff]
        %v343 = vld [vmem:[%s225 + $0xe0] sm:$0xff]
        %v344 = vld [vmem:[%s225 + $0xe8] sm:$0xff]
        %v345 = vld [vmem:[%s225 + $0xf0] sm:$0xff]
        %v346 = vld [vmem:[%s225 + $0xf8] sm:$0xff]
        %v347 = vld [vmem:[%s225 + $0x100] sm:$0xff]
        %v348 = vld [vmem:[%s225 + $0x108] sm:$0xff]
        %v349 = vld [vmem:[%s225 + $0x110] sm:$0xff]
        %v350 = vld [vmem:[%s225 + $0x118] sm:$0xff]
        %v351 = vld [vmem:[%s225 + $0x120] sm:$0xff]
        %v352 = vld [vmem:[%s225 + $0x128] sm:$0xff]
        %v353 = vld [vmem:[%s225 + $0x130] sm:$0xff]
        %v354 = vld [vmem:[%s225 + $0x138] sm:$0xff]
        %v355 = vld [vmem:[%s225 + $0x140] sm:$0xff]
        %v356 = vld [vmem:[%s225 + $0x148] sm:$0xff]
        %v357 = vld [vmem:[%s225 + $0x150] sm:$0xff]
        %v358 = vld [vmem:[%s225 + $0x158] sm:$0xff]
        %v359 = vld [vmem:[%s225 + $0x160] sm:$0xff]
        %v360 = vld [vmem:[%s225 + $0x168] sm:$0xff]
        %v361 = vld [vmem:[%s225 + $0x170] sm:$0xff]
        %v362 = vld [vmem:[%s225 + $0x178] sm:$0xff]
        %v363 = vld [vmem:[%s225 + $0x180] sm:$0xff]
        %v364 = vld [vmem:[%s225 + $0x188] sm:$0xff]
        %v365 = vld [vmem:[%s225 + $0x190] sm:$0xff]
        %v366 = vld [vmem:[%s225 + $0x198] sm:$0xff]
        %v367 = vld [vmem:[%s225 + $0x1a0] sm:$0xff]
        %v368 = vld [vmem:[%s225 + $0x1a8] sm:$0xff]
        %v369 = vld [vmem:[%s225 + $0x1b0] sm:$0xff]
        %v370 = vld [vmem:[%s225 + $0x1b8] sm:$0xff]
        %v371 = vld [vmem:[%s225 + $0x1c0] sm:$0xff]
        %v372 = vld [vmem:[%s225 + $0x1c8] sm:$0xff]
        %v373 = vld [vmem:[%s225 + $0x1d0] sm:$0xff]
        %v374 = vld [vmem:[%s225 + $0x1d8] sm:$0xff]
        %v375 = vld [vmem:[%s225 + $0x1e0] sm:$0xff]
        %v376 = vld [vmem:[%s225 + $0x1e8] sm:$0xff]
        %v377 = vld [vmem:[%s225 + $0x1f0] sm:$0xff]
        %v378 = vld [vmem:[%s225 + $0x1f8] sm:$0xff]
        %v379 = vld [vmem:[%s225 + $0x200] sm:$0xff]
        %v380 = vld [vmem:[%s225 + $0x208] sm:$0xff]
        %v381 = vld [vmem:[%s225 + $0x210] sm:$0xff]
        %v382 = vld [vmem:[%s225 + $0x218] sm:$0xff]
        %v383 = vld [vmem:[%s225 + $0x220] sm:$0xff]
        %v384 = vld [vmem:[%s225 + $0x228] sm:$0xff]
        %v385 = vld [vmem:[%s225 + $0x230] sm:$0xff]
        %v386 = vld [vmem:[%s225 + $0x238] sm:$0xff]
        %v387 = vld [vmem:[%s225 + $0x240] sm:$0xff]
        %v388 = vld [vmem:[%s225 + $0x248] sm:$0xff]
        %v389 = vld [vmem:[%s225 + $0x250] sm:$0xff]
        %v390 = vld [vmem:[%s225 + $0x258] sm:$0xff]
        %v391 = vld [vmem:[%s225 + $0x260] sm:$0xff]
        %v392 = vld [vmem:[%s225 + $0x268] sm:$0xff]
        %v393 = vld [vmem:[%s225 + $0x270] sm:$0xff]
        %v394 = vld [vmem:[%s225 + $0x278] sm:$0xff]
        %v395 = vld [vmem:[%s225 + $0x280] sm:$0xff]
        %v396 = vld [vmem:[%s225 + $0x288] sm:$0xff]
        %v397 = vld [vmem:[%s225 + $0x290] sm:$0xff]
        %v398 = vld [vmem:[%s225 + $0x298] sm:$0xff]
        %v399 = vld [vmem:[%s225 + $0x2a0] sm:$0xff]
        %v400 = vld [vmem:[%s225 + $0x2a8] sm:$0xff]
        %v401 = vld [vmem:[%s225 + $0x2b0] sm:$0xff]
        %v402 = vld [vmem:[%s225 + $0x2b8] sm:$0xff]
        %v403 = vld [vmem:[%s225 + $0x2c0] sm:$0xff]
        %v404 = vld [vmem:[%s225 + $0x2c8] sm:$0xff]
        %v405 = vld [vmem:[%s225 + $0x2d0] sm:$0xff]
        %v406 = vld [vmem:[%s225 + $0x2d8] sm:$0xff]
        %v407 = vld [vmem:[%s225 + $0x2e0] sm:$0xff]
        %v408 = vld [vmem:[%s225 + $0x2e8] sm:$0xff]
        %v409 = vld [vmem:[%s225 + $0x2f0] sm:$0xff]
        %v410 = vld [vmem:[%s225 + $0x2f8] sm:$0xff]
        %v411 = vld [vmem:[%s225 + $0x300] sm:$0xff]
        %v412 = vld [vmem:[%s225 + $0x308] sm:$0xff]
        %v413 = vld [vmem:[%s225 + $0x310] sm:$0xff]
        %v414 = vld [vmem:[%s225 + $0x318] sm:$0xff]
        %v415 = vld [vmem:[%s225 + $0x320] sm:$0xff]
        %v416 = vld [vmem:[%s225 + $0x328] sm:$0xff]
        %v417 = vld [vmem:[%s225 + $0x330] sm:$0xff]
        %v418 = vld [vmem:[%s225 + $0x338] sm:$0xff]
        %v419 = vld [vmem:[%s225 + $0x340] sm:$0xff]
        %v420 = vld [vmem:[%s225 + $0x348] sm:$0xff]
        %v421 = vld [vmem:[%s225 + $0x350] sm:$0xff]
        %v422 = vld [vmem:[%s225 + $0x358] sm:$0xff]
        %v423 = vld [vmem:[%s225 + $0x360] sm:$0xff]
        %v424 = vld [vmem:[%s225 + $0x368] sm:$0xff]
        %v425 = vld [vmem:[%s225 + $0x370] sm:$0xff]
        %v426 = vld [vmem:[%s225 + $0x378] sm:$0xff]
        %v427 = vld [vmem:[%s225 + $0x380] sm:$0xff]
        %v428 = vld [vmem:[%s225 + $0x388] sm:$0xff]
        %v429 = vld [vmem:[%s225 + $0x390] sm:$0xff]
        %v430 = vld [vmem:[%s225 + $0x398] sm:$0xff]
        %v431 = vld [vmem:[%s225 + $0x3a0] sm:$0xff]
        %v432 = vld [vmem:[%s225 + $0x3a8] sm:$0xff]
        %v433 = vld [vmem:[%s225 + $0x3b0] sm:$0xff]
        %v434 = vld [vmem:[%s225 + $0x3b8] sm:$0xff]
        %v435 = vld [vmem:[%s225 + $0x3c0] sm:$0xff]
        %v436 = vld [vmem:[%s225 + $0x3c8] sm:$0xff]
        %v437 = vld [vmem:[%s225 + $0x3d0] sm:$0xff]
        %v438 = vld [vmem:[%s225 + $0x3d8] sm:$0xff]
        %v439 = vld [vmem:[%s225 + $0x3e0] sm:$0xff]
        %v440 = vld [vmem:[%s225 + $0x3e8] sm:$0xff]
        %v441 = vld [vmem:[%s225 + $0x3f0] sm:$0xff]
        %v442 = vld [vmem:[%s225 + $0x3f8] sm:$0xff]
        %v443 = vld [vmem:[%s225 + $0x400] sm:$0xff]
        %v444 = vld [vmem:[%s225 + $0x408] sm:$0xff]
        %v445 = vld [vmem:[%s225 + $0x410] sm:$0xff]
        %v446 = vld [vmem:[%s225 + $0x418] sm:$0xff]
        %v447 = vld [vmem:[%s225 + $0x420] sm:$0xff]
        %v448 = vld [vmem:[%s225 + $0x428] sm:$0xff]
        %v449 = vld [vmem:[%s225 + $0x430] sm:$0xff]
        %v450 = vld [vmem:[%s225 + $0x438] sm:$0xff]
        %v451 = vld [vmem:[%s225 + $0x440] sm:$0xff]
        %v452 = vld [vmem:[%s225 + $0x448] sm:$0xff]
        %v453 = vld [vmem:[%s225 + $0x450] sm:$0xff]
        %v454 = vld [vmem:[%s225 + $0x458] sm:$0xff]
        %v455 = vld [vmem:[%s225 + $0x460] sm:$0xff]
        %v456 = vld [vmem:[%s225 + $0x468] sm:$0xff]
        %v457 = vld [vmem:[%s225 + $0x470] sm:$0xff]
        %v458 = vld [vmem:[%s225 + $0x478] sm:$0xff]
        %v459 = vld [vmem:[%s225 + $0x480] sm:$0xff]
        %v460 = vld [vmem:[%s225 + $0x488] sm:$0xff]
        %v461 = vld [vmem:[%s225 + $0x490] sm:$0xff]
        %v462 = vld [vmem:[%s225 + $0x498] sm:$0xff]
        %v463 = vld [vmem:[%s225 + $0x4a0] sm:$0xff]
        %v464 = vld [vmem:[%s225 + $0x4a8] sm:$0xff]
        %v465 = vld [vmem:[%s225 + $0x4b0] sm:$0xff]
        %v466 = vld [vmem:[%s225 + $0x4b8] sm:$0xff]
        %v467 = vld [vmem:[%s225 + $0x4c0] sm:$0xff]
        %v468 = vld [vmem:[%s225 + $0x4c8] sm:$0xff]
        %v469 = vld [vmem:[%s225 + $0x4d0] sm:$0xff]
        %v470 = vld [vmem:[%s225 + $0x4d8] sm:$0xff]
        %v471 = vld [vmem:[%s225 + $0x4e0] sm:$0xff]
        %v472 = vld [vmem:[%s225 + $0x4e8] sm:$0xff]
        %v473 = vld [vmem:[%s225 + $0x4f0] sm:$0xff]
        %v474 = vld [vmem:[%s225 + $0x4f8] sm:$0xff]
        %v475 = vld [vmem:[%s225 + $0x500] sm:$0xff]
        %v476 = vld [vmem:[%s225 + $0x508] sm:$0xff]
        %v477 = vld [vmem:[%s225 + $0x510] sm:$0xff]
        %v478 = vld [vmem:[%s225 + $0x518] sm:$0xff]
        %v479 = vld [vmem:[%s225 + $0x520] sm:$0xff]
        %v480 = vld [vmem:[%s225 + $0x528] sm:$0xff]
        %v481 = vld [vmem:[%s225 + $0x530] sm:$0xff]
        %v482 = vld [vmem:[%s225 + $0x538] sm:$0xff]
        %v483 = vld [vmem:[%s225 + $0x540] sm:$0xff]
        %v484 = vld [vmem:[%s225 + $0x548] sm:$0xff]
        %v485 = vld [vmem:[%s225 + $0x550] sm:$0xff]
        %v486 = vld [vmem:[%s225 + $0x558] sm:$0xff]
        %v487 = vld [vmem:[%s225 + $0x560] sm:$0xff]
        %v488 = vld [vmem:[%s225 + $0x568] sm:$0xff]
        %v489 = vld [vmem:[%s225 + $0x570] sm:$0xff]
        %v490 = vld [vmem:[%s225 + $0x578] sm:$0xff]
        %v491 = vld [vmem:[%s225 + $0x580] sm:$0xff]
        %v492 = vld [vmem:[%s225 + $0x588] sm:$0xff]
        %v493 = vld [vmem:[%s225 + $0x590] sm:$0xff]
        %v494 = vld [vmem:[%s225 + $0x598] sm:$0xff]
        %v495 = vld [vmem:[%s225 + $0x5a0] sm:$0xff]
        %v496 = vld [vmem:[%s225 + $0x5a8] sm:$0xff]
        %v497 = vld [vmem:[%s225 + $0x5b0] sm:$0xff]
        %v498 = vld [vmem:[%s225 + $0x5b8] sm:$0xff]
        %v499 = vld [vmem:[%s225 + $0x5c0] sm:$0xff]
        %v500 = vld [vmem:[%s225 + $0x5c8] sm:$0xff]
        %v501 = vld [vmem:[%s225 + $0x5d0] sm:$0xff]
        %v502 = vld [vmem:[%s225 + $0x5d8] sm:$0xff]
        %v503 = vld [vmem:[%s225 + $0x5e0] sm:$0xff]
        %v504 = vld [vmem:[%s225 + $0x5e8] sm:$0xff]
        %v505 = vld [vmem:[%s225 + $0x5f0] sm:$0xff]
        %v506 = vld [vmem:[%s225 + $0x5f8] sm:$0xff]
        %v507 = vld [vmem:[%s225 + $0x600] sm:$0xff]
        %v508 = vld [vmem:[%s225 + $0x608] sm:$0xff]
        %v509 = vld [vmem:[%s225 + $0x610] sm:$0xff]
        %v510 = vld [vmem:[%s225 + $0x618] sm:$0xff]
        %v511 = vld [vmem:[%s225 + $0x620] sm:$0xff]
        %v512 = vld [vmem:[%s225 + $0x628] sm:$0xff]
        %v513 = vld [vmem:[%s225 + $0x630] sm:$0xff]
        %v514 = vld [vmem:[%s225 + $0x638] sm:$0xff]
        %v515 = vld [vmem:[%s225 + $0x640] sm:$0xff]
        %v516 = vld [vmem:[%s225 + $0x648] sm:$0xff]
        %v517 = vld [vmem:[%s225 + $0x650] sm:$0xff]
        %v518 = vld [vmem:[%s225 + $0x658] sm:$0xff]
        %v519 = vld [vmem:[%s225 + $0x660] sm:$0xff]
        %v520 = vld [vmem:[%s225 + $0x668] sm:$0xff]
        %v521 = vld [vmem:[%s225 + $0x670] sm:$0xff]
        %v522 = vld [vmem:[%s225 + $0x678] sm:$0xff]
        %v523 = vld [vmem:[%s225 + $0x680] sm:$0xff]
        %v524 = vld [vmem:[%s225 + $0x688] sm:$0xff]
        %v525 = vld [vmem:[%s225 + $0x690] sm:$0xff]
        %v526 = vld [vmem:[%s225 + $0x698] sm:$0xff]
        %v527 = vld [vmem:[%s225 + $0x6a0] sm:$0xff]
        %v528 = vld [vmem:[%s225 + $0x6a8] sm:$0xff]
        %v529 = vld [vmem:[%s225 + $0x6b0] sm:$0xff]
        %v530 = vld [vmem:[%s225 + $0x6b8] sm:$0xff]
        %v531 = vld [vmem:[%s225 + $0x6c0] sm:$0xff]
        %v532 = vld [vmem:[%s225 + $0x6c8] sm:$0xff]
        %v533 = vld [vmem:[%s225 + $0x6d0] sm:$0xff]
        %v534 = vld [vmem:[%s225 + $0x6d8] sm:$0xff]
        %v535 = vld [vmem:[%s225 + $0x6e0] sm:$0xff]
        %v536 = vld [vmem:[%s225 + $0x6e8] sm:$0xff]
        %v537 = vld [vmem:[%s225 + $0x6f0] sm:$0xff]
        %v538 = vld [vmem:[%s225 + $0x6f8] sm:$0xff]
        %v539 = vld [vmem:[%s225 + $0x700] sm:$0xff]
        %v540 = vld [vmem:[%s225 + $0x708] sm:$0xff]
        %v541 = vld [vmem:[%s225 + $0x710] sm:$0xff]
        %v542 = vld [vmem:[%s225 + $0x718] sm:$0xff]
        %v543 = vld [vmem:[%s225 + $0x720] sm:$0xff]
        %v544 = vld [vmem:[%s225 + $0x728] sm:$0xff]
        %v545 = vld [vmem:[%s225 + $0x730] sm:$0xff]
        %v546 = vld [vmem:[%s225 + $0x738] sm:$0xff]
        %v547 = vld [vmem:[%s225 + $0x740] sm:$0xff]
        %v548 = vld [vmem:[%s225 + $0x748] sm:$0xff]
        %v549 = vld [vmem:[%s225 + $0x750] sm:$0xff]
        %v550 = vld [vmem:[%s225 + $0x758] sm:$0xff]
        %v551 = vld [vmem:[%s225 + $0x760] sm:$0xff]
        %v552 = vld [vmem:[%s225 + $0x768] sm:$0xff]
        %v553 = vld [vmem:[%s225 + $0x770] sm:$0xff]
        %v554 = vld [vmem:[%s225 + $0x778] sm:$0xff]
        %v555 = vld [vmem:[%s225 + $0x780] sm:$0xff]
        %v556 = vld [vmem:[%s225 + $0x788] sm:$0xff]
        %v557 = vld [vmem:[%s225 + $0x790] sm:$0xff]
        %v558 = vld [vmem:[%s225 + $0x798] sm:$0xff]
        %v559 = vld [vmem:[%s225 + $0x7a0] sm:$0xff]
        %v560 = vld [vmem:[%s225 + $0x7a8] sm:$0xff]
        %v561 = vld [vmem:[%s225 + $0x7b0] sm:$0xff]
        %v562 = vld [vmem:[%s225 + $0x7b8] sm:$0xff]
        %v563 = vld [vmem:[%s225 + $0x7c0] sm:$0xff]
        %v564 = vld [vmem:[%s225 + $0x7c8] sm:$0xff]
        %v565 = vld [vmem:[%s225 + $0x7d0] sm:$0xff]
        %v566 = vld [vmem:[%s225 + $0x7d8] sm:$0xff]
        %v567 = vld [vmem:[%s225 + $0x7e0] sm:$0xff]
        %v568 = vld [vmem:[%s225 + $0x7e8] sm:$0xff]
        %v569 = vld [vmem:[%s225 + $0x7f0] sm:$0xff]
        %v570 = vld [vmem:[%s225 + $0x7f8] sm:$0xff]
        %v571 = vld [vmem:[%s225 + $0x800] sm:$0xff]
        %v572 = vld [vmem:[%s225 + $0x808] sm:$0xff]
        %v573 = vld [vmem:[%s225 + $0x810] sm:$0xff]
        %v574 = vld [vmem:[%s225 + $0x818] sm:$0xff]
        %v575 = vld [vmem:[%s225 + $0x820] sm:$0xff]
        %v576 = vld [vmem:[%s225 + $0x828] sm:$0xff]
        %v577 = vld [vmem:[%s225 + $0x830] sm:$0xff]
        %v578 = vld [vmem:[%s225 + $0x838] sm:$0xff]
        %v579 = vld [vmem:[%s225 + $0x840] sm:$0xff]
        %v580 = vld [vmem:[%s225 + $0x848] sm:$0xff]
        %v581 = vld [vmem:[%s225 + $0x850] sm:$0xff]
        %v582 = vld [vmem:[%s225 + $0x858] sm:$0xff]
        %v583 = vld [vmem:[%s225 + $0x860] sm:$0xff]
        %v584 = vld [vmem:[%s225 + $0x868] sm:$0xff]
        %v585 = vld [vmem:[%s225 + $0x870] sm:$0xff]
        %v586 = vld [vmem:[%s225 + $0x878] sm:$0xff]
        %v587 = vld [vmem:[%s225 + $0x880] sm:$0xff]
        %v588 = vld [vmem:[%s225 + $0x888] sm:$0xff]
        %v589 = vld [vmem:[%s225 + $0x890] sm:$0xff]
        %v590 = vld [vmem:[%s225 + $0x898] sm:$0xff]
        %v591 = vld [vmem:[%s225 + $0x8a0] sm:$0xff]
        %v592 = vld [vmem:[%s225 + $0x8a8] sm:$0xff]
        %v593 = vld [vmem:[%s225 + $0x8b0] sm:$0xff]
        %v594 = vld [vmem:[%s225 + $0x8b8] sm:$0xff]
        %v595 = vld [vmem:[%s225 + $0x8c0] sm:$0xff]
        %v596 = vld [vmem:[%s225 + $0x8c8] sm:$0xff]
        %v597 = vld [vmem:[%s225 + $0x8d0] sm:$0xff]
        %v598 = vld [vmem:[%s225 + $0x8d8] sm:$0xff]
        %v599 = vld [vmem:[%s225 + $0x8e0] sm:$0xff]
        %v600 = vld [vmem:[%s225 + $0x8e8] sm:$0xff]
        %v601 = vld [vmem:[%s225 + $0x8f0] sm:$0xff]
        %v602 = vld [vmem:[%s225 + $0x8f8] sm:$0xff]
        %v603 = vld [vmem:[%s225 + $0x900] sm:$0xff]
        %v604 = vld [vmem:[%s225 + $0x908] sm:$0xff]
        %v605 = vld [vmem:[%s225 + $0x910] sm:$0xff]
        %v606 = vld [vmem:[%s225 + $0x918] sm:$0xff]
        %v607 = vld [vmem:[%s225 + $0x920] sm:$0xff]
        %v608 = vld [vmem:[%s225 + $0x928] sm:$0xff]
        %v609 = vld [vmem:[%s225 + $0x930] sm:$0xff]
        %v610 = vld [vmem:[%s225 + $0x938] sm:$0xff]
        %v611 = vld [vmem:[%s225 + $0x940] sm:$0xff]
        %v612 = vld [vmem:[%s225 + $0x948] sm:$0xff]
        %v613 = vld [vmem:[%s225 + $0x950] sm:$0xff]
        %v614 = vld [vmem:[%s225 + $0x958] sm:$0xff]
        %v615 = vld [vmem:[%s225 + $0x960] sm:$0xff]
        %v616 = vld [vmem:[%s225 + $0x968] sm:$0xff]
        %v617 = vld [vmem:[%s225 + $0x970] sm:$0xff]
        %v618 = vld [vmem:[%s225 + $0x978] sm:$0xff]
        %v619 = vld [vmem:[%s225 + $0x980] sm:$0xff]
        %v620 = vld [vmem:[%s225 + $0x988] sm:$0xff]
        %v621 = vld [vmem:[%s225 + $0x990] sm:$0xff]
        %v622 = vld [vmem:[%s225 + $0x998] sm:$0xff]
        %v623 = vld [vmem:[%s225 + $0x9a0] sm:$0xff]
        %v624 = vld [vmem:[%s225 + $0x9a8] sm:$0xff]
        %v625 = vld [vmem:[%s225 + $0x9b0] sm:$0xff]
        %v626 = vld [vmem:[%s225 + $0x9b8] sm:$0xff]
        %v627 = vld [vmem:[%s225 + $0x9c0] sm:$0xff]
        %v628 = vld [vmem:[%s225 + $0x9c8] sm:$0xff]
        %v629 = vld [vmem:[%s225 + $0x9d0] sm:$0xff]
        %v630 = vld [vmem:[%s225 + $0x9d8] sm:$0xff]
        %v631 = vld [vmem:[%s225 + $0x9e0] sm:$0xff]
        %v632 = vld [vmem:[%s225 + $0x9e8] sm:$0xff]
        %v633 = vld [vmem:[%s225 + $0x9f0] sm:$0xff]
        %v634 = vld [vmem:[%s225 + $0x9f8] sm:$0xff]
        %v635 = vld [vmem:[%s225 + $0xa00] sm:$0xff]
        %v636 = vld [vmem:[%s225 + $0xa08] sm:$0xff]
        %v637 = vld [vmem:[%s225 + $0xa10] sm:$0xff]
        %v638 = vld [vmem:[%s225 + $0xa18] sm:$0xff]
        %v639 = vld [vmem:[%s225 + $0xa20] sm:$0xff]
        %v640 = vld [vmem:[%s225 + $0xa28] sm:$0xff]
        %v641 = vld [vmem:[%s225 + $0xa30] sm:$0xff]
        %v642 = vld [vmem:[%s225 + $0xa38] sm:$0xff]
        %v643 = vld [vmem:[%s225 + $0xa40] sm:$0xff]
        %v644 = vld [vmem:[%s225 + $0xa48] sm:$0xff]
        %v645 = vld [vmem:[%s225 + $0xa50] sm:$0xff]
        %v646 = vld [vmem:[%s225 + $0xa58] sm:$0xff]
        %v647 = vld [vmem:[%s225 + $0xa60] sm:$0xff]
        %v648 = vld [vmem:[%s225 + $0xa68] sm:$0xff]
        %v649 = vld [vmem:[%s225 + $0xa70] sm:$0xff]
        %v650 = vld [vmem:[%s225 + $0xa78] sm:$0xff]
        %v651 = vld [vmem:[%s225 + $0xa80] sm:$0xff]
        %v652 = vld [vmem:[%s225 + $0xa88] sm:$0xff]
        %v653 = vld [vmem:[%s225 + $0xa90] sm:$0xff]
        %v654 = vld [vmem:[%s225 + $0xa98] sm:$0xff]
        %v655 = vld [vmem:[%s225 + $0xaa0] sm:$0xff]
        %v656 = vld [vmem:[%s225 + $0xaa8] sm:$0xff]
        %v657 = vld [vmem:[%s225 + $0xab0] sm:$0xff]
        %v658 = vld [vmem:[%s225 + $0xab8] sm:$0xff]
        %v659 = vld [vmem:[%s225 + $0xac0] sm:$0xff]
        %v660 = vld [vmem:[%s225 + $0xac8] sm:$0xff]
        %v661 = vld [vmem:[%s225 + $0xad0] sm:$0xff]
        %v662 = vld [vmem:[%s225 + $0xad8] sm:$0xff]
        %v663 = vld [vmem:[%s225 + $0xae0] sm:$0xff]
        %v664 = vld [vmem:[%s225 + $0xae8] sm:$0xff]
        %v665 = vld [vmem:[%s225 + $0xaf0] sm:$0xff]
        %v666 = vld [vmem:[%s225 + $0xaf8] sm:$0xff]
        %v667 = vld [vmem:[%s225 + $0xb00] sm:$0xff]
        %v668 = vld [vmem:[%s225 + $0xb08] sm:$0xff]
        %v669 = vld [vmem:[%s225 + $0xb10] sm:$0xff]
        %v670 = vld [vmem:[%s225 + $0xb18] sm:$0xff]
        %v671 = vld [vmem:[%s225 + $0xb20] sm:$0xff]
        %v672 = vld [vmem:[%s225 + $0xb28] sm:$0xff]
        %v673 = vld [vmem:[%s225 + $0xb30] sm:$0xff]
        %v674 = vld [vmem:[%s225 + $0xb38] sm:$0xff]
        %v675 = vld [vmem:[%s225 + $0xb40] sm:$0xff]
        %v676 = vld [vmem:[%s225 + $0xb48] sm:$0xff]
        %v677 = vld [vmem:[%s225 + $0xb50] sm:$0xff]
        %v678 = vld [vmem:[%s225 + $0xb58] sm:$0xff]
        %v679 = vld [vmem:[%s225 + $0xb60] sm:$0xff]
        %v680 = vld [vmem:[%s225 + $0xb68] sm:$0xff]
        %v681 = vld [vmem:[%s225 + $0xb70] sm:$0xff]
        %v682 = vld [vmem:[%s225 + $0xb78] sm:$0xff]
        %v683 = vld [vmem:[%s225 + $0xb80] sm:$0xff]
        %v684 = vld [vmem:[%s225 + $0xb88] sm:$0xff]
        %v685 = vld [vmem:[%s225 + $0xb90] sm:$0xff]
        %v686 = vld [vmem:[%s225 + $0xb98] sm:$0xff]
        %v687 = vld [vmem:[%s225 + $0xba0] sm:$0xff]
        %v688 = vld [vmem:[%s225 + $0xba8] sm:$0xff]
        %v689 = vld [vmem:[%s225 + $0xbb0] sm:$0xff]
        %v690 = vld [vmem:[%s225 + $0xbb8] sm:$0xff]
        %v691 = vld [vmem:[%s225 + $0xbc0] sm:$0xff]
        %v692 = vld [vmem:[%s225 + $0xbc8] sm:$0xff]
        %v693 = vld [vmem:[%s225 + $0xbd0] sm:$0xff]
        %v694 = vld [vmem:[%s225 + $0xbd8] sm:$0xff]
        %v695 = vld [vmem:[%s225 + $0xbe0] sm:$0xff]
        %v696 = vld [vmem:[%s225 + $0xbe8] sm:$0xff]
        %v697 = vld [vmem:[%s225 + $0xbf0] sm:$0xff]
        %v698 = vld [vmem:[%s225 + $0xbf8] sm:$0xff]
        %v699 = vld [vmem:[%s225 + $0xc00] sm:$0xff]
        %v700 = vld [vmem:[%s225 + $0xc08] sm:$0xff]
        %v701 = vld [vmem:[%s225 + $0xc10] sm:$0xff]
        %v702 = vld [vmem:[%s225 + $0xc18] sm:$0xff]
        %v703 = vld [vmem:[%s225 + $0xc20] sm:$0xff]
        %v704 = vld [vmem:[%s225 + $0xc28] sm:$0xff]
        %v705 = vld [vmem:[%s225 + $0xc30] sm:$0xff]
        %v706 = vld [vmem:[%s225 + $0xc38] sm:$0xff]
        %v707 = vld [vmem:[%s225 + $0xc40] sm:$0xff]
        %v708 = vld [vmem:[%s225 + $0xc48] sm:$0xff]
        %v709 = vld [vmem:[%s225 + $0xc50] sm:$0xff]
        %v710 = vld [vmem:[%s225 + $0xc58] sm:$0xff]
        %v711 = vld [vmem:[%s225 + $0xc60] sm:$0xff]
        %v712 = vld [vmem:[%s225 + $0xc68] sm:$0xff]
        %v713 = vld [vmem:[%s225 + $0xc70] sm:$0xff]
        %v714 = vld [vmem:[%s225 + $0xc78] sm:$0xff]
        %v715 = vld [vmem:[%s225 + $0xc80] sm:$0xff]
        %v716 = vld [vmem:[%s225 + $0xc88] sm:$0xff]
        %v717 = vld [vmem:[%s225 + $0xc90] sm:$0xff]
        %v718 = vld [vmem:[%s225 + $0xc98] sm:$0xff]
        %v719 = vld [vmem:[%s225 + $0xca0] sm:$0xff]
        %v720 = vld [vmem:[%s225 + $0xca8] sm:$0xff]
        %v721 = vld [vmem:[%s225 + $0xcb0] sm:$0xff]
        %v722 = vld [vmem:[%s225 + $0xcb8] sm:$0xff]
        %v723 = vld [vmem:[%s225 + $0xcc0] sm:$0xff]
        %v724 = vld [vmem:[%s225 + $0xcc8] sm:$0xff]
        %v725 = vld [vmem:[%s225 + $0xcd0] sm:$0xff]
        %v726 = vld [vmem:[%s225 + $0xcd8] sm:$0xff]
        %v727 = vld [vmem:[%s225 + $0xce0] sm:$0xff]
        %v728 = vld [vmem:[%s225 + $0xce8] sm:$0xff]
        %v729 = vld [vmem:[%s225 + $0xcf0] sm:$0xff]
        %v730 = vld [vmem:[%s225 + $0xcf8] sm:$0xff]
        %v731 = vld [vmem:[%s225 + $0xd00] sm:$0xff]
        %v732 = vld [vmem:[%s225 + $0xd08] sm:$0xff]
        %v733 = vld [vmem:[%s225 + $0xd10] sm:$0xff]
        %v734 = vld [vmem:[%s225 + $0xd18] sm:$0xff]
        %v735 = vld [vmem:[%s225 + $0xd20] sm:$0xff]
        %v736 = vld [vmem:[%s225 + $0xd28] sm:$0xff]
        %v737 = vld [vmem:[%s225 + $0xd30] sm:$0xff]
        %v738 = vld [vmem:[%s225 + $0xd38] sm:$0xff]
        %v739 = vld [vmem:[%s225 + $0xd40] sm:$0xff]
        %v740 = vld [vmem:[%s225 + $0xd48] sm:$0xff]
        %v741 = vld [vmem:[%s225 + $0xd50] sm:$0xff]
        %v742 = vld [vmem:[%s225 + $0xd58] sm:$0xff]
        %v743 = vld [vmem:[%s225 + $0xd60] sm:$0xff]
        %v744 = vld [vmem:[%s225 + $0xd68] sm:$0xff]
        %v745 = vld [vmem:[%s225 + $0xd70] sm:$0xff]
        %v746 = vld [vmem:[%s225 + $0xd78] sm:$0xff]
        %v747 = vld [vmem:[%s225 + $0xd80] sm:$0xff]
        %v748 = vld [vmem:[%s225 + $0xd88] sm:$0xff]
        %v749 = vld [vmem:[%s225 + $0xd90] sm:$0xff]
        %v750 = vld [vmem:[%s225 + $0xd98] sm:$0xff]
        %v751 = vld [vmem:[%s225 + $0xda0] sm:$0xff]
        %v752 = vld [vmem:[%s225 + $0xda8] sm:$0xff]
        %v753 = vld [vmem:[%s225 + $0xdb0] sm:$0xff]
        %v754 = vld [vmem:[%s225 + $0xdb8] sm:$0xff]
        %v755 = vld [vmem:[%s225 + $0xdc0] sm:$0xff]
        %v756 = vld [vmem:[%s225 + $0xdc8] sm:$0xff]
        %v757 = vld [vmem:[%s225 + $0xdd0] sm:$0xff]
        %v758 = vld [vmem:[%s225 + $0xdd8] sm:$0xff]
        %v759 = vld [vmem:[%s225 + $0xde0] sm:$0xff]
        %v760 = vld [vmem:[%s225 + $0xde8] sm:$0xff]
        %v761 = vld [vmem:[%s225 + $0xdf0] sm:$0xff]
        %v762 = vld [vmem:[%s225 + $0xdf8] sm:$0xff]
        %v763 = vld [vmem:[%s225 + $0xe00] sm:$0xff]
        %v764 = vld [vmem:[%s225 + $0xe08] sm:$0xff]
        %v765 = vld [vmem:[%s225 + $0xe10] sm:$0xff]
        %v766 = vld [vmem:[%s225 + $0xe18] sm:$0xff]
        %v767 = vld [vmem:[%s225 + $0xe20] sm:$0xff]
        %v768 = vld [vmem:[%s225 + $0xe28] sm:$0xff]
        %v769 = vld [vmem:[%s225 + $0xe30] sm:$0xff]
        %v770 = vld [vmem:[%s225 + $0xe38] sm:$0xff]
        %v771 = vld [vmem:[%s225 + $0xe40] sm:$0xff]
        %v772 = vld [vmem:[%s225 + $0xe48] sm:$0xff]
        %v773 = vld [vmem:[%s225 + $0xe50] sm:$0xff]
        %v774 = vld [vmem:[%s225 + $0xe58] sm:$0xff]
        %v775 = vld [vmem:[%s225 + $0xe60] sm:$0xff]
        %v776 = vld [vmem:[%s225 + $0xe68] sm:$0xff]
        %v777 = vld [vmem:[%s225 + $0xe70] sm:$0xff]
        %v778 = vld [vmem:[%s225 + $0xe78] sm:$0xff]
        %v779 = vld [vmem:[%s225 + $0xe80] sm:$0xff]
        %v780 = vld [vmem:[%s225 + $0xe88] sm:$0xff]
        %v781 = vld [vmem:[%s225 + $0xe90] sm:$0xff]
        %v782 = vld [vmem:[%s225 + $0xe98] sm:$0xff]
        %v783 = vld [vmem:[%s225 + $0xea0] sm:$0xff]
        %v784 = vld [vmem:[%s225 + $0xea8] sm:$0xff]
        %v785 = vld [vmem:[%s225 + $0xeb0] sm:$0xff]
        %v786 = vld [vmem:[%s225 + $0xeb8] sm:$0xff]
        %v787 = vld [vmem:[%s225 + $0xec0] sm:$0xff]
        %v788 = vld [vmem:[%s225 + $0xec8] sm:$0xff]
        %v789 = vld [vmem:[%s225 + $0xed0] sm:$0xff]
        %v790 = vld [vmem:[%s225 + $0xed8] sm:$0xff]
        %v791 = vld [vmem:[%s225 + $0xee0] sm:$0xff]
        %v792 = vld [vmem:[%s225 + $0xee8] sm:$0xff]
        %v793 = vld [vmem:[%s225 + $0xef0] sm:$0xff]
        %v794 = vld [vmem:[%s225 + $0xef8] sm:$0xff]
        %v795 = vld [vmem:[%s225 + $0xf00] sm:$0xff]
        %v796 = vld [vmem:[%s225 + $0xf08] sm:$0xff]
        %v797 = vld [vmem:[%s225 + $0xf10] sm:$0xff]
        %v798 = vld [vmem:[%s225 + $0xf18] sm:$0xff]
        %v799 = vld [vmem:[%s225 + $0xf20] sm:$0xff]
        %v800 = vld [vmem:[%s225 + $0xf28] sm:$0xff]
        %v801 = vld [vmem:[%s225 + $0xf30] sm:$0xff]
        %v802 = vld [vmem:[%s225 + $0xf38] sm:$0xff]
        %v803 = vld [vmem:[%s225 + $0xf40] sm:$0xff]
        %v804 = vld [vmem:[%s225 + $0xf48] sm:$0xff]
        %v805 = vld [vmem:[%s225 + $0xf50] sm:$0xff]
        %v806 = vld [vmem:[%s225 + $0xf58] sm:$0xff]
        %v807 = vld [vmem:[%s225 + $0xf60] sm:$0xff]
        %v808 = vld [vmem:[%s225 + $0xf68] sm:$0xff]
        %v809 = vld [vmem:[%s225 + $0xf70] sm:$0xff]
        %v810 = vld [vmem:[%s225 + $0xf78] sm:$0xff]
        %v811 = vld [vmem:[%s225 + $0xf80] sm:$0xff]
        %v812 = vld [vmem:[%s225 + $0xf88] sm:$0xff]
        %v813 = vld [vmem:[%s225 + $0xf90] sm:$0xff]
        %v814 = vld [vmem:[%s225 + $0xf98] sm:$0xff]
        %v815 = vld [vmem:[%s225 + $0xfa0] sm:$0xff]
        %v816 = vld [vmem:[%s225 + $0xfa8] sm:$0xff]
        %v817 = vld [vmem:[%s225 + $0xfb0] sm:$0xff]
        %v818 = vld [vmem:[%s225 + $0xfb8] sm:$0xff]
        %v819 = vld [vmem:[%s225 + $0xfc0] sm:$0xff]
        %v820 = vld [vmem:[%s225 + $0xfc8] sm:$0xff]
        %v821 = vld [vmem:[%s225 + $0xfd0] sm:$0xff]
        %v822 = vld [vmem:[%s225 + $0xfd8] sm:$0xff]
        %v823 = vld [vmem:[%s225 + $0xfe0] sm:$0xff]
        %v824 = vld [vmem:[%s225 + $0xfe8] sm:$0xff]
        %v825 = vld [vmem:[%s225 + $0xff0] sm:$0xff]
        %v826 = vld [vmem:[%s225 + $0xff8] sm:$0xff]
        %v827 = vld [vmem:[%s234] sm:$0xf]
        %v829 = vlaneseq
        %v830 = vshrl.u32 %v829, 7
        %v831 = vsub.s32 0, %v830
        %v832 = vrot.slane %v827, %v831
        %v833 = vlaneseq
        %v834 = vshrl.u32 %v833, 7
        %v835 = vsub.s32 1, %v834
        %v836 = vrot.slane %v827, %v835
        %v837 = vlaneseq
        %v838 = vshrl.u32 %v837, 7
        %v839 = vsub.s32 2, %v838
        %v840 = vrot.slane %v827, %v839
        %v841 = vlaneseq
        %v842 = vshrl.u32 %v841, 7
        %v843 = vsub.s32 3, %v842
        %v844 = vrot.slane %v827, %v843
        %v1361 = vunpack.c.l.b16 %v315
        %v1362 = vunpack.c.h.b16 %v315
        %v1363 = vunpack.c.l.b16 %v316
        %v1364 = vunpack.c.h.b16 %v316
        %v1365 = vunpack.c.l.b16 %v317
        %v1366 = vunpack.c.h.b16 %v317
        %v1367 = vunpack.c.l.b16 %v318
        %v1368 = vunpack.c.h.b16 %v318
        %v1369 = vunpack.c.l.b16 %v319
        %v1370 = vunpack.c.h.b16 %v319
        %v1371 = vunpack.c.l.b16 %v320
        %v1372 = vunpack.c.h.b16 %v320
        %v1373 = vunpack.c.l.b16 %v321
        %v1374 = vunpack.c.h.b16 %v321
        %v1375 = vunpack.c.l.b16 %v322
        %v1376 = vunpack.c.h.b16 %v322
        %v1377 = vunpack.c.l.b16 %v323
        %v1378 = vunpack.c.h.b16 %v323
        %v1379 = vunpack.c.l.b16 %v324
        %v1380 = vunpack.c.h.b16 %v324
        %v1381 = vunpack.c.l.b16 %v325
        %v1382 = vunpack.c.h.b16 %v325
        %v1383 = vunpack.c.l.b16 %v326
        %v1384 = vunpack.c.h.b16 %v326
        %v1385 = vunpack.c.l.b16 %v327
        %v1386 = vunpack.c.h.b16 %v327
        %v1387 = vunpack.c.l.b16 %v328
        %v1388 = vunpack.c.h.b16 %v328
        %v1389 = vunpack.c.l.b16 %v329
        %v1390 = vunpack.c.h.b16 %v329
        %v1391 = vunpack.c.l.b16 %v330
        %v1392 = vunpack.c.h.b16 %v330
        %v1393 = vunpack.c.l.b16 %v331
        %v1394 = vunpack.c.h.b16 %v331
        %v1395 = vunpack.c.l.b16 %v332
        %v1396 = vunpack.c.h.b16 %v332
        %v1397 = vunpack.c.l.b16 %v333
        %v1398 = vunpack.c.h.b16 %v333
        %v1399 = vunpack.c.l.b16 %v334
        %v1400 = vunpack.c.h.b16 %v334
        %v1401 = vunpack.c.l.b16 %v335
        %v1402 = vunpack.c.h.b16 %v335
        %v1403 = vunpack.c.l.b16 %v336
        %v1404 = vunpack.c.h.b16 %v336
        %v1405 = vunpack.c.l.b16 %v337
        %v1406 = vunpack.c.h.b16 %v337
        %v1407 = vunpack.c.l.b16 %v338
        %v1408 = vunpack.c.h.b16 %v338
        %v1409 = vunpack.c.l.b16 %v339
        %v1410 = vunpack.c.h.b16 %v339
        %v1411 = vunpack.c.l.b16 %v340
        %v1412 = vunpack.c.h.b16 %v340
        %v1413 = vunpack.c.l.b16 %v341
        %v1414 = vunpack.c.h.b16 %v341
        %v1415 = vunpack.c.l.b16 %v342
        %v1416 = vunpack.c.h.b16 %v342
        %v1417 = vunpack.c.l.b16 %v343
        %v1418 = vunpack.c.h.b16 %v343
        %v1419 = vunpack.c.l.b16 %v344
        %v1420 = vunpack.c.h.b16 %v344
        %v1421 = vunpack.c.l.b16 %v345
        %v1422 = vunpack.c.h.b16 %v345
        %v1423 = vunpack.c.l.b16 %v346
        %v1424 = vunpack.c.h.b16 %v346
        %v1425 = vunpack.c.l.b16 %v347
        %v1426 = vunpack.c.h.b16 %v347
        %v1427 = vunpack.c.l.b16 %v348
        %v1428 = vunpack.c.h.b16 %v348
        %v1429 = vunpack.c.l.b16 %v349
        %v1430 = vunpack.c.h.b16 %v349
        %v1431 = vunpack.c.l.b16 %v350
        %v1432 = vunpack.c.h.b16 %v350
        %v1433 = vunpack.c.l.b16 %v351
        %v1434 = vunpack.c.h.b16 %v351
        %v1435 = vunpack.c.l.b16 %v352
        %v1436 = vunpack.c.h.b16 %v352
        %v1437 = vunpack.c.l.b16 %v353
        %v1438 = vunpack.c.h.b16 %v353
        %v1439 = vunpack.c.l.b16 %v354
        %v1440 = vunpack.c.h.b16 %v354
        %v1441 = vunpack.c.l.b16 %v355
        %v1442 = vunpack.c.h.b16 %v355
        %v1443 = vunpack.c.l.b16 %v356
        %v1444 = vunpack.c.h.b16 %v356
        %v1445 = vunpack.c.l.b16 %v357
        %v1446 = vunpack.c.h.b16 %v357
        %v1447 = vunpack.c.l.b16 %v358
        %v1448 = vunpack.c.h.b16 %v358
        %v1449 = vunpack.c.l.b16 %v359
        %v1450 = vunpack.c.h.b16 %v359
        %v1451 = vunpack.c.l.b16 %v360
        %v1452 = vunpack.c.h.b16 %v360
        %v1453 = vunpack.c.l.b16 %v361
        %v1454 = vunpack.c.h.b16 %v361
        %v1455 = vunpack.c.l.b16 %v362
        %v1456 = vunpack.c.h.b16 %v362
        %v1457 = vunpack.c.l.b16 %v363
        %v1458 = vunpack.c.h.b16 %v363
        %v1459 = vunpack.c.l.b16 %v364
        %v1460 = vunpack.c.h.b16 %v364
        %v1461 = vunpack.c.l.b16 %v365
        %v1462 = vunpack.c.h.b16 %v365
        %v1463 = vunpack.c.l.b16 %v366
        %v1464 = vunpack.c.h.b16 %v366
        %v1465 = vunpack.c.l.b16 %v367
        %v1466 = vunpack.c.h.b16 %v367
        %v1467 = vunpack.c.l.b16 %v368
        %v1468 = vunpack.c.h.b16 %v368
        %v1469 = vunpack.c.l.b16 %v369
        %v1470 = vunpack.c.h.b16 %v369
        %v1471 = vunpack.c.l.b16 %v370
        %v1472 = vunpack.c.h.b16 %v370
        %v1473 = vunpack.c.l.b16 %v371
        %v1474 = vunpack.c.h.b16 %v371
        %v1475 = vunpack.c.l.b16 %v372
        %v1476 = vunpack.c.h.b16 %v372
        %v1477 = vunpack.c.l.b16 %v373
        %v1478 = vunpack.c.h.b16 %v373
        %v1479 = vunpack.c.l.b16 %v374
        %v1480 = vunpack.c.h.b16 %v374
        %v1481 = vunpack.c.l.b16 %v375
        %v1482 = vunpack.c.h.b16 %v375
        %v1483 = vunpack.c.l.b16 %v376
        %v1484 = vunpack.c.h.b16 %v376
        %v1485 = vunpack.c.l.b16 %v377
        %v1486 = vunpack.c.h.b16 %v377
        %v1487 = vunpack.c.l.b16 %v378
        %v1488 = vunpack.c.h.b16 %v378
        %v1489 = vunpack.c.l.b16 %v379
        %v1490 = vunpack.c.h.b16 %v379
        %v1491 = vunpack.c.l.b16 %v380
        %v1492 = vunpack.c.h.b16 %v380
        %v1493 = vunpack.c.l.b16 %v381
        %v1494 = vunpack.c.h.b16 %v381
        %v1495 = vunpack.c.l.b16 %v382
        %v1496 = vunpack.c.h.b16 %v382
        %v1497 = vunpack.c.l.b16 %v383
        %v1498 = vunpack.c.h.b16 %v383
        %v1499 = vunpack.c.l.b16 %v384
        %v1500 = vunpack.c.h.b16 %v384
        %v1501 = vunpack.c.l.b16 %v385
        %v1502 = vunpack.c.h.b16 %v385
        %v1503 = vunpack.c.l.b16 %v386
        %v1504 = vunpack.c.h.b16 %v386
        %v1505 = vunpack.c.l.b16 %v387
        %v1506 = vunpack.c.h.b16 %v387
        %v1507 = vunpack.c.l.b16 %v388
        %v1508 = vunpack.c.h.b16 %v388
        %v1509 = vunpack.c.l.b16 %v389
        %v1510 = vunpack.c.h.b16 %v389
        %v1511 = vunpack.c.l.b16 %v390
        %v1512 = vunpack.c.h.b16 %v390
        %v1513 = vunpack.c.l.b16 %v391
        %v1514 = vunpack.c.h.b16 %v391
        %v1515 = vunpack.c.l.b16 %v392
        %v1516 = vunpack.c.h.b16 %v392
        %v1517 = vunpack.c.l.b16 %v393
        %v1518 = vunpack.c.h.b16 %v393
        %v1519 = vunpack.c.l.b16 %v394
        %v1520 = vunpack.c.h.b16 %v394
        %v1521 = vunpack.c.l.b16 %v395
        %v1522 = vunpack.c.h.b16 %v395
        %v1523 = vunpack.c.l.b16 %v396
        %v1524 = vunpack.c.h.b16 %v396
        %v1525 = vunpack.c.l.b16 %v397
        %v1526 = vunpack.c.h.b16 %v397
        %v1527 = vunpack.c.l.b16 %v398
        %v1528 = vunpack.c.h.b16 %v398
        %v1529 = vunpack.c.l.b16 %v399
        %v1530 = vunpack.c.h.b16 %v399
        %v1531 = vunpack.c.l.b16 %v400
        %v1532 = vunpack.c.h.b16 %v400
        %v1533 = vunpack.c.l.b16 %v401
        %v1534 = vunpack.c.h.b16 %v401
        %v1535 = vunpack.c.l.b16 %v402
        %v1536 = vunpack.c.h.b16 %v402
        %v1537 = vunpack.c.l.b16 %v403
        %v1538 = vunpack.c.h.b16 %v403
        %v1539 = vunpack.c.l.b16 %v404
        %v1540 = vunpack.c.h.b16 %v404
        %v1541 = vunpack.c.l.b16 %v405
        %v1542 = vunpack.c.h.b16 %v405
        %v1543 = vunpack.c.l.b16 %v406
        %v1544 = vunpack.c.h.b16 %v406
        %v1545 = vunpack.c.l.b16 %v407
        %v1546 = vunpack.c.h.b16 %v407
        %v1547 = vunpack.c.l.b16 %v408
        %v1548 = vunpack.c.h.b16 %v408
        %v1549 = vunpack.c.l.b16 %v409
        %v1550 = vunpack.c.h.b16 %v409
        %v1551 = vunpack.c.l.b16 %v410
        %v1552 = vunpack.c.h.b16 %v410
        %v1553 = vunpack.c.l.b16 %v411
        %v1554 = vunpack.c.h.b16 %v411
        %v1555 = vunpack.c.l.b16 %v412
        %v1556 = vunpack.c.h.b16 %v412
        %v1557 = vunpack.c.l.b16 %v413
        %v1558 = vunpack.c.h.b16 %v413
        %v1559 = vunpack.c.l.b16 %v414
        %v1560 = vunpack.c.h.b16 %v414
        %v1561 = vunpack.c.l.b16 %v415
        %v1562 = vunpack.c.h.b16 %v415
        %v1563 = vunpack.c.l.b16 %v416
        %v1564 = vunpack.c.h.b16 %v416
        %v1565 = vunpack.c.l.b16 %v417
        %v1566 = vunpack.c.h.b16 %v417
        %v1567 = vunpack.c.l.b16 %v418
        %v1568 = vunpack.c.h.b16 %v418
        %v1569 = vunpack.c.l.b16 %v419
        %v1570 = vunpack.c.h.b16 %v419
        %v1571 = vunpack.c.l.b16 %v420
        %v1572 = vunpack.c.h.b16 %v420
        %v1573 = vunpack.c.l.b16 %v421
        %v1574 = vunpack.c.h.b16 %v421
        %v1575 = vunpack.c.l.b16 %v422
        %v1576 = vunpack.c.h.b16 %v422
        %v1577 = vunpack.c.l.b16 %v423
        %v1578 = vunpack.c.h.b16 %v423
        %v1579 = vunpack.c.l.b16 %v424
        %v1580 = vunpack.c.h.b16 %v424
        %v1581 = vunpack.c.l.b16 %v425
        %v1582 = vunpack.c.h.b16 %v425
        %v1583 = vunpack.c.l.b16 %v426
        %v1584 = vunpack.c.h.b16 %v426
        %v1585 = vunpack.c.l.b16 %v427
        %v1586 = vunpack.c.h.b16 %v427
        %v1587 = vunpack.c.l.b16 %v428
        %v1588 = vunpack.c.h.b16 %v428
        %v1589 = vunpack.c.l.b16 %v429
        %v1590 = vunpack.c.h.b16 %v429
        %v1591 = vunpack.c.l.b16 %v430
        %v1592 = vunpack.c.h.b16 %v430
        %v1593 = vunpack.c.l.b16 %v431
        %v1594 = vunpack.c.h.b16 %v431
        %v1595 = vunpack.c.l.b16 %v432
        %v1596 = vunpack.c.h.b16 %v432
        %v1597 = vunpack.c.l.b16 %v433
        %v1598 = vunpack.c.h.b16 %v433
        %v1599 = vunpack.c.l.b16 %v434
        %v1600 = vunpack.c.h.b16 %v434
        %v1601 = vunpack.c.l.b16 %v435
        %v1602 = vunpack.c.h.b16 %v435
        %v1603 = vunpack.c.l.b16 %v436
        %v1604 = vunpack.c.h.b16 %v436
        %v1605 = vunpack.c.l.b16 %v437
        %v1606 = vunpack.c.h.b16 %v437
        %v1607 = vunpack.c.l.b16 %v438
        %v1608 = vunpack.c.h.b16 %v438
        %v1609 = vunpack.c.l.b16 %v439
        %v1610 = vunpack.c.h.b16 %v439
        %v1611 = vunpack.c.l.b16 %v440
        %v1612 = vunpack.c.h.b16 %v440
        %v1613 = vunpack.c.l.b16 %v441
        %v1614 = vunpack.c.h.b16 %v441
        %v1615 = vunpack.c.l.b16 %v442
        %v1616 = vunpack.c.h.b16 %v442
        %v1617 = vunpack.c.l.b16 %v443
        %v1618 = vunpack.c.h.b16 %v443
        %v1619 = vunpack.c.l.b16 %v444
        %v1620 = vunpack.c.h.b16 %v444
        %v1621 = vunpack.c.l.b16 %v445
        %v1622 = vunpack.c.h.b16 %v445
        %v1623 = vunpack.c.l.b16 %v446
        %v1624 = vunpack.c.h.b16 %v446
        %v1625 = vunpack.c.l.b16 %v447
        %v1626 = vunpack.c.h.b16 %v447
        %v1627 = vunpack.c.l.b16 %v448
        %v1628 = vunpack.c.h.b16 %v448
        %v1629 = vunpack.c.l.b16 %v449
        %v1630 = vunpack.c.h.b16 %v449
        %v1631 = vunpack.c.l.b16 %v450
        %v1632 = vunpack.c.h.b16 %v450
        %v1633 = vunpack.c.l.b16 %v451
        %v1634 = vunpack.c.h.b16 %v451
        %v1635 = vunpack.c.l.b16 %v452
        %v1636 = vunpack.c.h.b16 %v452
        %v1637 = vunpack.c.l.b16 %v453
        %v1638 = vunpack.c.h.b16 %v453
        %v1639 = vunpack.c.l.b16 %v454
        %v1640 = vunpack.c.h.b16 %v454
        %v1641 = vunpack.c.l.b16 %v455
        %v1642 = vunpack.c.h.b16 %v455
        %v1643 = vunpack.c.l.b16 %v456
        %v1644 = vunpack.c.h.b16 %v456
        %v1645 = vunpack.c.l.b16 %v457
        %v1646 = vunpack.c.h.b16 %v457
        %v1647 = vunpack.c.l.b16 %v458
        %v1648 = vunpack.c.h.b16 %v458
        %v1649 = vunpack.c.l.b16 %v459
        %v1650 = vunpack.c.h.b16 %v459
        %v1651 = vunpack.c.l.b16 %v460
        %v1652 = vunpack.c.h.b16 %v460
        %v1653 = vunpack.c.l.b16 %v461
        %v1654 = vunpack.c.h.b16 %v461
        %v1655 = vunpack.c.l.b16 %v462
        %v1656 = vunpack.c.h.b16 %v462
        %v1657 = vunpack.c.l.b16 %v463
        %v1658 = vunpack.c.h.b16 %v463
        %v1659 = vunpack.c.l.b16 %v464
        %v1660 = vunpack.c.h.b16 %v464
        %v1661 = vunpack.c.l.b16 %v465
        %v1662 = vunpack.c.h.b16 %v465
        %v1663 = vunpack.c.l.b16 %v466
        %v1664 = vunpack.c.h.b16 %v466
        %v1665 = vunpack.c.l.b16 %v467
        %v1666 = vunpack.c.h.b16 %v467
        %v1667 = vunpack.c.l.b16 %v468
        %v1668 = vunpack.c.h.b16 %v468
        %v1669 = vunpack.c.l.b16 %v469
        %v1670 = vunpack.c.h.b16 %v469
        %v1671 = vunpack.c.l.b16 %v470
        %v1672 = vunpack.c.h.b16 %v470
        %v1673 = vunpack.c.l.b16 %v471
        %v1674 = vunpack.c.h.b16 %v471
        %v1675 = vunpack.c.l.b16 %v472
        %v1676 = vunpack.c.h.b16 %v472
        %v1677 = vunpack.c.l.b16 %v473
        %v1678 = vunpack.c.h.b16 %v473
        %v1679 = vunpack.c.l.b16 %v474
        %v1680 = vunpack.c.h.b16 %v474
        %v1681 = vunpack.c.l.b16 %v475
        %v1682 = vunpack.c.h.b16 %v475
        %v1683 = vunpack.c.l.b16 %v476
        %v1684 = vunpack.c.h.b16 %v476
        %v1685 = vunpack.c.l.b16 %v477
        %v1686 = vunpack.c.h.b16 %v477
        %v1687 = vunpack.c.l.b16 %v478
        %v1688 = vunpack.c.h.b16 %v478
        %v1689 = vunpack.c.l.b16 %v479
        %v1690 = vunpack.c.h.b16 %v479
        %v1691 = vunpack.c.l.b16 %v480
        %v1692 = vunpack.c.h.b16 %v480
        %v1693 = vunpack.c.l.b16 %v481
        %v1694 = vunpack.c.h.b16 %v481
        %v1695 = vunpack.c.l.b16 %v482
        %v1696 = vunpack.c.h.b16 %v482
        %v1697 = vunpack.c.l.b16 %v483
        %v1698 = vunpack.c.h.b16 %v483
        %v1699 = vunpack.c.l.b16 %v484
        %v1700 = vunpack.c.h.b16 %v484
        %v1701 = vunpack.c.l.b16 %v485
        %v1702 = vunpack.c.h.b16 %v485
        %v1703 = vunpack.c.l.b16 %v486
        %v1704 = vunpack.c.h.b16 %v486
        %v1705 = vunpack.c.l.b16 %v487
        %v1706 = vunpack.c.h.b16 %v487
        %v1707 = vunpack.c.l.b16 %v488
        %v1708 = vunpack.c.h.b16 %v488
        %v1709 = vunpack.c.l.b16 %v489
        %v1710 = vunpack.c.h.b16 %v489
        %v1711 = vunpack.c.l.b16 %v490
        %v1712 = vunpack.c.h.b16 %v490
        %v1713 = vunpack.c.l.b16 %v491
        %v1714 = vunpack.c.h.b16 %v491
        %v1715 = vunpack.c.l.b16 %v492
        %v1716 = vunpack.c.h.b16 %v492
        %v1717 = vunpack.c.l.b16 %v493
        %v1718 = vunpack.c.h.b16 %v493
        %v1719 = vunpack.c.l.b16 %v494
        %v1720 = vunpack.c.h.b16 %v494
        %v1721 = vunpack.c.l.b16 %v495
        %v1722 = vunpack.c.h.b16 %v495
        %v1723 = vunpack.c.l.b16 %v496
        %v1724 = vunpack.c.h.b16 %v496
        %v1725 = vunpack.c.l.b16 %v497
        %v1726 = vunpack.c.h.b16 %v497
        %v1727 = vunpack.c.l.b16 %v498
        %v1728 = vunpack.c.h.b16 %v498
        %v1729 = vunpack.c.l.b16 %v499
        %v1730 = vunpack.c.h.b16 %v499
        %v1731 = vunpack.c.l.b16 %v500
        %v1732 = vunpack.c.h.b16 %v500
        %v1733 = vunpack.c.l.b16 %v501
        %v1734 = vunpack.c.h.b16 %v501
        %v1735 = vunpack.c.l.b16 %v502
        %v1736 = vunpack.c.h.b16 %v502
        %v1737 = vunpack.c.l.b16 %v503
        %v1738 = vunpack.c.h.b16 %v503
        %v1739 = vunpack.c.l.b16 %v504
        %v1740 = vunpack.c.h.b16 %v504
        %v1741 = vunpack.c.l.b16 %v505
        %v1742 = vunpack.c.h.b16 %v505
        %v1743 = vunpack.c.l.b16 %v506
        %v1744 = vunpack.c.h.b16 %v506
        %v1745 = vunpack.c.l.b16 %v507
        %v1746 = vunpack.c.h.b16 %v507
        %v1747 = vunpack.c.l.b16 %v508
        %v1748 = vunpack.c.h.b16 %v508
        %v1749 = vunpack.c.l.b16 %v509
        %v1750 = vunpack.c.h.b16 %v509
        %v1751 = vunpack.c.l.b16 %v510
        %v1752 = vunpack.c.h.b16 %v510
        %v1753 = vunpack.c.l.b16 %v511
        %v1754 = vunpack.c.h.b16 %v511
        %v1755 = vunpack.c.l.b16 %v512
        %v1756 = vunpack.c.h.b16 %v512
        %v1757 = vunpack.c.l.b16 %v513
        %v1758 = vunpack.c.h.b16 %v513
        %v1759 = vunpack.c.l.b16 %v514
        %v1760 = vunpack.c.h.b16 %v514
        %v1761 = vunpack.c.l.b16 %v515
        %v1762 = vunpack.c.h.b16 %v515
        %v1763 = vunpack.c.l.b16 %v516
        %v1764 = vunpack.c.h.b16 %v516
        %v1765 = vunpack.c.l.b16 %v517
        %v1766 = vunpack.c.h.b16 %v517
        %v1767 = vunpack.c.l.b16 %v518
        %v1768 = vunpack.c.h.b16 %v518
        %v1769 = vunpack.c.l.b16 %v519
        %v1770 = vunpack.c.h.b16 %v519
        %v1771 = vunpack.c.l.b16 %v520
        %v1772 = vunpack.c.h.b16 %v520
        %v1773 = vunpack.c.l.b16 %v521
        %v1774 = vunpack.c.h.b16 %v521
        %v1775 = vunpack.c.l.b16 %v522
        %v1776 = vunpack.c.h.b16 %v522
        %v1777 = vunpack.c.l.b16 %v523
        %v1778 = vunpack.c.h.b16 %v523
        %v1779 = vunpack.c.l.b16 %v524
        %v1780 = vunpack.c.h.b16 %v524
        %v1781 = vunpack.c.l.b16 %v525
        %v1782 = vunpack.c.h.b16 %v525
        %v1783 = vunpack.c.l.b16 %v526
        %v1784 = vunpack.c.h.b16 %v526
        %v1785 = vunpack.c.l.b16 %v527
        %v1786 = vunpack.c.h.b16 %v527
        %v1787 = vunpack.c.l.b16 %v528
        %v1788 = vunpack.c.h.b16 %v528
        %v1789 = vunpack.c.l.b16 %v529
        %v1790 = vunpack.c.h.b16 %v529
        %v1791 = vunpack.c.l.b16 %v530
        %v1792 = vunpack.c.h.b16 %v530
        %v1793 = vunpack.c.l.b16 %v531
        %v1794 = vunpack.c.h.b16 %v531
        %v1795 = vunpack.c.l.b16 %v532
        %v1796 = vunpack.c.h.b16 %v532
        %v1797 = vunpack.c.l.b16 %v533
        %v1798 = vunpack.c.h.b16 %v533
        %v1799 = vunpack.c.l.b16 %v534
        %v1800 = vunpack.c.h.b16 %v534
        %v1801 = vunpack.c.l.b16 %v535
        %v1802 = vunpack.c.h.b16 %v535
        %v1803 = vunpack.c.l.b16 %v536
        %v1804 = vunpack.c.h.b16 %v536
        %v1805 = vunpack.c.l.b16 %v537
        %v1806 = vunpack.c.h.b16 %v537
        %v1807 = vunpack.c.l.b16 %v538
        %v1808 = vunpack.c.h.b16 %v538
        %v1809 = vunpack.c.l.b16 %v539
        %v1810 = vunpack.c.h.b16 %v539
        %v1811 = vunpack.c.l.b16 %v540
        %v1812 = vunpack.c.h.b16 %v540
        %v1813 = vunpack.c.l.b16 %v541
        %v1814 = vunpack.c.h.b16 %v541
        %v1815 = vunpack.c.l.b16 %v542
        %v1816 = vunpack.c.h.b16 %v542
        %v1817 = vunpack.c.l.b16 %v543
        %v1818 = vunpack.c.h.b16 %v543
        %v1819 = vunpack.c.l.b16 %v544
        %v1820 = vunpack.c.h.b16 %v544
        %v1821 = vunpack.c.l.b16 %v545
        %v1822 = vunpack.c.h.b16 %v545
        %v1823 = vunpack.c.l.b16 %v546
        %v1824 = vunpack.c.h.b16 %v546
        %v1825 = vunpack.c.l.b16 %v547
        %v1826 = vunpack.c.h.b16 %v547
        %v1827 = vunpack.c.l.b16 %v548
        %v1828 = vunpack.c.h.b16 %v548
        %v1829 = vunpack.c.l.b16 %v549
        %v1830 = vunpack.c.h.b16 %v549
        %v1831 = vunpack.c.l.b16 %v550
        %v1832 = vunpack.c.h.b16 %v550
        %v1833 = vunpack.c.l.b16 %v551
        %v1834 = vunpack.c.h.b16 %v551
        %v1835 = vunpack.c.l.b16 %v552
        %v1836 = vunpack.c.h.b16 %v552
        %v1837 = vunpack.c.l.b16 %v553
        %v1838 = vunpack.c.h.b16 %v553
        %v1839 = vunpack.c.l.b16 %v554
        %v1840 = vunpack.c.h.b16 %v554
        %v1841 = vunpack.c.l.b16 %v555
        %v1842 = vunpack.c.h.b16 %v555
        %v1843 = vunpack.c.l.b16 %v556
        %v1844 = vunpack.c.h.b16 %v556
        %v1845 = vunpack.c.l.b16 %v557
        %v1846 = vunpack.c.h.b16 %v557
        %v1847 = vunpack.c.l.b16 %v558
        %v1848 = vunpack.c.h.b16 %v558
        %v1849 = vunpack.c.l.b16 %v559
        %v1850 = vunpack.c.h.b16 %v559
        %v1851 = vunpack.c.l.b16 %v560
        %v1852 = vunpack.c.h.b16 %v560
        %v1853 = vunpack.c.l.b16 %v561
        %v1854 = vunpack.c.h.b16 %v561
        %v1855 = vunpack.c.l.b16 %v562
        %v1856 = vunpack.c.h.b16 %v562
        %v1857 = vunpack.c.l.b16 %v563
        %v1858 = vunpack.c.h.b16 %v563
        %v1859 = vunpack.c.l.b16 %v564
        %v1860 = vunpack.c.h.b16 %v564
        %v1861 = vunpack.c.l.b16 %v565
        %v1862 = vunpack.c.h.b16 %v565
        %v1863 = vunpack.c.l.b16 %v566
        %v1864 = vunpack.c.h.b16 %v566
        %v1865 = vunpack.c.l.b16 %v567
        %v1866 = vunpack.c.h.b16 %v567
        %v1867 = vunpack.c.l.b16 %v568
        %v1868 = vunpack.c.h.b16 %v568
        %v1869 = vunpack.c.l.b16 %v569
        %v1870 = vunpack.c.h.b16 %v569
        %v1871 = vunpack.c.l.b16 %v570
        %v1872 = vunpack.c.h.b16 %v570
        %v1873 = vunpack.c.l.b16 %v571
        %v1874 = vunpack.c.h.b16 %v571
        %v1875 = vunpack.c.l.b16 %v572
        %v1876 = vunpack.c.h.b16 %v572
        %v1877 = vunpack.c.l.b16 %v573
        %v1878 = vunpack.c.h.b16 %v573
        %v1879 = vunpack.c.l.b16 %v574
        %v1880 = vunpack.c.h.b16 %v574
        %v1881 = vunpack.c.l.b16 %v575
        %v1882 = vunpack.c.h.b16 %v575
        %v1883 = vunpack.c.l.b16 %v576
        %v1884 = vunpack.c.h.b16 %v576
        %v1885 = vunpack.c.l.b16 %v577
        %v1886 = vunpack.c.h.b16 %v577
        %v1887 = vunpack.c.l.b16 %v578
        %v1888 = vunpack.c.h.b16 %v578
        %v1889 = vunpack.c.l.b16 %v579
        %v1890 = vunpack.c.h.b16 %v579
        %v1891 = vunpack.c.l.b16 %v580
        %v1892 = vunpack.c.h.b16 %v580
        %v1893 = vunpack.c.l.b16 %v581
        %v1894 = vunpack.c.h.b16 %v581
        %v1895 = vunpack.c.l.b16 %v582
        %v1896 = vunpack.c.h.b16 %v582
        %v1897 = vunpack.c.l.b16 %v583
        %v1898 = vunpack.c.h.b16 %v583
        %v1899 = vunpack.c.l.b16 %v584
        %v1900 = vunpack.c.h.b16 %v584
        %v1901 = vunpack.c.l.b16 %v585
        %v1902 = vunpack.c.h.b16 %v585
        %v1903 = vunpack.c.l.b16 %v586
        %v1904 = vunpack.c.h.b16 %v586
        %v1905 = vunpack.c.l.b16 %v587
        %v1906 = vunpack.c.h.b16 %v587
        %v1907 = vunpack.c.l.b16 %v588
        %v1908 = vunpack.c.h.b16 %v588
        %v1909 = vunpack.c.l.b16 %v589
        %v1910 = vunpack.c.h.b16 %v589
        %v1911 = vunpack.c.l.b16 %v590
        %v1912 = vunpack.c.h.b16 %v590
        %v1913 = vunpack.c.l.b16 %v591
        %v1914 = vunpack.c.h.b16 %v591
        %v1915 = vunpack.c.l.b16 %v592
        %v1916 = vunpack.c.h.b16 %v592
        %v1917 = vunpack.c.l.b16 %v593
        %v1918 = vunpack.c.h.b16 %v593
        %v1919 = vunpack.c.l.b16 %v594
        %v1920 = vunpack.c.h.b16 %v594
        %v1921 = vunpack.c.l.b16 %v595
        %v1922 = vunpack.c.h.b16 %v595
        %v1923 = vunpack.c.l.b16 %v596
        %v1924 = vunpack.c.h.b16 %v596
        %v1925 = vunpack.c.l.b16 %v597
        %v1926 = vunpack.c.h.b16 %v597
        %v1927 = vunpack.c.l.b16 %v598
        %v1928 = vunpack.c.h.b16 %v598
        %v1929 = vunpack.c.l.b16 %v599
        %v1930 = vunpack.c.h.b16 %v599
        %v1931 = vunpack.c.l.b16 %v600
        %v1932 = vunpack.c.h.b16 %v600
        %v1933 = vunpack.c.l.b16 %v601
        %v1934 = vunpack.c.h.b16 %v601
        %v1935 = vunpack.c.l.b16 %v602
        %v1936 = vunpack.c.h.b16 %v602
        %v1937 = vunpack.c.l.b16 %v603
        %v1938 = vunpack.c.h.b16 %v603
        %v1939 = vunpack.c.l.b16 %v604
        %v1940 = vunpack.c.h.b16 %v604
        %v1941 = vunpack.c.l.b16 %v605
        %v1942 = vunpack.c.h.b16 %v605
        %v1943 = vunpack.c.l.b16 %v606
        %v1944 = vunpack.c.h.b16 %v606
        %v1945 = vunpack.c.l.b16 %v607
        %v1946 = vunpack.c.h.b16 %v607
        %v1947 = vunpack.c.l.b16 %v608
        %v1948 = vunpack.c.h.b16 %v608
        %v1949 = vunpack.c.l.b16 %v609
        %v1950 = vunpack.c.h.b16 %v609
        %v1951 = vunpack.c.l.b16 %v610
        %v1952 = vunpack.c.h.b16 %v610
        %v1953 = vunpack.c.l.b16 %v611
        %v1954 = vunpack.c.h.b16 %v611
        %v1955 = vunpack.c.l.b16 %v612
        %v1956 = vunpack.c.h.b16 %v612
        %v1957 = vunpack.c.l.b16 %v613
        %v1958 = vunpack.c.h.b16 %v613
        %v1959 = vunpack.c.l.b16 %v614
        %v1960 = vunpack.c.h.b16 %v614
        %v1961 = vunpack.c.l.b16 %v615
        %v1962 = vunpack.c.h.b16 %v615
        %v1963 = vunpack.c.l.b16 %v616
        %v1964 = vunpack.c.h.b16 %v616
        %v1965 = vunpack.c.l.b16 %v617
        %v1966 = vunpack.c.h.b16 %v617
        %v1967 = vunpack.c.l.b16 %v618
        %v1968 = vunpack.c.h.b16 %v618
        %v1969 = vunpack.c.l.b16 %v619
        %v1970 = vunpack.c.h.b16 %v619
        %v1971 = vunpack.c.l.b16 %v620
        %v1972 = vunpack.c.h.b16 %v620
        %v1973 = vunpack.c.l.b16 %v621
        %v1974 = vunpack.c.h.b16 %v621
        %v1975 = vunpack.c.l.b16 %v622
        %v1976 = vunpack.c.h.b16 %v622
        %v1977 = vunpack.c.l.b16 %v623
        %v1978 = vunpack.c.h.b16 %v623
        %v1979 = vunpack.c.l.b16 %v624
        %v1980 = vunpack.c.h.b16 %v624
        %v1981 = vunpack.c.l.b16 %v625
        %v1982 = vunpack.c.h.b16 %v625
        %v1983 = vunpack.c.l.b16 %v626
        %v1984 = vunpack.c.h.b16 %v626
        %v1985 = vunpack.c.l.b16 %v627
        %v1986 = vunpack.c.h.b16 %v627
        %v1987 = vunpack.c.l.b16 %v628
        %v1988 = vunpack.c.h.b16 %v628
        %v1989 = vunpack.c.l.b16 %v629
        %v1990 = vunpack.c.h.b16 %v629
        %v1991 = vunpack.c.l.b16 %v630
        %v1992 = vunpack.c.h.b16 %v630
        %v1993 = vunpack.c.l.b16 %v631
        %v1994 = vunpack.c.h.b16 %v631
        %v1995 = vunpack.c.l.b16 %v632
        %v1996 = vunpack.c.h.b16 %v632
        %v1997 = vunpack.c.l.b16 %v633
        %v1998 = vunpack.c.h.b16 %v633
        %v1999 = vunpack.c.l.b16 %v634
        %v2000 = vunpack.c.h.b16 %v634
        %v2001 = vunpack.c.l.b16 %v635
        %v2002 = vunpack.c.h.b16 %v635
        %v2003 = vunpack.c.l.b16 %v636
        %v2004 = vunpack.c.h.b16 %v636
        %v2005 = vunpack.c.l.b16 %v637
        %v2006 = vunpack.c.h.b16 %v637
        %v2007 = vunpack.c.l.b16 %v638
        %v2008 = vunpack.c.h.b16 %v638
        %v2009 = vunpack.c.l.b16 %v639
        %v2010 = vunpack.c.h.b16 %v639
        %v2011 = vunpack.c.l.b16 %v640
        %v2012 = vunpack.c.h.b16 %v640
        %v2013 = vunpack.c.l.b16 %v641
        %v2014 = vunpack.c.h.b16 %v641
        %v2015 = vunpack.c.l.b16 %v642
        %v2016 = vunpack.c.h.b16 %v642
        %v2017 = vunpack.c.l.b16 %v643
        %v2018 = vunpack.c.h.b16 %v643
        %v2019 = vunpack.c.l.b16 %v644
        %v2020 = vunpack.c.h.b16 %v644
        %v2021 = vunpack.c.l.b16 %v645
        %v2022 = vunpack.c.h.b16 %v645
        %v2023 = vunpack.c.l.b16 %v646
        %v2024 = vunpack.c.h.b16 %v646
        %v2025 = vunpack.c.l.b16 %v647
        %v2026 = vunpack.c.h.b16 %v647
        %v2027 = vunpack.c.l.b16 %v648
        %v2028 = vunpack.c.h.b16 %v648
        %v2029 = vunpack.c.l.b16 %v649
        %v2030 = vunpack.c.h.b16 %v649
        %v2031 = vunpack.c.l.b16 %v650
        %v2032 = vunpack.c.h.b16 %v650
        %v2033 = vunpack.c.l.b16 %v651
        %v2034 = vunpack.c.h.b16 %v651
        %v2035 = vunpack.c.l.b16 %v652
        %v2036 = vunpack.c.h.b16 %v652
        %v2037 = vunpack.c.l.b16 %v653
        %v2038 = vunpack.c.h.b16 %v653
        %v2039 = vunpack.c.l.b16 %v654
        %v2040 = vunpack.c.h.b16 %v654
        %v2041 = vunpack.c.l.b16 %v655
        %v2042 = vunpack.c.h.b16 %v655
        %v2043 = vunpack.c.l.b16 %v656
        %v2044 = vunpack.c.h.b16 %v656
        %v2045 = vunpack.c.l.b16 %v657
        %v2046 = vunpack.c.h.b16 %v657
        %v2047 = vunpack.c.l.b16 %v658
        %v2048 = vunpack.c.h.b16 %v658
        %v2049 = vunpack.c.l.b16 %v659
        %v2050 = vunpack.c.h.b16 %v659
        %v2051 = vunpack.c.l.b16 %v660
        %v2052 = vunpack.c.h.b16 %v660
        %v2053 = vunpack.c.l.b16 %v661
        %v2054 = vunpack.c.h.b16 %v661
        %v2055 = vunpack.c.l.b16 %v662
        %v2056 = vunpack.c.h.b16 %v662
        %v2057 = vunpack.c.l.b16 %v663
        %v2058 = vunpack.c.h.b16 %v663
        %v2059 = vunpack.c.l.b16 %v664
        %v2060 = vunpack.c.h.b16 %v664
        %v2061 = vunpack.c.l.b16 %v665
        %v2062 = vunpack.c.h.b16 %v665
        %v2063 = vunpack.c.l.b16 %v666
        %v2064 = vunpack.c.h.b16 %v666
        %v2065 = vunpack.c.l.b16 %v667
        %v2066 = vunpack.c.h.b16 %v667
        %v2067 = vunpack.c.l.b16 %v668
        %v2068 = vunpack.c.h.b16 %v668
        %v2069 = vunpack.c.l.b16 %v669
        %v2070 = vunpack.c.h.b16 %v669
        %v2071 = vunpack.c.l.b16 %v670
        %v2072 = vunpack.c.h.b16 %v670
        %v2073 = vunpack.c.l.b16 %v671
        %v2074 = vunpack.c.h.b16 %v671
        %v2075 = vunpack.c.l.b16 %v672
        %v2076 = vunpack.c.h.b16 %v672
        %v2077 = vunpack.c.l.b16 %v673
        %v2078 = vunpack.c.h.b16 %v673
        %v2079 = vunpack.c.l.b16 %v674
        %v2080 = vunpack.c.h.b16 %v674
        %v2081 = vunpack.c.l.b16 %v675
        %v2082 = vunpack.c.h.b16 %v675
        %v2083 = vunpack.c.l.b16 %v676
        %v2084 = vunpack.c.h.b16 %v676
        %v2085 = vunpack.c.l.b16 %v677
        %v2086 = vunpack.c.h.b16 %v677
        %v2087 = vunpack.c.l.b16 %v678
        %v2088 = vunpack.c.h.b16 %v678
        %v2089 = vunpack.c.l.b16 %v679
        %v2090 = vunpack.c.h.b16 %v679
        %v2091 = vunpack.c.l.b16 %v680
        %v2092 = vunpack.c.h.b16 %v680
        %v2093 = vunpack.c.l.b16 %v681
        %v2094 = vunpack.c.h.b16 %v681
        %v2095 = vunpack.c.l.b16 %v682
        %v2096 = vunpack.c.h.b16 %v682
        %v2097 = vunpack.c.l.b16 %v683
        %v2098 = vunpack.c.h.b16 %v683
        %v2099 = vunpack.c.l.b16 %v684
        %v2100 = vunpack.c.h.b16 %v684
        %v2101 = vunpack.c.l.b16 %v685
        %v2102 = vunpack.c.h.b16 %v685
        %v2103 = vunpack.c.l.b16 %v686
        %v2104 = vunpack.c.h.b16 %v686
        %v2105 = vunpack.c.l.b16 %v687
        %v2106 = vunpack.c.h.b16 %v687
        %v2107 = vunpack.c.l.b16 %v688
        %v2108 = vunpack.c.h.b16 %v688
        %v2109 = vunpack.c.l.b16 %v689
        %v2110 = vunpack.c.h.b16 %v689
        %v2111 = vunpack.c.l.b16 %v690
        %v2112 = vunpack.c.h.b16 %v690
        %v2113 = vunpack.c.l.b16 %v691
        %v2114 = vunpack.c.h.b16 %v691
        %v2115 = vunpack.c.l.b16 %v692
        %v2116 = vunpack.c.h.b16 %v692
        %v2117 = vunpack.c.l.b16 %v693
        %v2118 = vunpack.c.h.b16 %v693
        %v2119 = vunpack.c.l.b16 %v694
        %v2120 = vunpack.c.h.b16 %v694
        %v2121 = vunpack.c.l.b16 %v695
        %v2122 = vunpack.c.h.b16 %v695
        %v2123 = vunpack.c.l.b16 %v696
        %v2124 = vunpack.c.h.b16 %v696
        %v2125 = vunpack.c.l.b16 %v697
        %v2126 = vunpack.c.h.b16 %v697
        %v2127 = vunpack.c.l.b16 %v698
        %v2128 = vunpack.c.h.b16 %v698
        %v2129 = vunpack.c.l.b16 %v699
        %v2130 = vunpack.c.h.b16 %v699
        %v2131 = vunpack.c.l.b16 %v700
        %v2132 = vunpack.c.h.b16 %v700
        %v2133 = vunpack.c.l.b16 %v701
        %v2134 = vunpack.c.h.b16 %v701
        %v2135 = vunpack.c.l.b16 %v702
        %v2136 = vunpack.c.h.b16 %v702
        %v2137 = vunpack.c.l.b16 %v703
        %v2138 = vunpack.c.h.b16 %v703
        %v2139 = vunpack.c.l.b16 %v704
        %v2140 = vunpack.c.h.b16 %v704
        %v2141 = vunpack.c.l.b16 %v705
        %v2142 = vunpack.c.h.b16 %v705
        %v2143 = vunpack.c.l.b16 %v706
        %v2144 = vunpack.c.h.b16 %v706
        %v2145 = vunpack.c.l.b16 %v707
        %v2146 = vunpack.c.h.b16 %v707
        %v2147 = vunpack.c.l.b16 %v708
        %v2148 = vunpack.c.h.b16 %v708
        %v2149 = vunpack.c.l.b16 %v709
        %v2150 = vunpack.c.h.b16 %v709
        %v2151 = vunpack.c.l.b16 %v710
        %v2152 = vunpack.c.h.b16 %v710
        %v2153 = vunpack.c.l.b16 %v711
        %v2154 = vunpack.c.h.b16 %v711
        %v2155 = vunpack.c.l.b16 %v712
        %v2156 = vunpack.c.h.b16 %v712
        %v2157 = vunpack.c.l.b16 %v713
        %v2158 = vunpack.c.h.b16 %v713
        %v2159 = vunpack.c.l.b16 %v714
        %v2160 = vunpack.c.h.b16 %v714
        %v2161 = vunpack.c.l.b16 %v715
        %v2162 = vunpack.c.h.b16 %v715
        %v2163 = vunpack.c.l.b16 %v716
        %v2164 = vunpack.c.h.b16 %v716
        %v2165 = vunpack.c.l.b16 %v717
        %v2166 = vunpack.c.h.b16 %v717
        %v2167 = vunpack.c.l.b16 %v718
        %v2168 = vunpack.c.h.b16 %v718
        %v2169 = vunpack.c.l.b16 %v719
        %v2170 = vunpack.c.h.b16 %v719
        %v2171 = vunpack.c.l.b16 %v720
        %v2172 = vunpack.c.h.b16 %v720
        %v2173 = vunpack.c.l.b16 %v721
        %v2174 = vunpack.c.h.b16 %v721
        %v2175 = vunpack.c.l.b16 %v722
        %v2176 = vunpack.c.h.b16 %v722
        %v2177 = vunpack.c.l.b16 %v723
        %v2178 = vunpack.c.h.b16 %v723
        %v2179 = vunpack.c.l.b16 %v724
        %v2180 = vunpack.c.h.b16 %v724
        %v2181 = vunpack.c.l.b16 %v725
        %v2182 = vunpack.c.h.b16 %v725
        %v2183 = vunpack.c.l.b16 %v726
        %v2184 = vunpack.c.h.b16 %v726
        %v2185 = vunpack.c.l.b16 %v727
        %v2186 = vunpack.c.h.b16 %v727
        %v2187 = vunpack.c.l.b16 %v728
        %v2188 = vunpack.c.h.b16 %v728
        %v2189 = vunpack.c.l.b16 %v729
        %v2190 = vunpack.c.h.b16 %v729
        %v2191 = vunpack.c.l.b16 %v730
        %v2192 = vunpack.c.h.b16 %v730
        %v2193 = vunpack.c.l.b16 %v731
        %v2194 = vunpack.c.h.b16 %v731
        %v2195 = vunpack.c.l.b16 %v732
        %v2196 = vunpack.c.h.b16 %v732
        %v2197 = vunpack.c.l.b16 %v733
        %v2198 = vunpack.c.h.b16 %v733
        %v2199 = vunpack.c.l.b16 %v734
        %v2200 = vunpack.c.h.b16 %v734
        %v2201 = vunpack.c.l.b16 %v735
        %v2202 = vunpack.c.h.b16 %v735
        %v2203 = vunpack.c.l.b16 %v736
        %v2204 = vunpack.c.h.b16 %v736
        %v2205 = vunpack.c.l.b16 %v737
        %v2206 = vunpack.c.h.b16 %v737
        %v2207 = vunpack.c.l.b16 %v738
        %v2208 = vunpack.c.h.b16 %v738
        %v2209 = vunpack.c.l.b16 %v739
        %v2210 = vunpack.c.h.b16 %v739
        %v2211 = vunpack.c.l.b16 %v740
        %v2212 = vunpack.c.h.b16 %v740
        %v2213 = vunpack.c.l.b16 %v741
        %v2214 = vunpack.c.h.b16 %v741
        %v2215 = vunpack.c.l.b16 %v742
        %v2216 = vunpack.c.h.b16 %v742
        %v2217 = vunpack.c.l.b16 %v743
        %v2218 = vunpack.c.h.b16 %v743
        %v2219 = vunpack.c.l.b16 %v744
        %v2220 = vunpack.c.h.b16 %v744
        %v2221 = vunpack.c.l.b16 %v745
        %v2222 = vunpack.c.h.b16 %v745
        %v2223 = vunpack.c.l.b16 %v746
        %v2224 = vunpack.c.h.b16 %v746
        %v2225 = vunpack.c.l.b16 %v747
        %v2226 = vunpack.c.h.b16 %v747
        %v2227 = vunpack.c.l.b16 %v748
        %v2228 = vunpack.c.h.b16 %v748
        %v2229 = vunpack.c.l.b16 %v749
        %v2230 = vunpack.c.h.b16 %v749
        %v2231 = vunpack.c.l.b16 %v750
        %v2232 = vunpack.c.h.b16 %v750
        %v2233 = vunpack.c.l.b16 %v751
        %v2234 = vunpack.c.h.b16 %v751
        %v2235 = vunpack.c.l.b16 %v752
        %v2236 = vunpack.c.h.b16 %v752
        %v2237 = vunpack.c.l.b16 %v753
        %v2238 = vunpack.c.h.b16 %v753
        %v2239 = vunpack.c.l.b16 %v754
        %v2240 = vunpack.c.h.b16 %v754
        %v2241 = vunpack.c.l.b16 %v755
        %v2242 = vunpack.c.h.b16 %v755
        %v2243 = vunpack.c.l.b16 %v756
        %v2244 = vunpack.c.h.b16 %v756
        %v2245 = vunpack.c.l.b16 %v757
        %v2246 = vunpack.c.h.b16 %v757
        %v2247 = vunpack.c.l.b16 %v758
        %v2248 = vunpack.c.h.b16 %v758
        %v2249 = vunpack.c.l.b16 %v759
        %v2250 = vunpack.c.h.b16 %v759
        %v2251 = vunpack.c.l.b16 %v760
        %v2252 = vunpack.c.h.b16 %v760
        %v2253 = vunpack.c.l.b16 %v761
        %v2254 = vunpack.c.h.b16 %v761
        %v2255 = vunpack.c.l.b16 %v762
        %v2256 = vunpack.c.h.b16 %v762
        %v2257 = vunpack.c.l.b16 %v763
        %v2258 = vunpack.c.h.b16 %v763
        %v2259 = vunpack.c.l.b16 %v764
        %v2260 = vunpack.c.h.b16 %v764
        %v2261 = vunpack.c.l.b16 %v765
        %v2262 = vunpack.c.h.b16 %v765
        %v2263 = vunpack.c.l.b16 %v766
        %v2264 = vunpack.c.h.b16 %v766
        %v2265 = vunpack.c.l.b16 %v767
        %v2266 = vunpack.c.h.b16 %v767
        %v2267 = vunpack.c.l.b16 %v768
        %v2268 = vunpack.c.h.b16 %v768
        %v2269 = vunpack.c.l.b16 %v769
        %v2270 = vunpack.c.h.b16 %v769
        %v2271 = vunpack.c.l.b16 %v770
        %v2272 = vunpack.c.h.b16 %v770
        %v2273 = vunpack.c.l.b16 %v771
        %v2274 = vunpack.c.h.b16 %v771
        %v2275 = vunpack.c.l.b16 %v772
        %v2276 = vunpack.c.h.b16 %v772
        %v2277 = vunpack.c.l.b16 %v773
        %v2278 = vunpack.c.h.b16 %v773
        %v2279 = vunpack.c.l.b16 %v774
        %v2280 = vunpack.c.h.b16 %v774
        %v2281 = vunpack.c.l.b16 %v775
        %v2282 = vunpack.c.h.b16 %v775
        %v2283 = vunpack.c.l.b16 %v776
        %v2284 = vunpack.c.h.b16 %v776
        %v2285 = vunpack.c.l.b16 %v777
        %v2286 = vunpack.c.h.b16 %v777
        %v2287 = vunpack.c.l.b16 %v778
        %v2288 = vunpack.c.h.b16 %v778
        %v2289 = vunpack.c.l.b16 %v779
        %v2290 = vunpack.c.h.b16 %v779
        %v2291 = vunpack.c.l.b16 %v780
        %v2292 = vunpack.c.h.b16 %v780
        %v2293 = vunpack.c.l.b16 %v781
        %v2294 = vunpack.c.h.b16 %v781
        %v2295 = vunpack.c.l.b16 %v782
        %v2296 = vunpack.c.h.b16 %v782
        %v2297 = vunpack.c.l.b16 %v783
        %v2298 = vunpack.c.h.b16 %v783
        %v2299 = vunpack.c.l.b16 %v784
        %v2300 = vunpack.c.h.b16 %v784
        %v2301 = vunpack.c.l.b16 %v785
        %v2302 = vunpack.c.h.b16 %v785
        %v2303 = vunpack.c.l.b16 %v786
        %v2304 = vunpack.c.h.b16 %v786
        %v2305 = vunpack.c.l.b16 %v787
        %v2306 = vunpack.c.h.b16 %v787
        %v2307 = vunpack.c.l.b16 %v788
        %v2308 = vunpack.c.h.b16 %v788
        %v2309 = vunpack.c.l.b16 %v789
        %v2310 = vunpack.c.h.b16 %v789
        %v2311 = vunpack.c.l.b16 %v790
        %v2312 = vunpack.c.h.b16 %v790
        %v2313 = vunpack.c.l.b16 %v791
        %v2314 = vunpack.c.h.b16 %v791
        %v2315 = vunpack.c.l.b16 %v792
        %v2316 = vunpack.c.h.b16 %v792
        %v2317 = vunpack.c.l.b16 %v793
        %v2318 = vunpack.c.h.b16 %v793
        %v2319 = vunpack.c.l.b16 %v794
        %v2320 = vunpack.c.h.b16 %v794
        %v2321 = vunpack.c.l.b16 %v795
        %v2322 = vunpack.c.h.b16 %v795
        %v2323 = vunpack.c.l.b16 %v796
        %v2324 = vunpack.c.h.b16 %v796
        %v2325 = vunpack.c.l.b16 %v797
        %v2326 = vunpack.c.h.b16 %v797
        %v2327 = vunpack.c.l.b16 %v798
        %v2328 = vunpack.c.h.b16 %v798
        %v2329 = vunpack.c.l.b16 %v799
        %v2330 = vunpack.c.h.b16 %v799
        %v2331 = vunpack.c.l.b16 %v800
        %v2332 = vunpack.c.h.b16 %v800
        %v2333 = vunpack.c.l.b16 %v801
        %v2334 = vunpack.c.h.b16 %v801
        %v2335 = vunpack.c.l.b16 %v802
        %v2336 = vunpack.c.h.b16 %v802
        %v2337 = vunpack.c.l.b16 %v803
        %v2338 = vunpack.c.h.b16 %v803
        %v2339 = vunpack.c.l.b16 %v804
        %v2340 = vunpack.c.h.b16 %v804
        %v2341 = vunpack.c.l.b16 %v805
        %v2342 = vunpack.c.h.b16 %v805
        %v2343 = vunpack.c.l.b16 %v806
        %v2344 = vunpack.c.h.b16 %v806
        %v2345 = vunpack.c.l.b16 %v807
        %v2346 = vunpack.c.h.b16 %v807
        %v2347 = vunpack.c.l.b16 %v808
        %v2348 = vunpack.c.h.b16 %v808
        %v2349 = vunpack.c.l.b16 %v809
        %v2350 = vunpack.c.h.b16 %v809
        %v2351 = vunpack.c.l.b16 %v810
        %v2352 = vunpack.c.h.b16 %v810
        %v2353 = vunpack.c.l.b16 %v811
        %v2354 = vunpack.c.h.b16 %v811
        %v2355 = vunpack.c.l.b16 %v812
        %v2356 = vunpack.c.h.b16 %v812
        %v2357 = vunpack.c.l.b16 %v813
        %v2358 = vunpack.c.h.b16 %v813
        %v2359 = vunpack.c.l.b16 %v814
        %v2360 = vunpack.c.h.b16 %v814
        %v2361 = vunpack.c.l.b16 %v815
        %v2362 = vunpack.c.h.b16 %v815
        %v2363 = vunpack.c.l.b16 %v816
        %v2364 = vunpack.c.h.b16 %v816
        %v2365 = vunpack.c.l.b16 %v817
        %v2366 = vunpack.c.h.b16 %v817
        %v2367 = vunpack.c.l.b16 %v818
        %v2368 = vunpack.c.h.b16 %v818
        %v2369 = vunpack.c.l.b16 %v819
        %v2370 = vunpack.c.h.b16 %v819
        %v2371 = vunpack.c.l.b16 %v820
        %v2372 = vunpack.c.h.b16 %v820
        %v2373 = vunpack.c.l.b16 %v821
        %v2374 = vunpack.c.h.b16 %v821
        %v2375 = vunpack.c.l.b16 %v822
        %v2376 = vunpack.c.h.b16 %v822
        %v2377 = vunpack.c.l.b16 %v823
        %v2378 = vunpack.c.h.b16 %v823
        %v2379 = vunpack.c.l.b16 %v824
        %v2380 = vunpack.c.h.b16 %v824
        %v2381 = vunpack.c.l.b16 %v825
        %v2382 = vunpack.c.h.b16 %v825
        %v2383 = vunpack.c.l.b16 %v826
        %v2384 = vunpack.c.h.b16 %v826
        %v2385 = vpack.c.b16 %v1365, %v1361
        %v2386 = vpack.c.b16 %v1366, %v1362
        %v2387 = vpack.c.b16 %v1367, %v1363
        %v2388 = vpack.c.b16 %v1368, %v1364
        %v2389 = vpack.c.b16 %v1373, %v1369
        %v2390 = vpack.c.b16 %v1374, %v1370
        %v2391 = vpack.c.b16 %v1375, %v1371
        %v2392 = vpack.c.b16 %v1376, %v1372
        %v2393 = vpack.c.b16 %v1381, %v1377
        %v2394 = vpack.c.b16 %v1382, %v1378
        %v2395 = vpack.c.b16 %v1383, %v1379
        %v2396 = vpack.c.b16 %v1384, %v1380
        %v2397 = vpack.c.b16 %v1389, %v1385
        %v2398 = vpack.c.b16 %v1390, %v1386
        %v2399 = vpack.c.b16 %v1391, %v1387
        %v2400 = vpack.c.b16 %v1392, %v1388
        %v2401 = vpack.c.b16 %v1397, %v1393
        %v2402 = vpack.c.b16 %v1398, %v1394
        %v2403 = vpack.c.b16 %v1399, %v1395
        %v2404 = vpack.c.b16 %v1400, %v1396
        %v2405 = vpack.c.b16 %v1405, %v1401
        %v2406 = vpack.c.b16 %v1406, %v1402
        %v2407 = vpack.c.b16 %v1407, %v1403
        %v2408 = vpack.c.b16 %v1408, %v1404
        %v2409 = vpack.c.b16 %v1413, %v1409
        %v2410 = vpack.c.b16 %v1414, %v1410
        %v2411 = vpack.c.b16 %v1415, %v1411
        %v2412 = vpack.c.b16 %v1416, %v1412
        %v2413 = vpack.c.b16 %v1421, %v1417
        %v2414 = vpack.c.b16 %v1422, %v1418
        %v2415 = vpack.c.b16 %v1423, %v1419
        %v2416 = vpack.c.b16 %v1424, %v1420
        %v2417 = vpack.c.b16 %v1429, %v1425
        %v2418 = vpack.c.b16 %v1430, %v1426
        %v2419 = vpack.c.b16 %v1431, %v1427
        %v2420 = vpack.c.b16 %v1432, %v1428
        %v2421 = vpack.c.b16 %v1437, %v1433
        %v2422 = vpack.c.b16 %v1438, %v1434
        %v2423 = vpack.c.b16 %v1439, %v1435
        %v2424 = vpack.c.b16 %v1440, %v1436
        %v2425 = vpack.c.b16 %v1445, %v1441
        %v2426 = vpack.c.b16 %v1446, %v1442
        %v2427 = vpack.c.b16 %v1447, %v1443
        %v2428 = vpack.c.b16 %v1448, %v1444
        %v2429 = vpack.c.b16 %v1453, %v1449
        %v2430 = vpack.c.b16 %v1454, %v1450
        %v2431 = vpack.c.b16 %v1455, %v1451
        %v2432 = vpack.c.b16 %v1456, %v1452
        %v2433 = vpack.c.b16 %v1461, %v1457
        %v2434 = vpack.c.b16 %v1462, %v1458
        %v2435 = vpack.c.b16 %v1463, %v1459
        %v2436 = vpack.c.b16 %v1464, %v1460
        %v2437 = vpack.c.b16 %v1469, %v1465
        %v2438 = vpack.c.b16 %v1470, %v1466
        %v2439 = vpack.c.b16 %v1471, %v1467
        %v2440 = vpack.c.b16 %v1472, %v1468
        %v2441 = vpack.c.b16 %v1477, %v1473
        %v2442 = vpack.c.b16 %v1478, %v1474
        %v2443 = vpack.c.b16 %v1479, %v1475
        %v2444 = vpack.c.b16 %v1480, %v1476
        %v2445 = vpack.c.b16 %v1485, %v1481
        %v2446 = vpack.c.b16 %v1486, %v1482
        %v2447 = vpack.c.b16 %v1487, %v1483
        %v2448 = vpack.c.b16 %v1488, %v1484
        %v2449 = vpack.c.b16 %v1493, %v1489
        %v2450 = vpack.c.b16 %v1494, %v1490
        %v2451 = vpack.c.b16 %v1495, %v1491
        %v2452 = vpack.c.b16 %v1496, %v1492
        %v2453 = vpack.c.b16 %v1501, %v1497
        %v2454 = vpack.c.b16 %v1502, %v1498
        %v2455 = vpack.c.b16 %v1503, %v1499
        %v2456 = vpack.c.b16 %v1504, %v1500
        %v2457 = vpack.c.b16 %v1509, %v1505
        %v2458 = vpack.c.b16 %v1510, %v1506
        %v2459 = vpack.c.b16 %v1511, %v1507
        %v2460 = vpack.c.b16 %v1512, %v1508
        %v2461 = vpack.c.b16 %v1517, %v1513
        %v2462 = vpack.c.b16 %v1518, %v1514
        %v2463 = vpack.c.b16 %v1519, %v1515
        %v2464 = vpack.c.b16 %v1520, %v1516
        %v2465 = vpack.c.b16 %v1525, %v1521
        %v2466 = vpack.c.b16 %v1526, %v1522
        %v2467 = vpack.c.b16 %v1527, %v1523
        %v2468 = vpack.c.b16 %v1528, %v1524
        %v2469 = vpack.c.b16 %v1533, %v1529
        %v2470 = vpack.c.b16 %v1534, %v1530
        %v2471 = vpack.c.b16 %v1535, %v1531
        %v2472 = vpack.c.b16 %v1536, %v1532
        %v2473 = vpack.c.b16 %v1541, %v1537
        %v2474 = vpack.c.b16 %v1542, %v1538
        %v2475 = vpack.c.b16 %v1543, %v1539
        %v2476 = vpack.c.b16 %v1544, %v1540
        %v2477 = vpack.c.b16 %v1549, %v1545
        %v2478 = vpack.c.b16 %v1550, %v1546
        %v2479 = vpack.c.b16 %v1551, %v1547
        %v2480 = vpack.c.b16 %v1552, %v1548
        %v2481 = vpack.c.b16 %v1557, %v1553
        %v2482 = vpack.c.b16 %v1558, %v1554
        %v2483 = vpack.c.b16 %v1559, %v1555
        %v2484 = vpack.c.b16 %v1560, %v1556
        %v2485 = vpack.c.b16 %v1565, %v1561
        %v2486 = vpack.c.b16 %v1566, %v1562
        %v2487 = vpack.c.b16 %v1567, %v1563
        %v2488 = vpack.c.b16 %v1568, %v1564
        %v2489 = vpack.c.b16 %v1573, %v1569
        %v2490 = vpack.c.b16 %v1574, %v1570
        %v2491 = vpack.c.b16 %v1575, %v1571
        %v2492 = vpack.c.b16 %v1576, %v1572
        %v2493 = vpack.c.b16 %v1581, %v1577
        %v2494 = vpack.c.b16 %v1582, %v1578
        %v2495 = vpack.c.b16 %v1583, %v1579
        %v2496 = vpack.c.b16 %v1584, %v1580
        %v2497 = vpack.c.b16 %v1589, %v1585
        %v2498 = vpack.c.b16 %v1590, %v1586
        %v2499 = vpack.c.b16 %v1591, %v1587
        %v2500 = vpack.c.b16 %v1592, %v1588
        %v2501 = vpack.c.b16 %v1597, %v1593
        %v2502 = vpack.c.b16 %v1598, %v1594
        %v2503 = vpack.c.b16 %v1599, %v1595
        %v2504 = vpack.c.b16 %v1600, %v1596
        %v2505 = vpack.c.b16 %v1605, %v1601
        %v2506 = vpack.c.b16 %v1606, %v1602
        %v2507 = vpack.c.b16 %v1607, %v1603
        %v2508 = vpack.c.b16 %v1608, %v1604
        %v2509 = vpack.c.b16 %v1613, %v1609
        %v2510 = vpack.c.b16 %v1614, %v1610
        %v2511 = vpack.c.b16 %v1615, %v1611
        %v2512 = vpack.c.b16 %v1616, %v1612
        %v2513 = vpack.c.b16 %v1621, %v1617
        %v2514 = vpack.c.b16 %v1622, %v1618
        %v2515 = vpack.c.b16 %v1623, %v1619
        %v2516 = vpack.c.b16 %v1624, %v1620
        %v2517 = vpack.c.b16 %v1629, %v1625
        %v2518 = vpack.c.b16 %v1630, %v1626
        %v2519 = vpack.c.b16 %v1631, %v1627
        %v2520 = vpack.c.b16 %v1632, %v1628
        %v2521 = vpack.c.b16 %v1637, %v1633
        %v2522 = vpack.c.b16 %v1638, %v1634
        %v2523 = vpack.c.b16 %v1639, %v1635
        %v2524 = vpack.c.b16 %v1640, %v1636
        %v2525 = vpack.c.b16 %v1645, %v1641
        %v2526 = vpack.c.b16 %v1646, %v1642
        %v2527 = vpack.c.b16 %v1647, %v1643
        %v2528 = vpack.c.b16 %v1648, %v1644
        %v2529 = vpack.c.b16 %v1653, %v1649
        %v2530 = vpack.c.b16 %v1654, %v1650
        %v2531 = vpack.c.b16 %v1655, %v1651
        %v2532 = vpack.c.b16 %v1656, %v1652
        %v2533 = vpack.c.b16 %v1661, %v1657
        %v2534 = vpack.c.b16 %v1662, %v1658
        %v2535 = vpack.c.b16 %v1663, %v1659
        %v2536 = vpack.c.b16 %v1664, %v1660
        %v2537 = vpack.c.b16 %v1669, %v1665
        %v2538 = vpack.c.b16 %v1670, %v1666
        %v2539 = vpack.c.b16 %v1671, %v1667
        %v2540 = vpack.c.b16 %v1672, %v1668
        %v2541 = vpack.c.b16 %v1677, %v1673
        %v2542 = vpack.c.b16 %v1678, %v1674
        %v2543 = vpack.c.b16 %v1679, %v1675
        %v2544 = vpack.c.b16 %v1680, %v1676
        %v2545 = vpack.c.b16 %v1685, %v1681
        %v2546 = vpack.c.b16 %v1686, %v1682
        %v2547 = vpack.c.b16 %v1687, %v1683
        %v2548 = vpack.c.b16 %v1688, %v1684
        %v2549 = vpack.c.b16 %v1693, %v1689
        %v2550 = vpack.c.b16 %v1694, %v1690
        %v2551 = vpack.c.b16 %v1695, %v1691
        %v2552 = vpack.c.b16 %v1696, %v1692
        %v2553 = vpack.c.b16 %v1701, %v1697
        %v2554 = vpack.c.b16 %v1702, %v1698
        %v2555 = vpack.c.b16 %v1703, %v1699
        %v2556 = vpack.c.b16 %v1704, %v1700
        %v2557 = vpack.c.b16 %v1709, %v1705
        %v2558 = vpack.c.b16 %v1710, %v1706
        %v2559 = vpack.c.b16 %v1711, %v1707
        %v2560 = vpack.c.b16 %v1712, %v1708
        %v2561 = vpack.c.b16 %v1717, %v1713
        %v2562 = vpack.c.b16 %v1718, %v1714
        %v2563 = vpack.c.b16 %v1719, %v1715
        %v2564 = vpack.c.b16 %v1720, %v1716
        %v2565 = vpack.c.b16 %v1725, %v1721
        %v2566 = vpack.c.b16 %v1726, %v1722
        %v2567 = vpack.c.b16 %v1727, %v1723
        %v2568 = vpack.c.b16 %v1728, %v1724
        %v2569 = vpack.c.b16 %v1733, %v1729
        %v2570 = vpack.c.b16 %v1734, %v1730
        %v2571 = vpack.c.b16 %v1735, %v1731
        %v2572 = vpack.c.b16 %v1736, %v1732
        %v2573 = vpack.c.b16 %v1741, %v1737
        %v2574 = vpack.c.b16 %v1742, %v1738
        %v2575 = vpack.c.b16 %v1743, %v1739
        %v2576 = vpack.c.b16 %v1744, %v1740
        %v2577 = vpack.c.b16 %v1749, %v1745
        %v2578 = vpack.c.b16 %v1750, %v1746
        %v2579 = vpack.c.b16 %v1751, %v1747
        %v2580 = vpack.c.b16 %v1752, %v1748
        %v2581 = vpack.c.b16 %v1757, %v1753
        %v2582 = vpack.c.b16 %v1758, %v1754
        %v2583 = vpack.c.b16 %v1759, %v1755
        %v2584 = vpack.c.b16 %v1760, %v1756
        %v2585 = vpack.c.b16 %v1765, %v1761
        %v2586 = vpack.c.b16 %v1766, %v1762
        %v2587 = vpack.c.b16 %v1767, %v1763
        %v2588 = vpack.c.b16 %v1768, %v1764
        %v2589 = vpack.c.b16 %v1773, %v1769
        %v2590 = vpack.c.b16 %v1774, %v1770
        %v2591 = vpack.c.b16 %v1775, %v1771
        %v2592 = vpack.c.b16 %v1776, %v1772
        %v2593 = vpack.c.b16 %v1781, %v1777
        %v2594 = vpack.c.b16 %v1782, %v1778
        %v2595 = vpack.c.b16 %v1783, %v1779
        %v2596 = vpack.c.b16 %v1784, %v1780
        %v2597 = vpack.c.b16 %v1789, %v1785
        %v2598 = vpack.c.b16 %v1790, %v1786
        %v2599 = vpack.c.b16 %v1791, %v1787
        %v2600 = vpack.c.b16 %v1792, %v1788
        %v2601 = vpack.c.b16 %v1797, %v1793
        %v2602 = vpack.c.b16 %v1798, %v1794
        %v2603 = vpack.c.b16 %v1799, %v1795
        %v2604 = vpack.c.b16 %v1800, %v1796
        %v2605 = vpack.c.b16 %v1805, %v1801
        %v2606 = vpack.c.b16 %v1806, %v1802
        %v2607 = vpack.c.b16 %v1807, %v1803
        %v2608 = vpack.c.b16 %v1808, %v1804
        %v2609 = vpack.c.b16 %v1813, %v1809
        %v2610 = vpack.c.b16 %v1814, %v1810
        %v2611 = vpack.c.b16 %v1815, %v1811
        %v2612 = vpack.c.b16 %v1816, %v1812
        %v2613 = vpack.c.b16 %v1821, %v1817
        %v2614 = vpack.c.b16 %v1822, %v1818
        %v2615 = vpack.c.b16 %v1823, %v1819
        %v2616 = vpack.c.b16 %v1824, %v1820
        %v2617 = vpack.c.b16 %v1829, %v1825
        %v2618 = vpack.c.b16 %v1830, %v1826
        %v2619 = vpack.c.b16 %v1831, %v1827
        %v2620 = vpack.c.b16 %v1832, %v1828
        %v2621 = vpack.c.b16 %v1837, %v1833
        %v2622 = vpack.c.b16 %v1838, %v1834
        %v2623 = vpack.c.b16 %v1839, %v1835
        %v2624 = vpack.c.b16 %v1840, %v1836
        %v2625 = vpack.c.b16 %v1845, %v1841
        %v2626 = vpack.c.b16 %v1846, %v1842
        %v2627 = vpack.c.b16 %v1847, %v1843
        %v2628 = vpack.c.b16 %v1848, %v1844
        %v2629 = vpack.c.b16 %v1853, %v1849
        %v2630 = vpack.c.b16 %v1854, %v1850
        %v2631 = vpack.c.b16 %v1855, %v1851
        %v2632 = vpack.c.b16 %v1856, %v1852
        %v2633 = vpack.c.b16 %v1861, %v1857
        %v2634 = vpack.c.b16 %v1862, %v1858
        %v2635 = vpack.c.b16 %v1863, %v1859
        %v2636 = vpack.c.b16 %v1864, %v1860
        %v2637 = vpack.c.b16 %v1869, %v1865
        %v2638 = vpack.c.b16 %v1870, %v1866
        %v2639 = vpack.c.b16 %v1871, %v1867
        %v2640 = vpack.c.b16 %v1872, %v1868
        %v2641 = vpack.c.b16 %v1877, %v1873
        %v2642 = vpack.c.b16 %v1878, %v1874
        %v2643 = vpack.c.b16 %v1879, %v1875
        %v2644 = vpack.c.b16 %v1880, %v1876
        %v2645 = vpack.c.b16 %v1885, %v1881
        %v2646 = vpack.c.b16 %v1886, %v1882
        %v2647 = vpack.c.b16 %v1887, %v1883
        %v2648 = vpack.c.b16 %v1888, %v1884
        %v2649 = vpack.c.b16 %v1893, %v1889
        %v2650 = vpack.c.b16 %v1894, %v1890
        %v2651 = vpack.c.b16 %v1895, %v1891
        %v2652 = vpack.c.b16 %v1896, %v1892
        %v2653 = vpack.c.b16 %v1901, %v1897
        %v2654 = vpack.c.b16 %v1902, %v1898
        %v2655 = vpack.c.b16 %v1903, %v1899
        %v2656 = vpack.c.b16 %v1904, %v1900
        %v2657 = vpack.c.b16 %v1909, %v1905
        %v2658 = vpack.c.b16 %v1910, %v1906
        %v2659 = vpack.c.b16 %v1911, %v1907
        %v2660 = vpack.c.b16 %v1912, %v1908
        %v2661 = vpack.c.b16 %v1917, %v1913
        %v2662 = vpack.c.b16 %v1918, %v1914
        %v2663 = vpack.c.b16 %v1919, %v1915
        %v2664 = vpack.c.b16 %v1920, %v1916
        %v2665 = vpack.c.b16 %v1925, %v1921
        %v2666 = vpack.c.b16 %v1926, %v1922
        %v2667 = vpack.c.b16 %v1927, %v1923
        %v2668 = vpack.c.b16 %v1928, %v1924
        %v2669 = vpack.c.b16 %v1933, %v1929
        %v2670 = vpack.c.b16 %v1934, %v1930
        %v2671 = vpack.c.b16 %v1935, %v1931
        %v2672 = vpack.c.b16 %v1936, %v1932
        %v2673 = vpack.c.b16 %v1941, %v1937
        %v2674 = vpack.c.b16 %v1942, %v1938
        %v2675 = vpack.c.b16 %v1943, %v1939
        %v2676 = vpack.c.b16 %v1944, %v1940
        %v2677 = vpack.c.b16 %v1949, %v1945
        %v2678 = vpack.c.b16 %v1950, %v1946
        %v2679 = vpack.c.b16 %v1951, %v1947
        %v2680 = vpack.c.b16 %v1952, %v1948
        %v2681 = vpack.c.b16 %v1957, %v1953
        %v2682 = vpack.c.b16 %v1958, %v1954
        %v2683 = vpack.c.b16 %v1959, %v1955
        %v2684 = vpack.c.b16 %v1960, %v1956
        %v2685 = vpack.c.b16 %v1965, %v1961
        %v2686 = vpack.c.b16 %v1966, %v1962
        %v2687 = vpack.c.b16 %v1967, %v1963
        %v2688 = vpack.c.b16 %v1968, %v1964
        %v2689 = vpack.c.b16 %v1973, %v1969
        %v2690 = vpack.c.b16 %v1974, %v1970
        %v2691 = vpack.c.b16 %v1975, %v1971
        %v2692 = vpack.c.b16 %v1976, %v1972
        %v2693 = vpack.c.b16 %v1981, %v1977
        %v2694 = vpack.c.b16 %v1982, %v1978
        %v2695 = vpack.c.b16 %v1983, %v1979
        %v2696 = vpack.c.b16 %v1984, %v1980
        %v2697 = vpack.c.b16 %v1989, %v1985
        %v2698 = vpack.c.b16 %v1990, %v1986
        %v2699 = vpack.c.b16 %v1991, %v1987
        %v2700 = vpack.c.b16 %v1992, %v1988
        %v2701 = vpack.c.b16 %v1997, %v1993
        %v2702 = vpack.c.b16 %v1998, %v1994
        %v2703 = vpack.c.b16 %v1999, %v1995
        %v2704 = vpack.c.b16 %v2000, %v1996
        %v2705 = vpack.c.b16 %v2005, %v2001
        %v2706 = vpack.c.b16 %v2006, %v2002
        %v2707 = vpack.c.b16 %v2007, %v2003
        %v2708 = vpack.c.b16 %v2008, %v2004
        %v2709 = vpack.c.b16 %v2013, %v2009
        %v2710 = vpack.c.b16 %v2014, %v2010
        %v2711 = vpack.c.b16 %v2015, %v2011
        %v2712 = vpack.c.b16 %v2016, %v2012
        %v2713 = vpack.c.b16 %v2021, %v2017
        %v2714 = vpack.c.b16 %v2022, %v2018
        %v2715 = vpack.c.b16 %v2023, %v2019
        %v2716 = vpack.c.b16 %v2024, %v2020
        %v2717 = vpack.c.b16 %v2029, %v2025
        %v2718 = vpack.c.b16 %v2030, %v2026
        %v2719 = vpack.c.b16 %v2031, %v2027
        %v2720 = vpack.c.b16 %v2032, %v2028
        %v2721 = vpack.c.b16 %v2037, %v2033
        %v2722 = vpack.c.b16 %v2038, %v2034
        %v2723 = vpack.c.b16 %v2039, %v2035
        %v2724 = vpack.c.b16 %v2040, %v2036
        %v2725 = vpack.c.b16 %v2045, %v2041
        %v2726 = vpack.c.b16 %v2046, %v2042
        %v2727 = vpack.c.b16 %v2047, %v2043
        %v2728 = vpack.c.b16 %v2048, %v2044
        %v2729 = vpack.c.b16 %v2053, %v2049
        %v2730 = vpack.c.b16 %v2054, %v2050
        %v2731 = vpack.c.b16 %v2055, %v2051
        %v2732 = vpack.c.b16 %v2056, %v2052
        %v2733 = vpack.c.b16 %v2061, %v2057
        %v2734 = vpack.c.b16 %v2062, %v2058
        %v2735 = vpack.c.b16 %v2063, %v2059
        %v2736 = vpack.c.b16 %v2064, %v2060
        %v2737 = vpack.c.b16 %v2069, %v2065
        %v2738 = vpack.c.b16 %v2070, %v2066
        %v2739 = vpack.c.b16 %v2071, %v2067
        %v2740 = vpack.c.b16 %v2072, %v2068
        %v2741 = vpack.c.b16 %v2077, %v2073
        %v2742 = vpack.c.b16 %v2078, %v2074
        %v2743 = vpack.c.b16 %v2079, %v2075
        %v2744 = vpack.c.b16 %v2080, %v2076
        %v2745 = vpack.c.b16 %v2085, %v2081
        %v2746 = vpack.c.b16 %v2086, %v2082
        %v2747 = vpack.c.b16 %v2087, %v2083
        %v2748 = vpack.c.b16 %v2088, %v2084
        %v2749 = vpack.c.b16 %v2093, %v2089
        %v2750 = vpack.c.b16 %v2094, %v2090
        %v2751 = vpack.c.b16 %v2095, %v2091
        %v2752 = vpack.c.b16 %v2096, %v2092
        %v2753 = vpack.c.b16 %v2101, %v2097
        %v2754 = vpack.c.b16 %v2102, %v2098
        %v2755 = vpack.c.b16 %v2103, %v2099
        %v2756 = vpack.c.b16 %v2104, %v2100
        %v2757 = vpack.c.b16 %v2109, %v2105
        %v2758 = vpack.c.b16 %v2110, %v2106
        %v2759 = vpack.c.b16 %v2111, %v2107
        %v2760 = vpack.c.b16 %v2112, %v2108
        %v2761 = vpack.c.b16 %v2117, %v2113
        %v2762 = vpack.c.b16 %v2118, %v2114
        %v2763 = vpack.c.b16 %v2119, %v2115
        %v2764 = vpack.c.b16 %v2120, %v2116
        %v2765 = vpack.c.b16 %v2125, %v2121
        %v2766 = vpack.c.b16 %v2126, %v2122
        %v2767 = vpack.c.b16 %v2127, %v2123
        %v2768 = vpack.c.b16 %v2128, %v2124
        %v2769 = vpack.c.b16 %v2133, %v2129
        %v2770 = vpack.c.b16 %v2134, %v2130
        %v2771 = vpack.c.b16 %v2135, %v2131
        %v2772 = vpack.c.b16 %v2136, %v2132
        %v2773 = vpack.c.b16 %v2141, %v2137
        %v2774 = vpack.c.b16 %v2142, %v2138
        %v2775 = vpack.c.b16 %v2143, %v2139
        %v2776 = vpack.c.b16 %v2144, %v2140
        %v2777 = vpack.c.b16 %v2149, %v2145
        %v2778 = vpack.c.b16 %v2150, %v2146
        %v2779 = vpack.c.b16 %v2151, %v2147
        %v2780 = vpack.c.b16 %v2152, %v2148
        %v2781 = vpack.c.b16 %v2157, %v2153
        %v2782 = vpack.c.b16 %v2158, %v2154
        %v2783 = vpack.c.b16 %v2159, %v2155
        %v2784 = vpack.c.b16 %v2160, %v2156
        %v2785 = vpack.c.b16 %v2165, %v2161
        %v2786 = vpack.c.b16 %v2166, %v2162
        %v2787 = vpack.c.b16 %v2167, %v2163
        %v2788 = vpack.c.b16 %v2168, %v2164
        %v2789 = vpack.c.b16 %v2173, %v2169
        %v2790 = vpack.c.b16 %v2174, %v2170
        %v2791 = vpack.c.b16 %v2175, %v2171
        %v2792 = vpack.c.b16 %v2176, %v2172
        %v2793 = vpack.c.b16 %v2181, %v2177
        %v2794 = vpack.c.b16 %v2182, %v2178
        %v2795 = vpack.c.b16 %v2183, %v2179
        %v2796 = vpack.c.b16 %v2184, %v2180
        %v2797 = vpack.c.b16 %v2189, %v2185
        %v2798 = vpack.c.b16 %v2190, %v2186
        %v2799 = vpack.c.b16 %v2191, %v2187
        %v2800 = vpack.c.b16 %v2192, %v2188
        %v2801 = vpack.c.b16 %v2197, %v2193
        %v2802 = vpack.c.b16 %v2198, %v2194
        %v2803 = vpack.c.b16 %v2199, %v2195
        %v2804 = vpack.c.b16 %v2200, %v2196
        %v2805 = vpack.c.b16 %v2205, %v2201
        %v2806 = vpack.c.b16 %v2206, %v2202
        %v2807 = vpack.c.b16 %v2207, %v2203
        %v2808 = vpack.c.b16 %v2208, %v2204
        %v2809 = vpack.c.b16 %v2213, %v2209
        %v2810 = vpack.c.b16 %v2214, %v2210
        %v2811 = vpack.c.b16 %v2215, %v2211
        %v2812 = vpack.c.b16 %v2216, %v2212
        %v2813 = vpack.c.b16 %v2221, %v2217
        %v2814 = vpack.c.b16 %v2222, %v2218
        %v2815 = vpack.c.b16 %v2223, %v2219
        %v2816 = vpack.c.b16 %v2224, %v2220
        %v2817 = vpack.c.b16 %v2229, %v2225
        %v2818 = vpack.c.b16 %v2230, %v2226
        %v2819 = vpack.c.b16 %v2231, %v2227
        %v2820 = vpack.c.b16 %v2232, %v2228
        %v2821 = vpack.c.b16 %v2237, %v2233
        %v2822 = vpack.c.b16 %v2238, %v2234
        %v2823 = vpack.c.b16 %v2239, %v2235
        %v2824 = vpack.c.b16 %v2240, %v2236
        %v2825 = vpack.c.b16 %v2245, %v2241
        %v2826 = vpack.c.b16 %v2246, %v2242
        %v2827 = vpack.c.b16 %v2247, %v2243
        %v2828 = vpack.c.b16 %v2248, %v2244
        %v2829 = vpack.c.b16 %v2253, %v2249
        %v2830 = vpack.c.b16 %v2254, %v2250
        %v2831 = vpack.c.b16 %v2255, %v2251
        %v2832 = vpack.c.b16 %v2256, %v2252
        %v2833 = vpack.c.b16 %v2261, %v2257
        %v2834 = vpack.c.b16 %v2262, %v2258
        %v2835 = vpack.c.b16 %v2263, %v2259
        %v2836 = vpack.c.b16 %v2264, %v2260
        %v2837 = vpack.c.b16 %v2269, %v2265
        %v2838 = vpack.c.b16 %v2270, %v2266
        %v2839 = vpack.c.b16 %v2271, %v2267
        %v2840 = vpack.c.b16 %v2272, %v2268
        %v2841 = vpack.c.b16 %v2277, %v2273
        %v2842 = vpack.c.b16 %v2278, %v2274
        %v2843 = vpack.c.b16 %v2279, %v2275
        %v2844 = vpack.c.b16 %v2280, %v2276
        %v2845 = vpack.c.b16 %v2285, %v2281
        %v2846 = vpack.c.b16 %v2286, %v2282
        %v2847 = vpack.c.b16 %v2287, %v2283
        %v2848 = vpack.c.b16 %v2288, %v2284
        %v2849 = vpack.c.b16 %v2293, %v2289
        %v2850 = vpack.c.b16 %v2294, %v2290
        %v2851 = vpack.c.b16 %v2295, %v2291
        %v2852 = vpack.c.b16 %v2296, %v2292
        %v2853 = vpack.c.b16 %v2301, %v2297
        %v2854 = vpack.c.b16 %v2302, %v2298
        %v2855 = vpack.c.b16 %v2303, %v2299
        %v2856 = vpack.c.b16 %v2304, %v2300
        %v2857 = vpack.c.b16 %v2309, %v2305
        %v2858 = vpack.c.b16 %v2310, %v2306
        %v2859 = vpack.c.b16 %v2311, %v2307
        %v2860 = vpack.c.b16 %v2312, %v2308
        %v2861 = vpack.c.b16 %v2317, %v2313
        %v2862 = vpack.c.b16 %v2318, %v2314
        %v2863 = vpack.c.b16 %v2319, %v2315
        %v2864 = vpack.c.b16 %v2320, %v2316
        %v2865 = vpack.c.b16 %v2325, %v2321
        %v2866 = vpack.c.b16 %v2326, %v2322
        %v2867 = vpack.c.b16 %v2327, %v2323
        %v2868 = vpack.c.b16 %v2328, %v2324
        %v2869 = vpack.c.b16 %v2333, %v2329
        %v2870 = vpack.c.b16 %v2334, %v2330
        %v2871 = vpack.c.b16 %v2335, %v2331
        %v2872 = vpack.c.b16 %v2336, %v2332
        %v2873 = vpack.c.b16 %v2341, %v2337
        %v2874 = vpack.c.b16 %v2342, %v2338
        %v2875 = vpack.c.b16 %v2343, %v2339
        %v2876 = vpack.c.b16 %v2344, %v2340
        %v2877 = vpack.c.b16 %v2349, %v2345
        %v2878 = vpack.c.b16 %v2350, %v2346
        %v2879 = vpack.c.b16 %v2351, %v2347
        %v2880 = vpack.c.b16 %v2352, %v2348
        %v2881 = vpack.c.b16 %v2357, %v2353
        %v2882 = vpack.c.b16 %v2358, %v2354
        %v2883 = vpack.c.b16 %v2359, %v2355
        %v2884 = vpack.c.b16 %v2360, %v2356
        %v2885 = vpack.c.b16 %v2365, %v2361
        %v2886 = vpack.c.b16 %v2366, %v2362
        %v2887 = vpack.c.b16 %v2367, %v2363
        %v2888 = vpack.c.b16 %v2368, %v2364
        %v2889 = vpack.c.b16 %v2373, %v2369
        %v2890 = vpack.c.b16 %v2374, %v2370
        %v2891 = vpack.c.b16 %v2375, %v2371
        %v2892 = vpack.c.b16 %v2376, %v2372
        %v2893 = vpack.c.b16 %v2381, %v2377
        %v2894 = vpack.c.b16 %v2382, %v2378
        %v2895 = vpack.c.b16 %v2383, %v2379
        %v2896 = vpack.c.b16 %v2384, %v2380
        %3409 = vmatprep.subr.bf16.mxu0 %v2414
        %3410 = vmatpush1.bf16.msra.mxu0 %v2413
        %3411 = vmatprep.subr.bf16.mxu0 %v2410
        %3412 = vmatpush1.bf16.msra.mxu0 %v2409
        %3413 = vmatprep.subr.bf16.mxu0 %v2406
        %3414 = vmatpush1.bf16.msra.mxu0 %v2405
        %3415 = vmatprep.subr.bf16.mxu0 %v2402
        %3416 = vmatpush1.bf16.msra.mxu0 %v2401
        %3417 = vmatprep.subr.bf16.mxu0 %v2398
        %3418 = vmatpush1.bf16.msra.mxu0 %v2397
        %3419 = vmatprep.subr.bf16.mxu0 %v2394
        %3420 = vmatpush1.bf16.msra.mxu0 %v2393
        %3421 = vmatprep.subr.bf16.mxu0 %v2390
        %3422 = vmatpush1.bf16.msra.mxu0 %v2389
        %3423 = vmatprep.subr.bf16.mxu0 %v2386
        %3424 = vmatpush1.bf16.msra.mxu0 %v2385
        %3425 = vmatprep.subr.bf16.mxu0 %v2446
        %3426 = vmatpush2.bf16.msra.mxu0 %v2445
        %3427 = vmatprep.subr.bf16.mxu0 %v2442
        %3428 = vmatpush2.bf16.msra.mxu0 %v2441
        %3429 = vmatprep.subr.bf16.mxu0 %v2438
        %3430 = vmatpush2.bf16.msra.mxu0 %v2437
        %3431 = vmatprep.subr.bf16.mxu0 %v2434
        %3432 = vmatpush2.bf16.msra.mxu0 %v2433
        %3433 = vmatprep.subr.bf16.mxu0 %v2430
        %3434 = vmatpush2.bf16.msra.mxu0 %v2429
        %3435 = vmatprep.subr.bf16.mxu0 %v2426
        %3436 = vmatpush2.bf16.msra.mxu0 %v2425
        %3437 = vmatprep.subr.bf16.mxu0 %v2422
        %3438 = vmatpush2.bf16.msra.mxu0 %v2421
        %3439 = vmatprep.subr.bf16.mxu0 %v2418
        %3440 = vmatpush2.bf16.msra.mxu0 %v2417
        %3441 = vmatprep.mubr.bf16.mxu0 %v300
        %3442 = vmatmul.mubr.bf16.gmra.mxu0 %v299
        %v3443 = vpop.f32.mrf.mxu0
        %v3444 = vadd.f32 %v832, %v3443
        %v3445 = vpop.f32.mrf.mxu0
        %v3446 = vadd.f32 %v836, %v3445
        %v3447 = vpop.f32.mrf.mxu0
        %v3448 = vadd.f32 %v832, %v3447
        %v3449 = vpop.f32.mrf.mxu0
        %v3450 = vadd.f32 %v836, %v3449
        %3451 = vdwg.mxu0
        %3452 = vmatprep.subr.bf16.mxu0 %v2478
        %3453 = vmatpush1.bf16.msra.mxu0 %v2477
        %3454 = vmatprep.subr.bf16.mxu0 %v2474
        %3455 = vmatpush1.bf16.msra.mxu0 %v2473
        %3456 = vmatprep.subr.bf16.mxu0 %v2470
        %3457 = vmatpush1.bf16.msra.mxu0 %v2469
        %3458 = vmatprep.subr.bf16.mxu0 %v2466
        %3459 = vmatpush1.bf16.msra.mxu0 %v2465
        %3460 = vmatprep.subr.bf16.mxu0 %v2462
        %3461 = vmatpush1.bf16.msra.mxu0 %v2461
        %3462 = vmatprep.subr.bf16.mxu0 %v2458
        %3463 = vmatpush1.bf16.msra.mxu0 %v2457
        %3464 = vmatprep.subr.bf16.mxu0 %v2454
        %3465 = vmatpush1.bf16.msra.mxu0 %v2453
        %3466 = vmatprep.subr.bf16.mxu0 %v2450
        %3467 = vmatpush1.bf16.msra.mxu0 %v2449
        %3468 = vmatprep.subr.bf16.mxu0 %v2510
        %3469 = vmatpush2.bf16.msra.mxu0 %v2509
        %3470 = vmatprep.subr.bf16.mxu0 %v2506
        %3471 = vmatpush2.bf16.msra.mxu0 %v2505
        %3472 = vmatprep.subr.bf16.mxu0 %v2502
        %3473 = vmatpush2.bf16.msra.mxu0 %v2501
        %3474 = vmatprep.subr.bf16.mxu0 %v2498
        %3475 = vmatpush2.bf16.msra.mxu0 %v2497
        %3476 = vmatprep.subr.bf16.mxu0 %v2494
        %3477 = vmatpush2.bf16.msra.mxu0 %v2493
        %3478 = vmatprep.subr.bf16.mxu0 %v2490
        %3479 = vmatpush2.bf16.msra.mxu0 %v2489
        %3480 = vmatprep.subr.bf16.mxu0 %v2486
        %3481 = vmatpush2.bf16.msra.mxu0 %v2485
        %3482 = vmatprep.subr.bf16.mxu0 %v2482
        %3483 = vmatpush2.bf16.msra.mxu0 %v2481
        %3484 = vmatprep.mubr.bf16.mxu0 %v302
        %3485 = vmatmul.mubr.bf16.gmra.mxu0 %v301
        %v3486 = vpop.f32.mrf.mxu0
        %v3487 = vadd.f32 %v3444, %v3486
        %v3488 = vpop.f32.mrf.mxu0
        %v3489 = vadd.f32 %v3446, %v3488
        %v3490 = vpop.f32.mrf.mxu0
        %v3491 = vadd.f32 %v3448, %v3490
        %v3492 = vpop.f32.mrf.mxu0
        %v3493 = vadd.f32 %v3450, %v3492
        %3494 = vdwg.mxu0
        %3495 = vmatprep.subr.bf16.mxu0 %v2542
        %3496 = vmatpush1.bf16.msra.mxu0 %v2541
        %3497 = vmatprep.subr.bf16.mxu0 %v2538
        %3498 = vmatpush1.bf16.msra.mxu0 %v2537
        %3499 = vmatprep.subr.bf16.mxu0 %v2534
        %3500 = vmatpush1.bf16.msra.mxu0 %v2533
        %3501 = vmatprep.subr.bf16.mxu0 %v2530
        %3502 = vmatpush1.bf16.msra.mxu0 %v2529
        %3503 = vmatprep.subr.bf16.mxu0 %v2526
        %3504 = vmatpush1.bf16.msra.mxu0 %v2525
        %3505 = vmatprep.subr.bf16.mxu0 %v2522
        %3506 = vmatpush1.bf16.msra.mxu0 %v2521
        %3507 = vmatprep.subr.bf16.mxu0 %v2518
        %3508 = vmatpush1.bf16.msra.mxu0 %v2517
        %3509 = vmatprep.subr.bf16.mxu0 %v2514
        %3510 = vmatpush1.bf16.msra.mxu0 %v2513
        %3511 = vmatprep.subr.bf16.mxu0 %v2574
        %3512 = vmatpush2.bf16.msra.mxu0 %v2573
        %3513 = vmatprep.subr.bf16.mxu0 %v2570
        %3514 = vmatpush2.bf16.msra.mxu0 %v2569
        %3515 = vmatprep.subr.bf16.mxu0 %v2566
        %3516 = vmatpush2.bf16.msra.mxu0 %v2565
        %3517 = vmatprep.subr.bf16.mxu0 %v2562
        %3518 = vmatpush2.bf16.msra.mxu0 %v2561
        %3519 = vmatprep.subr.bf16.mxu0 %v2558
        %3520 = vmatpush2.bf16.msra.mxu0 %v2557
        %3521 = vmatprep.subr.bf16.mxu0 %v2554
        %3522 = vmatpush2.bf16.msra.mxu0 %v2553
        %3523 = vmatprep.subr.bf16.mxu0 %v2550
        %3524 = vmatpush2.bf16.msra.mxu0 %v2549
        %3525 = vmatprep.subr.bf16.mxu0 %v2546
        %3526 = vmatpush2.bf16.msra.mxu0 %v2545
        %3527 = vmatprep.mubr.bf16.mxu0 %v304
        %3528 = vmatmul.mubr.bf16.gmra.mxu0 %v303
        %v3529 = vpop.f32.mrf.mxu0
        %v3530 = vadd.f32 %v3487, %v3529
        %v3531 = vpop.f32.mrf.mxu0
        %v3532 = vadd.f32 %v3489, %v3531
        %v3533 = vpop.f32.mrf.mxu0
        %v3534 = vadd.f32 %v3491, %v3533
        %v3535 = vpop.f32.mrf.mxu0
        %v3536 = vadd.f32 %v3493, %v3535
        %3537 = vdwg.mxu0
        %3538 = vmatprep.subr.bf16.mxu0 %v2606
        %3539 = vmatpush1.bf16.msra.mxu0 %v2605
        %3540 = vmatprep.subr.bf16.mxu0 %v2602
        %3541 = vmatpush1.bf16.msra.mxu0 %v2601
        %3542 = vmatprep.subr.bf16.mxu0 %v2598
        %3543 = vmatpush1.bf16.msra.mxu0 %v2597
        %3544 = vmatprep.subr.bf16.mxu0 %v2594
        %3545 = vmatpush1.bf16.msra.mxu0 %v2593
        %3546 = vmatprep.subr.bf16.mxu0 %v2590
        %3547 = vmatpush1.bf16.msra.mxu0 %v2589
        %3548 = vmatprep.subr.bf16.mxu0 %v2586
        %3549 = vmatpush1.bf16.msra.mxu0 %v2585
        %3550 = vmatprep.subr.bf16.mxu0 %v2582
        %3551 = vmatpush1.bf16.msra.mxu0 %v2581
        %3552 = vmatprep.subr.bf16.mxu0 %v2578
        %3553 = vmatpush1.bf16.msra.mxu0 %v2577
        %3554 = vmatprep.subr.bf16.mxu0 %v2638
        %3555 = vmatpush2.bf16.msra.mxu0 %v2637
        %3556 = vmatprep.subr.bf16.mxu0 %v2634
        %3557 = vmatpush2.bf16.msra.mxu0 %v2633
        %3558 = vmatprep.subr.bf16.mxu0 %v2630
        %3559 = vmatpush2.bf16.msra.mxu0 %v2629
        %3560 = vmatprep.subr.bf16.mxu0 %v2626
        %3561 = vmatpush2.bf16.msra.mxu0 %v2625
        %3562 = vmatprep.subr.bf16.mxu0 %v2622
        %3563 = vmatpush2.bf16.msra.mxu0 %v2621
        %3564 = vmatprep.subr.bf16.mxu0 %v2618
        %3565 = vmatpush2.bf16.msra.mxu0 %v2617
        %3566 = vmatprep.subr.bf16.mxu0 %v2614
        %3567 = vmatpush2.bf16.msra.mxu0 %v2613
        %3568 = vmatprep.subr.bf16.mxu0 %v2610
        %3569 = vmatpush2.bf16.msra.mxu0 %v2609
        %3570 = vmatprep.mubr.bf16.mxu0 %v306
        %3571 = vmatmul.mubr.bf16.gmra.mxu0 %v305
        %v3572 = vpop.f32.mrf.mxu0
        %v3573 = vadd.f32 %v3530, %v3572
        %v3574 = vpop.f32.mrf.mxu0
        %v3575 = vadd.f32 %v3532, %v3574
        %v3576 = vpop.f32.mrf.mxu0
        %v3577 = vadd.f32 %v3534, %v3576
        %v3578 = vpop.f32.mrf.mxu0
        %v3579 = vadd.f32 %v3536, %v3578
        %3580 = vdwg.mxu0
        %3581 = vmatprep.subr.bf16.mxu0 %v2670
        %3582 = vmatpush1.bf16.msra.mxu0 %v2669
        %3583 = vmatprep.subr.bf16.mxu0 %v2666
        %3584 = vmatpush1.bf16.msra.mxu0 %v2665
        %3585 = vmatprep.subr.bf16.mxu0 %v2662
        %3586 = vmatpush1.bf16.msra.mxu0 %v2661
        %3587 = vmatprep.subr.bf16.mxu0 %v2658
        %3588 = vmatpush1.bf16.msra.mxu0 %v2657
        %3589 = vmatprep.subr.bf16.mxu0 %v2654
        %3590 = vmatpush1.bf16.msra.mxu0 %v2653
        %3591 = vmatprep.subr.bf16.mxu0 %v2650
        %3592 = vmatpush1.bf16.msra.mxu0 %v2649
        %3593 = vmatprep.subr.bf16.mxu0 %v2646
        %3594 = vmatpush1.bf16.msra.mxu0 %v2645
        %3595 = vmatprep.subr.bf16.mxu0 %v2642
        %3596 = vmatpush1.bf16.msra.mxu0 %v2641
        %3597 = vmatprep.subr.bf16.mxu0 %v2702
        %3598 = vmatpush2.bf16.msra.mxu0 %v2701
        %3599 = vmatprep.subr.bf16.mxu0 %v2698
        %3600 = vmatpush2.bf16.msra.mxu0 %v2697
        %3601 = vmatprep.subr.bf16.mxu0 %v2694
        %3602 = vmatpush2.bf16.msra.mxu0 %v2693
        %3603 = vmatprep.subr.bf16.mxu0 %v2690
        %3604 = vmatpush2.bf16.msra.mxu0 %v2689
        %3605 = vmatprep.subr.bf16.mxu0 %v2686
        %3606 = vmatpush2.bf16.msra.mxu0 %v2685
        %3607 = vmatprep.subr.bf16.mxu0 %v2682
        %3608 = vmatpush2.bf16.msra.mxu0 %v2681
        %3609 = vmatprep.subr.bf16.mxu0 %v2678
        %3610 = vmatpush2.bf16.msra.mxu0 %v2677
        %3611 = vmatprep.subr.bf16.mxu0 %v2674
        %3612 = vmatpush2.bf16.msra.mxu0 %v2673
        %3613 = vmatprep.mubr.bf16.mxu0 %v308
        %3614 = vmatmul.mubr.bf16.gmra.mxu0 %v307
        %v3615 = vpop.f32.mrf.mxu0
        %v3616 = vadd.f32 %v3573, %v3615
        %v3617 = vpop.f32.mrf.mxu0
        %v3618 = vadd.f32 %v3575, %v3617
        %v3619 = vpop.f32.mrf.mxu0
        %v3620 = vadd.f32 %v3577, %v3619
        %v3621 = vpop.f32.mrf.mxu0
        %v3622 = vadd.f32 %v3579, %v3621
        %3623 = vdwg.mxu0
        %3624 = vmatprep.subr.bf16.mxu0 %v2734
        %3625 = vmatpush1.bf16.msra.mxu0 %v2733
        %3626 = vmatprep.subr.bf16.mxu0 %v2730
        %3627 = vmatpush1.bf16.msra.mxu0 %v2729
        %3628 = vmatprep.subr.bf16.mxu0 %v2726
        %3629 = vmatpush1.bf16.msra.mxu0 %v2725
        %3630 = vmatprep.subr.bf16.mxu0 %v2722
        %3631 = vmatpush1.bf16.msra.mxu0 %v2721
        %3632 = vmatprep.subr.bf16.mxu0 %v2718
        %3633 = vmatpush1.bf16.msra.mxu0 %v2717
        %3634 = vmatprep.subr.bf16.mxu0 %v2714
        %3635 = vmatpush1.bf16.msra.mxu0 %v2713
        %3636 = vmatprep.subr.bf16.mxu0 %v2710
        %3637 = vmatpush1.bf16.msra.mxu0 %v2709
        %3638 = vmatprep.subr.bf16.mxu0 %v2706
        %3639 = vmatpush1.bf16.msra.mxu0 %v2705
        %3640 = vmatprep.subr.bf16.mxu0 %v2766
        %3641 = vmatpush2.bf16.msra.mxu0 %v2765
        %3642 = vmatprep.subr.bf16.mxu0 %v2762
        %3643 = vmatpush2.bf16.msra.mxu0 %v2761
        %3644 = vmatprep.subr.bf16.mxu0 %v2758
        %3645 = vmatpush2.bf16.msra.mxu0 %v2757
        %3646 = vmatprep.subr.bf16.mxu0 %v2754
        %3647 = vmatpush2.bf16.msra.mxu0 %v2753
        %3648 = vmatprep.subr.bf16.mxu0 %v2750
        %3649 = vmatpush2.bf16.msra.mxu0 %v2749
        %3650 = vmatprep.subr.bf16.mxu0 %v2746
        %3651 = vmatpush2.bf16.msra.mxu0 %v2745
        %3652 = vmatprep.subr.bf16.mxu0 %v2742
        %3653 = vmatpush2.bf16.msra.mxu0 %v2741
        %3654 = vmatprep.subr.bf16.mxu0 %v2738
        %3655 = vmatpush2.bf16.msra.mxu0 %v2737
        %3656 = vmatprep.mubr.bf16.mxu0 %v310
        %3657 = vmatmul.mubr.bf16.gmra.mxu0 %v309
        %v3658 = vpop.f32.mrf.mxu0
        %v3659 = vadd.f32 %v3616, %v3658
        %v3660 = vpop.f32.mrf.mxu0
        %v3661 = vadd.f32 %v3618, %v3660
        %v3662 = vpop.f32.mrf.mxu0
        %v3663 = vadd.f32 %v3620, %v3662
        %v3664 = vpop.f32.mrf.mxu0
        %v3665 = vadd.f32 %v3622, %v3664
        %3666 = vdwg.mxu0
        %3667 = vmatprep.subr.bf16.mxu0 %v2798
        %3668 = vmatpush1.bf16.msra.mxu0 %v2797
        %3669 = vmatprep.subr.bf16.mxu0 %v2794
        %3670 = vmatpush1.bf16.msra.mxu0 %v2793
        %3671 = vmatprep.subr.bf16.mxu0 %v2790
        %3672 = vmatpush1.bf16.msra.mxu0 %v2789
        %3673 = vmatprep.subr.bf16.mxu0 %v2786
        %3674 = vmatpush1.bf16.msra.mxu0 %v2785
        %3675 = vmatprep.subr.bf16.mxu0 %v2782
        %3676 = vmatpush1.bf16.msra.mxu0 %v2781
        %3677 = vmatprep.subr.bf16.mxu0 %v2778
        %3678 = vmatpush1.bf16.msra.mxu0 %v2777
        %3679 = vmatprep.subr.bf16.mxu0 %v2774
        %3680 = vmatpush1.bf16.msra.mxu0 %v2773
        %3681 = vmatprep.subr.bf16.mxu0 %v2770
        %3682 = vmatpush1.bf16.msra.mxu0 %v2769
        %3683 = vmatprep.subr.bf16.mxu0 %v2830
        %3684 = vmatpush2.bf16.msra.mxu0 %v2829
        %3685 = vmatprep.subr.bf16.mxu0 %v2826
        %3686 = vmatpush2.bf16.msra.mxu0 %v2825
        %3687 = vmatprep.subr.bf16.mxu0 %v2822
        %3688 = vmatpush2.bf16.msra.mxu0 %v2821
        %3689 = vmatprep.subr.bf16.mxu0 %v2818
        %3690 = vmatpush2.bf16.msra.mxu0 %v2817
        %3691 = vmatprep.subr.bf16.mxu0 %v2814
        %3692 = vmatpush2.bf16.msra.mxu0 %v2813
        %3693 = vmatprep.subr.bf16.mxu0 %v2810
        %3694 = vmatpush2.bf16.msra.mxu0 %v2809
        %3695 = vmatprep.subr.bf16.mxu0 %v2806
        %3696 = vmatpush2.bf16.msra.mxu0 %v2805
        %3697 = vmatprep.subr.bf16.mxu0 %v2802
        %3698 = vmatpush2.bf16.msra.mxu0 %v2801
        %3699 = vmatprep.mubr.bf16.mxu0 %v312
        %3700 = vmatmul.mubr.bf16.gmra.mxu0 %v311
        %v3701 = vpop.f32.mrf.mxu0
        %v3702 = vadd.f32 %v3659, %v3701
        %v3703 = vpop.f32.mrf.mxu0
        %v3704 = vadd.f32 %v3661, %v3703
        %v3705 = vpop.f32.mrf.mxu0
        %v3706 = vadd.f32 %v3663, %v3705
        %v3707 = vpop.f32.mrf.mxu0
        %v3708 = vadd.f32 %v3665, %v3707
        %3709 = vdwg.mxu0
        %3710 = vmatprep.subr.bf16.mxu0 %v2862
        %3711 = vmatpush1.bf16.msra.mxu0 %v2861
        %3712 = vmatprep.subr.bf16.mxu0 %v2858
        %3713 = vmatpush1.bf16.msra.mxu0 %v2857
        %3714 = vmatprep.subr.bf16.mxu0 %v2854
        %3715 = vmatpush1.bf16.msra.mxu0 %v2853
        %3716 = vmatprep.subr.bf16.mxu0 %v2850
        %3717 = vmatpush1.bf16.msra.mxu0 %v2849
        %3718 = vmatprep.subr.bf16.mxu0 %v2846
        %3719 = vmatpush1.bf16.msra.mxu0 %v2845
        %3720 = vmatprep.subr.bf16.mxu0 %v2842
        %3721 = vmatpush1.bf16.msra.mxu0 %v2841
        %3722 = vmatprep.subr.bf16.mxu0 %v2838
        %3723 = vmatpush1.bf16.msra.mxu0 %v2837
        %3724 = vmatprep.subr.bf16.mxu0 %v2834
        %3725 = vmatpush1.bf16.msra.mxu0 %v2833
        %3726 = vmatprep.subr.bf16.mxu0 %v2894
        %3727 = vmatpush2.bf16.msra.mxu0 %v2893
        %3728 = vmatprep.subr.bf16.mxu0 %v2890
        %3729 = vmatpush2.bf16.msra.mxu0 %v2889
        %3730 = vmatprep.subr.bf16.mxu0 %v2886
        %3731 = vmatpush2.bf16.msra.mxu0 %v2885
        %3732 = vmatprep.subr.bf16.mxu0 %v2882
        %3733 = vmatpush2.bf16.msra.mxu0 %v2881
        %3734 = vmatprep.subr.bf16.mxu0 %v2878
        %3735 = vmatpush2.bf16.msra.mxu0 %v2877
        %3736 = vmatprep.subr.bf16.mxu0 %v2874
        %3737 = vmatpush2.bf16.msra.mxu0 %v2873
        %3738 = vmatprep.subr.bf16.mxu0 %v2870
        %3739 = vmatpush2.bf16.msra.mxu0 %v2869
        %3740 = vmatprep.subr.bf16.mxu0 %v2866
        %3741 = vmatpush2.bf16.msra.mxu0 %v2865
        %3742 = vmatprep.mubr.bf16.mxu0 %v314
        %3743 = vmatmul.mubr.bf16.gmra.mxu0 %v313
        %v3744 = vpop.f32.mrf.mxu0
        %v3745 = vadd.f32 %v3702, %v3744
        %v3746 = vpop.f32.mrf.mxu0
        %v3747 = vadd.f32 %v3704, %v3746
        %v3748 = vpop.f32.mrf.mxu0
        %v3749 = vadd.f32 %v3706, %v3748
        %v3750 = vpop.f32.mrf.mxu0
        %v3751 = vadd.f32 %v3708, %v3750
        %3752 = vdwg.mxu0
        %3753 = vmatprep.subr.bf16.mxu0 %v2416
        %3754 = vmatpush1.bf16.msra.mxu0 %v2415
        %3755 = vmatprep.subr.bf16.mxu0 %v2412
        %3756 = vmatpush1.bf16.msra.mxu0 %v2411
        %3757 = vmatprep.subr.bf16.mxu0 %v2408
        %3758 = vmatpush1.bf16.msra.mxu0 %v2407
        %3759 = vmatprep.subr.bf16.mxu0 %v2404
        %3760 = vmatpush1.bf16.msra.mxu0 %v2403
        %3761 = vmatprep.subr.bf16.mxu0 %v2400
        %3762 = vmatpush1.bf16.msra.mxu0 %v2399
        %3763 = vmatprep.subr.bf16.mxu0 %v2396
        %3764 = vmatpush1.bf16.msra.mxu0 %v2395
        %3765 = vmatprep.subr.bf16.mxu0 %v2392
        %3766 = vmatpush1.bf16.msra.mxu0 %v2391
        %3767 = vmatprep.subr.bf16.mxu0 %v2388
        %3768 = vmatpush1.bf16.msra.mxu0 %v2387
        %3769 = vmatprep.subr.bf16.mxu0 %v2448
        %3770 = vmatpush2.bf16.msra.mxu0 %v2447
        %3771 = vmatprep.subr.bf16.mxu0 %v2444
        %3772 = vmatpush2.bf16.msra.mxu0 %v2443
        %3773 = vmatprep.subr.bf16.mxu0 %v2440
        %3774 = vmatpush2.bf16.msra.mxu0 %v2439
        %3775 = vmatprep.subr.bf16.mxu0 %v2436
        %3776 = vmatpush2.bf16.msra.mxu0 %v2435
        %3777 = vmatprep.subr.bf16.mxu0 %v2432
        %3778 = vmatpush2.bf16.msra.mxu0 %v2431
        %3779 = vmatprep.subr.bf16.mxu0 %v2428
        %3780 = vmatpush2.bf16.msra.mxu0 %v2427
        %3781 = vmatprep.subr.bf16.mxu0 %v2424
        %3782 = vmatpush2.bf16.msra.mxu0 %v2423
        %3783 = vmatprep.subr.bf16.mxu0 %v2420
        %3784 = vmatpush2.bf16.msra.mxu0 %v2419
        %3785 = vmatprep.mubr.bf16.mxu0 %v300
        %3786 = vmatmul.mubr.bf16.gmra.mxu0 %v299
        %v3787 = vpop.f32.mrf.mxu0
        %v3788 = vadd.f32 %v840, %v3787
        %v3789 = vpop.f32.mrf.mxu0
        %v3790 = vadd.f32 %v844, %v3789
        %v3791 = vpop.f32.mrf.mxu0
        %v3792 = vadd.f32 %v840, %v3791
        %v3793 = vpop.f32.mrf.mxu0
        %v3794 = vadd.f32 %v844, %v3793
        %3795 = vdwg.mxu0
        %3796 = vmatprep.subr.bf16.mxu0 %v2480
        %3797 = vmatpush1.bf16.msra.mxu0 %v2479
        %3798 = vmatprep.subr.bf16.mxu0 %v2476
        %3799 = vmatpush1.bf16.msra.mxu0 %v2475
        %3800 = vmatprep.subr.bf16.mxu0 %v2472
        %3801 = vmatpush1.bf16.msra.mxu0 %v2471
        %3802 = vmatprep.subr.bf16.mxu0 %v2468
        %3803 = vmatpush1.bf16.msra.mxu0 %v2467
        %3804 = vmatprep.subr.bf16.mxu0 %v2464
        %3805 = vmatpush1.bf16.msra.mxu0 %v2463
        %3806 = vmatprep.subr.bf16.mxu0 %v2460
        %3807 = vmatpush1.bf16.msra.mxu0 %v2459
        %3808 = vmatprep.subr.bf16.mxu0 %v2456
        %3809 = vmatpush1.bf16.msra.mxu0 %v2455
        %3810 = vmatprep.subr.bf16.mxu0 %v2452
        %3811 = vmatpush1.bf16.msra.mxu0 %v2451
        %3812 = vmatprep.subr.bf16.mxu0 %v2512
        %3813 = vmatpush2.bf16.msra.mxu0 %v2511
        %3814 = vmatprep.subr.bf16.mxu0 %v2508
        %3815 = vmatpush2.bf16.msra.mxu0 %v2507
        %3816 = vmatprep.subr.bf16.mxu0 %v2504
        %3817 = vmatpush2.bf16.msra.mxu0 %v2503
        %3818 = vmatprep.subr.bf16.mxu0 %v2500
        %3819 = vmatpush2.bf16.msra.mxu0 %v2499
        %3820 = vmatprep.subr.bf16.mxu0 %v2496
        %3821 = vmatpush2.bf16.msra.mxu0 %v2495
        %3822 = vmatprep.subr.bf16.mxu0 %v2492
        %3823 = vmatpush2.bf16.msra.mxu0 %v2491
        %3824 = vmatprep.subr.bf16.mxu0 %v2488
        %3825 = vmatpush2.bf16.msra.mxu0 %v2487
        %3826 = vmatprep.subr.bf16.mxu0 %v2484
        %3827 = vmatpush2.bf16.msra.mxu0 %v2483
        %3828 = vmatprep.mubr.bf16.mxu0 %v302
        %3829 = vmatmul.mubr.bf16.gmra.mxu0 %v301
        %v3830 = vpop.f32.mrf.mxu0
        %v3831 = vadd.f32 %v3788, %v3830
        %v3832 = vpop.f32.mrf.mxu0
        %v3833 = vadd.f32 %v3790, %v3832
        %v3834 = vpop.f32.mrf.mxu0
        %v3835 = vadd.f32 %v3792, %v3834
        %v3836 = vpop.f32.mrf.mxu0
        %v3837 = vadd.f32 %v3794, %v3836
        %3838 = vdwg.mxu0
        %3839 = vmatprep.subr.bf16.mxu0 %v2544
        %3840 = vmatpush1.bf16.msra.mxu0 %v2543
        %3841 = vmatprep.subr.bf16.mxu0 %v2540
        %3842 = vmatpush1.bf16.msra.mxu0 %v2539
        %3843 = vmatprep.subr.bf16.mxu0 %v2536
        %3844 = vmatpush1.bf16.msra.mxu0 %v2535
        %3845 = vmatprep.subr.bf16.mxu0 %v2532
        %3846 = vmatpush1.bf16.msra.mxu0 %v2531
        %3847 = vmatprep.subr.bf16.mxu0 %v2528
        %3848 = vmatpush1.bf16.msra.mxu0 %v2527
        %3849 = vmatprep.subr.bf16.mxu0 %v2524
        %3850 = vmatpush1.bf16.msra.mxu0 %v2523
        %3851 = vmatprep.subr.bf16.mxu0 %v2520
        %3852 = vmatpush1.bf16.msra.mxu0 %v2519
        %3853 = vmatprep.subr.bf16.mxu0 %v2516
        %3854 = vmatpush1.bf16.msra.mxu0 %v2515
        %3855 = vmatprep.subr.bf16.mxu0 %v2576
        %3856 = vmatpush2.bf16.msra.mxu0 %v2575
        %3857 = vmatprep.subr.bf16.mxu0 %v2572
        %3858 = vmatpush2.bf16.msra.mxu0 %v2571
        %3859 = vmatprep.subr.bf16.mxu0 %v2568
        %3860 = vmatpush2.bf16.msra.mxu0 %v2567
        %3861 = vmatprep.subr.bf16.mxu0 %v2564
        %3862 = vmatpush2.bf16.msra.mxu0 %v2563
        %3863 = vmatprep.subr.bf16.mxu0 %v2560
        %3864 = vmatpush2.bf16.msra.mxu0 %v2559
        %3865 = vmatprep.subr.bf16.mxu0 %v2556
        %3866 = vmatpush2.bf16.msra.mxu0 %v2555
        %3867 = vmatprep.subr.bf16.mxu0 %v2552
        %3868 = vmatpush2.bf16.msra.mxu0 %v2551
        %3869 = vmatprep.subr.bf16.mxu0 %v2548
        %3870 = vmatpush2.bf16.msra.mxu0 %v2547
        %3871 = vmatprep.mubr.bf16.mxu0 %v304
        %3872 = vmatmul.mubr.bf16.gmra.mxu0 %v303
        %v3873 = vpop.f32.mrf.mxu0
        %v3874 = vadd.f32 %v3831, %v3873
        %v3875 = vpop.f32.mrf.mxu0
        %v3876 = vadd.f32 %v3833, %v3875
        %v3877 = vpop.f32.mrf.mxu0
        %v3878 = vadd.f32 %v3835, %v3877
        %v3879 = vpop.f32.mrf.mxu0
        %v3880 = vadd.f32 %v3837, %v3879
        %3881 = vdwg.mxu0
        %3882 = vmatprep.subr.bf16.mxu0 %v2608
        %3883 = vmatpush1.bf16.msra.mxu0 %v2607
        %3884 = vmatprep.subr.bf16.mxu0 %v2604
        %3885 = vmatpush1.bf16.msra.mxu0 %v2603
        %3886 = vmatprep.subr.bf16.mxu0 %v2600
        %3887 = vmatpush1.bf16.msra.mxu0 %v2599
        %3888 = vmatprep.subr.bf16.mxu0 %v2596
        %3889 = vmatpush1.bf16.msra.mxu0 %v2595
        %3890 = vmatprep.subr.bf16.mxu0 %v2592
        %3891 = vmatpush1.bf16.msra.mxu0 %v2591
        %3892 = vmatprep.subr.bf16.mxu0 %v2588
        %3893 = vmatpush1.bf16.msra.mxu0 %v2587
        %3894 = vmatprep.subr.bf16.mxu0 %v2584
        %3895 = vmatpush1.bf16.msra.mxu0 %v2583
        %3896 = vmatprep.subr.bf16.mxu0 %v2580
        %3897 = vmatpush1.bf16.msra.mxu0 %v2579
        %3898 = vmatprep.subr.bf16.mxu0 %v2640
        %3899 = vmatpush2.bf16.msra.mxu0 %v2639
        %3900 = vmatprep.subr.bf16.mxu0 %v2636
        %3901 = vmatpush2.bf16.msra.mxu0 %v2635
        %3902 = vmatprep.subr.bf16.mxu0 %v2632
        %3903 = vmatpush2.bf16.msra.mxu0 %v2631
        %3904 = vmatprep.subr.bf16.mxu0 %v2628
        %3905 = vmatpush2.bf16.msra.mxu0 %v2627
        %3906 = vmatprep.subr.bf16.mxu0 %v2624
        %3907 = vmatpush2.bf16.msra.mxu0 %v2623
        %3908 = vmatprep.subr.bf16.mxu0 %v2620
        %3909 = vmatpush2.bf16.msra.mxu0 %v2619
        %3910 = vmatprep.subr.bf16.mxu0 %v2616
        %3911 = vmatpush2.bf16.msra.mxu0 %v2615
        %3912 = vmatprep.subr.bf16.mxu0 %v2612
        %3913 = vmatpush2.bf16.msra.mxu0 %v2611
        %3914 = vmatprep.mubr.bf16.mxu0 %v306
        %3915 = vmatmul.mubr.bf16.gmra.mxu0 %v305
        %v3916 = vpop.f32.mrf.mxu0
        %v3917 = vadd.f32 %v3874, %v3916
        %v3918 = vpop.f32.mrf.mxu0
        %v3919 = vadd.f32 %v3876, %v3918
        %v3920 = vpop.f32.mrf.mxu0
        %v3921 = vadd.f32 %v3878, %v3920
        %v3922 = vpop.f32.mrf.mxu0
        %v3923 = vadd.f32 %v3880, %v3922
        %3924 = vdwg.mxu0
        %3925 = vmatprep.subr.bf16.mxu0 %v2672
        %3926 = vmatpush1.bf16.msra.mxu0 %v2671
        %3927 = vmatprep.subr.bf16.mxu0 %v2668
        %3928 = vmatpush1.bf16.msra.mxu0 %v2667
        %3929 = vmatprep.subr.bf16.mxu0 %v2664
        %3930 = vmatpush1.bf16.msra.mxu0 %v2663
        %3931 = vmatprep.subr.bf16.mxu0 %v2660
        %3932 = vmatpush1.bf16.msra.mxu0 %v2659
        %3933 = vmatprep.subr.bf16.mxu0 %v2656
        %3934 = vmatpush1.bf16.msra.mxu0 %v2655
        %3935 = vmatprep.subr.bf16.mxu0 %v2652
        %3936 = vmatpush1.bf16.msra.mxu0 %v2651
        %3937 = vmatprep.subr.bf16.mxu0 %v2648
        %3938 = vmatpush1.bf16.msra.mxu0 %v2647
        %3939 = vmatprep.subr.bf16.mxu0 %v2644
        %3940 = vmatpush1.bf16.msra.mxu0 %v2643
        %3941 = vmatprep.subr.bf16.mxu0 %v2704
        %3942 = vmatpush2.bf16.msra.mxu0 %v2703
        %3943 = vmatprep.subr.bf16.mxu0 %v2700
        %3944 = vmatpush2.bf16.msra.mxu0 %v2699
        %3945 = vmatprep.subr.bf16.mxu0 %v2696
        %3946 = vmatpush2.bf16.msra.mxu0 %v2695
        %3947 = vmatprep.subr.bf16.mxu0 %v2692
        %3948 = vmatpush2.bf16.msra.mxu0 %v2691
        %3949 = vmatprep.subr.bf16.mxu0 %v2688
        %3950 = vmatpush2.bf16.msra.mxu0 %v2687
        %3951 = vmatprep.subr.bf16.mxu0 %v2684
        %3952 = vmatpush2.bf16.msra.mxu0 %v2683
        %3953 = vmatprep.subr.bf16.mxu0 %v2680
        %3954 = vmatpush2.bf16.msra.mxu0 %v2679
        %3955 = vmatprep.subr.bf16.mxu0 %v2676
        %3956 = vmatpush2.bf16.msra.mxu0 %v2675
        %3957 = vmatprep.mubr.bf16.mxu0 %v308
        %3958 = vmatmul.mubr.bf16.gmra.mxu0 %v307
        %v3959 = vpop.f32.mrf.mxu0
        %v3960 = vadd.f32 %v3917, %v3959
        %v3961 = vpop.f32.mrf.mxu0
        %v3962 = vadd.f32 %v3919, %v3961
        %v3963 = vpop.f32.mrf.mxu0
        %v3964 = vadd.f32 %v3921, %v3963
        %v3965 = vpop.f32.mrf.mxu0
        %v3966 = vadd.f32 %v3923, %v3965
        %3967 = vdwg.mxu0
        %3968 = vmatprep.subr.bf16.mxu0 %v2736
        %3969 = vmatpush1.bf16.msra.mxu0 %v2735
        %3970 = vmatprep.subr.bf16.mxu0 %v2732
        %3971 = vmatpush1.bf16.msra.mxu0 %v2731
        %3972 = vmatprep.subr.bf16.mxu0 %v2728
        %3973 = vmatpush1.bf16.msra.mxu0 %v2727
        %3974 = vmatprep.subr.bf16.mxu0 %v2724
        %3975 = vmatpush1.bf16.msra.mxu0 %v2723
        %3976 = vmatprep.subr.bf16.mxu0 %v2720
        %3977 = vmatpush1.bf16.msra.mxu0 %v2719
        %3978 = vmatprep.subr.bf16.mxu0 %v2716
        %3979 = vmatpush1.bf16.msra.mxu0 %v2715
        %3980 = vmatprep.subr.bf16.mxu0 %v2712
        %3981 = vmatpush1.bf16.msra.mxu0 %v2711
        %3982 = vmatprep.subr.bf16.mxu0 %v2708
        %3983 = vmatpush1.bf16.msra.mxu0 %v2707
        %3984 = vmatprep.subr.bf16.mxu0 %v2768
        %3985 = vmatpush2.bf16.msra.mxu0 %v2767
        %3986 = vmatprep.subr.bf16.mxu0 %v2764
        %3987 = vmatpush2.bf16.msra.mxu0 %v2763
        %3988 = vmatprep.subr.bf16.mxu0 %v2760
        %3989 = vmatpush2.bf16.msra.mxu0 %v2759
        %3990 = vmatprep.subr.bf16.mxu0 %v2756
        %3991 = vmatpush2.bf16.msra.mxu0 %v2755
        %3992 = vmatprep.subr.bf16.mxu0 %v2752
        %3993 = vmatpush2.bf16.msra.mxu0 %v2751
        %3994 = vmatprep.subr.bf16.mxu0 %v2748
        %3995 = vmatpush2.bf16.msra.mxu0 %v2747
        %3996 = vmatprep.subr.bf16.mxu0 %v2744
        %3997 = vmatpush2.bf16.msra.mxu0 %v2743
        %3998 = vmatprep.subr.bf16.mxu0 %v2740
        %3999 = vmatpush2.bf16.msra.mxu0 %v2739
        %4000 = vmatprep.mubr.bf16.mxu0 %v310
        %4001 = vmatmul.mubr.bf16.gmra.mxu0 %v309
        %v4002 = vpop.f32.mrf.mxu0
        %v4003 = vadd.f32 %v3960, %v4002
        %v4004 = vpop.f32.mrf.mxu0
        %v4005 = vadd.f32 %v3962, %v4004
        %v4006 = vpop.f32.mrf.mxu0
        %v4007 = vadd.f32 %v3964, %v4006
        %v4008 = vpop.f32.mrf.mxu0
        %v4009 = vadd.f32 %v3966, %v4008
        %4010 = vdwg.mxu0
        %4011 = vmatprep.subr.bf16.mxu0 %v2800
        %4012 = vmatpush1.bf16.msra.mxu0 %v2799
        %4013 = vmatprep.subr.bf16.mxu0 %v2796
        %4014 = vmatpush1.bf16.msra.mxu0 %v2795
        %4015 = vmatprep.subr.bf16.mxu0 %v2792
        %4016 = vmatpush1.bf16.msra.mxu0 %v2791
        %4017 = vmatprep.subr.bf16.mxu0 %v2788
        %4018 = vmatpush1.bf16.msra.mxu0 %v2787
        %4019 = vmatprep.subr.bf16.mxu0 %v2784
        %4020 = vmatpush1.bf16.msra.mxu0 %v2783
        %4021 = vmatprep.subr.bf16.mxu0 %v2780
        %4022 = vmatpush1.bf16.msra.mxu0 %v2779
        %4023 = vmatprep.subr.bf16.mxu0 %v2776
        %4024 = vmatpush1.bf16.msra.mxu0 %v2775
        %4025 = vmatprep.subr.bf16.mxu0 %v2772
        %4026 = vmatpush1.bf16.msra.mxu0 %v2771
        %4027 = vmatprep.subr.bf16.mxu0 %v2832
        %4028 = vmatpush2.bf16.msra.mxu0 %v2831
        %4029 = vmatprep.subr.bf16.mxu0 %v2828
        %4030 = vmatpush2.bf16.msra.mxu0 %v2827
        %4031 = vmatprep.subr.bf16.mxu0 %v2824
        %4032 = vmatpush2.bf16.msra.mxu0 %v2823
        %4033 = vmatprep.subr.bf16.mxu0 %v2820
        %4034 = vmatpush2.bf16.msra.mxu0 %v2819
        %4035 = vmatprep.subr.bf16.mxu0 %v2816
        %4036 = vmatpush2.bf16.msra.mxu0 %v2815
        %4037 = vmatprep.subr.bf16.mxu0 %v2812
        %4038 = vmatpush2.bf16.msra.mxu0 %v2811
        %4039 = vmatprep.subr.bf16.mxu0 %v2808
        %4040 = vmatpush2.bf16.msra.mxu0 %v2807
        %4041 = vmatprep.subr.bf16.mxu0 %v2804
        %4042 = vmatpush2.bf16.msra.mxu0 %v2803
        %4043 = vmatprep.mubr.bf16.mxu0 %v312
        %4044 = vmatmul.mubr.bf16.gmra.mxu0 %v311
        %v4045 = vpop.f32.mrf.mxu0
        %v4046 = vadd.f32 %v4003, %v4045
        %v4047 = vpop.f32.mrf.mxu0
        %v4048 = vadd.f32 %v4005, %v4047
        %v4049 = vpop.f32.mrf.mxu0
        %v4050 = vadd.f32 %v4007, %v4049
        %v4051 = vpop.f32.mrf.mxu0
        %v4052 = vadd.f32 %v4009, %v4051
        %4053 = vdwg.mxu0
        %4054 = vmatprep.subr.bf16.mxu0 %v2864
        %4055 = vmatpush1.bf16.msra.mxu0 %v2863
        %4056 = vmatprep.subr.bf16.mxu0 %v2860
        %4057 = vmatpush1.bf16.msra.mxu0 %v2859
        %4058 = vmatprep.subr.bf16.mxu0 %v2856
        %4059 = vmatpush1.bf16.msra.mxu0 %v2855
        %4060 = vmatprep.subr.bf16.mxu0 %v2852
        %4061 = vmatpush1.bf16.msra.mxu0 %v2851
        %4062 = vmatprep.subr.bf16.mxu0 %v2848
        %4063 = vmatpush1.bf16.msra.mxu0 %v2847
        %4064 = vmatprep.subr.bf16.mxu0 %v2844
        %4065 = vmatpush1.bf16.msra.mxu0 %v2843
        %4066 = vmatprep.subr.bf16.mxu0 %v2840
        %4067 = vmatpush1.bf16.msra.mxu0 %v2839
        %4068 = vmatprep.subr.bf16.mxu0 %v2836
        %4069 = vmatpush1.bf16.msra.mxu0 %v2835
        %4070 = vmatprep.subr.bf16.mxu0 %v2896
        %4071 = vmatpush2.bf16.msra.mxu0 %v2895
        %4072 = vmatprep.subr.bf16.mxu0 %v2892
        %4073 = vmatpush2.bf16.msra.mxu0 %v2891
        %4074 = vmatprep.subr.bf16.mxu0 %v2888
        %4075 = vmatpush2.bf16.msra.mxu0 %v2887
        %4076 = vmatprep.subr.bf16.mxu0 %v2884
        %4077 = vmatpush2.bf16.msra.mxu0 %v2883
        %4078 = vmatprep.subr.bf16.mxu0 %v2880
        %4079 = vmatpush2.bf16.msra.mxu0 %v2879
        %4080 = vmatprep.subr.bf16.mxu0 %v2876
        %4081 = vmatpush2.bf16.msra.mxu0 %v2875
        %4082 = vmatprep.subr.bf16.mxu0 %v2872
        %4083 = vmatpush2.bf16.msra.mxu0 %v2871
        %4084 = vmatprep.subr.bf16.mxu0 %v2868
        %4085 = vmatpush2.bf16.msra.mxu0 %v2867
        %4086 = vmatprep.mubr.bf16.mxu0 %v314
        %4087 = vmatmul.mubr.bf16.gmra.mxu0 %v313
        %v4088 = vpop.f32.mrf.mxu0
        %v4089 = vadd.f32 %v4046, %v4088
        %v4090 = vpop.f32.mrf.mxu0
        %v4091 = vadd.f32 %v4048, %v4090
        %v4092 = vpop.f32.mrf.mxu0
        %v4093 = vadd.f32 %v4050, %v4092
        %v4094 = vpop.f32.mrf.mxu0
        %v4095 = vadd.f32 %v4052, %v4094
        %4096 = vdwg.mxu0
        %4097 = vst [vmem:[%s261] sm:$0xff] %v3745
        %4098 = vst [vmem:[%s261 + $0x8] sm:$0xff] %v3747
        %4099 = vst [vmem:[%s261 + $0x10] sm:$0xff] %v4089
        %4100 = vst [vmem:[%s261 + $0x18] sm:$0xff] %v4091
        %4101 = vst [vmem:[%s261 + $0x20] sm:$0xff] %v3749
        %4102 = vst [vmem:[%s261 + $0x28] sm:$0xff] %v3751
        %4103 = vst [vmem:[%s261 + $0x30] sm:$0xff] %v4093
        %4104 = vst [vmem:[%s261 + $0x38] sm:$0xff] %v4095
        %s4105 = sand.u32 %s121, 1
        %s4106 = scalar_lea.sflag [#allocation4], %s4105
        %s4107 = sand.u32 %s121, 1
        %s4108 = smul.addr %s4107, 64
        %s4109 = scalar_lea.vmem [#allocation8], %s4108
        // Predicated region
        $region45: #{tpu_custom_call.1} parent=31 // pred_check
          %p4110 = pneg %p131
        $region46: #{tpu_custom_call.1} parent=31 // pred_check_branch
          %4112 = sbr.rel (%p4110) target = $region48
        $region47: #{tpu_custom_call.1} parent=31 // pred_region
          %s4113 = smul.u32 2, %s25
          %s4114 = smul.u32 4, %s26
          %s4116 = ssub.s32 1024, 1024
          %4117 = vsyncadd %s4106, %s4116
          %s4118 = smul.addr %s4113, 8
          %s4119 = sadd.s32 %s4114, %s4118
          %s4120 = smul.addr %s4119, 128
          %s4121 = scalar_lea.hbm %s3, %s4120
          %s4122 = sshll.u32 %s4109, 4
          %s4123 = int_to_ptr.vmem [resolvable:$true] %s4122
          %4128 = dma.vmem_to_hbm [thread:$0]  %s4123, 1024, %s4121, %s4106, 512, 1024, 32
        $region48: #{tpu_custom_call.1} parent=31 // pred_fallthru
          _
      $region32: #{tpu_custom_call.1} parent=5 // pred_fallthru
        _
      %p4129 = scmp.le.s32.totalorder 2, %s16
      // Predicated region
      $region49: #{tpu_custom_call.1} parent=5 // pred_check
        %p4130 = pneg %p4129
      $region50: #{tpu_custom_call.1} parent=5 // pred_check_branch
        %4132 = sbr.rel (%p4130) target = $region52
      $region51: #{tpu_custom_call.1} parent=5 // pred_region
        %s4133 = ssub.s32 %s16, 2
        // Predicated region
        $region53: #{tpu_custom_call.1} parent=51 // pred_check
          %p4134 = pneg %p137
        $region54: #{tpu_custom_call.1} parent=51 // pred_check_branch
          %4136 = sbr.rel (%p4134) target = $region56
        $region55: #{tpu_custom_call.1} parent=51 // pred_region
          %s4137 = sand.u32 %s122, 1
          %s4138 = scalar_lea.sflag [#allocation4], %s4137
          %s4139 = sand.u32 %s122, 1
          %s4140 = smul.addr %s4139, 64
          %s4141 = scalar_lea.vmem [#allocation8], %s4140
          %4142 = dma.done %s4138, 1024
        $region56: #{tpu_custom_call.1} parent=51 // pred_fallthru
          _
      $region52: #{tpu_custom_call.1} parent=5 // pred_fallthru
        _
    $region6: #{tpu_custom_call.1} parent=1 // loop_footer
      %s20 = sadd.s32 1, %s16
    $region7: #{tpu_custom_call.1} parent=1 // loop_footer_branch
      %15 = sbr.rel target = $region3
    $region8: #{tpu_custom_call.1} parent=1 // loop_exit
      _
    %4143 = vsyncpa [#allocation3], 1
    %s4144 = scalar_lea.sflag [#allocation3], 1
    %4145 = vsyncpa %s4144, 1
    %4146 = vsyncpa [#allocation6], 1
    %s4147 = scalar_lea.sflag [#allocation6], 1
    %4148 = vsyncpa %s4147, 1
    %4149 = vsyncpa [#allocation4], 1
    %s4150 = scalar_lea.sflag [#allocation4], 1
    %4151 = vsyncpa %s4150, 1

</llo_original>
